<compile_context>
chip_gen: v5e
topology: v5e:2x2
jax: 0.10.0
libtpu: 0.0.40
codegen_flags: <defaults>
</compile_context>

<pallas_src>
import jax
import jax.numpy as jnp
from jax import lax
from jax.experimental import pallas as pl
from jax.experimental.pallas import tpu as pltpu

EMBED_DIM = 100
HIDDEN_DIM = 128
NUM_CLASSES = 6
NUM_LAYERS = 2        # hard-wired as two explicit LSTM layers in the kernel
VOCAB_SIZE = 10000

E_PAD = 128           # embed dim padded to a full lane tile
C_PAD = 128           # FC output padded to a full lane tile (lane-dense store)


def _lstm_kernel(x_ref,                        # (T, Bp, E_PAD)
                 wih0_ref, whh0_ref, b0_ref,   # (E_PAD,4H), (H,4H), (1,4H)
                 w1_ref, b1_ref,               # (2H,4H) = [Wih1;Whh1], (1,4H)
                 wfc_ref, bfc_ref,             # (H,C_PAD), (1,C_PAD)
                 out_ref,                      # (Bp, C_PAD)
                 ix0_ref):                     # VMEM scratch (T, Bp, 4H)
    T, B, E = x_ref.shape
    H = whh0_ref.shape[0]
    H4 = 4 * H

    whh0 = whh0_ref[...]
    w1 = w1_ref[...]
    # Hoisted bias broadcast (layer 1); layer-0 bias is folded into ix0 below.
    b1 = jnp.broadcast_to(b1_ref[...], (B, H4))

    # ---- Layer-0 input projection for ALL timesteps as one big MXU matmul ----
    x_all = x_ref[...].reshape(T * B, E)                       # (T*Bp, 128)
    ix0_ref[...] = (jnp.dot(x_all, wih0_ref[...],
                            preferred_element_type=jnp.float32)
                    + b0_ref[...]).reshape(T, B, H4)

    def gates(g):
        # PyTorch gate order: i, f, g, o
        i_g = jax.nn.sigmoid(g[:, 0 * H:1 * H])
        f_g = jax.nn.sigmoid(g[:, 1 * H:2 * H])
        g_g = jnp.tanh(g[:, 2 * H:3 * H])
        o_g = jax.nn.sigmoid(g[:, 3 * H:4 * H])
        return i_g, f_g, g_g, o_g

    def step(t, carry):
        h0, c0, h1, c1 = carry
        # Layer 0: input projection precomputed; only the recurrent matmul here.
        g0 = ix0_ref[t] + jnp.dot(h0, whh0, preferred_element_type=jnp.float32)
        i0, f0, gg0, o0 = gates(g0)
        c0 = f0 * c0 + i0 * gg0
        h0 = o0 * jnp.tanh(c0)
        # Layer 1: fused [x, h] @ [Wih; Whh] -> single K=2H matmul.
        xh = jnp.concatenate([h0, h1], axis=-1)                # (Bp, 2H)
        g1 = jnp.dot(xh, w1, preferred_element_type=jnp.float32) + b1
        i1, f1, gg1, o1 = gates(g1)
        c1 = f1 * c1 + i1 * gg1
        h1 = o1 * jnp.tanh(c1)
        return (h0, c0, h1, c1)

    zeros = jnp.zeros((B, H), jnp.float32)
    _, _, h1, _ = lax.fori_loop(0, T, step, (zeros, zeros, zeros, zeros),
                                unroll=True)

    # Lane-dense (Bp, 128) output store; wrapper slices to (B, 6).
    out_ref[...] = (jnp.dot(h1, wfc_ref[...], preferred_element_type=jnp.float32)
                    + bfc_ref[...])


def text_lstm_forward(tokens, params):
    """tokens: (B, T) int32 token ids. Returns (B, num_classes) f32 logits."""
    B, T = tokens.shape
    H = HIDDEN_DIM
    H4 = 4 * H
    B_PAD = max(8, ((B + 7) // 8) * 8)

    # --- glue: embedding gather (zero-padded to E_PAD lanes), time-major ---
    emb_p = jnp.pad(params["embedding"], ((0, 0), (0, E_PAD - EMBED_DIM)))
    x_emb = jnp.take(emb_p, tokens, axis=0)                    # (B, T, 128)
    x_emb = jnp.transpose(x_emb, (1, 0, 2))                    # (T, B, 128)
    x_emb = jnp.pad(x_emb, ((0, 0), (0, B_PAD - B), (0, 0)))   # (T, Bp, 128)

    # --- weight prep (all padding is exact zeros, so results are unchanged) ---
    wih0_p = jnp.pad(params["wih0"], ((0, E_PAD - EMBED_DIM), (0, 0)))   # (128, 512)
    w1 = jnp.concatenate([params["wih1"], params["whh1"]], axis=0)       # (256, 512)
    wfc_p = jnp.pad(params["wfc"], ((0, 0), (0, C_PAD - NUM_CLASSES)))   # (128, 128)
    bfc_p = jnp.pad(params["bfc"], ((0, 0), (0, C_PAD - NUM_CLASSES)))   # (1, 128)

    vmem = pl.BlockSpec(memory_space=pltpu.MemorySpace.VMEM)

    flops = 2 * (T * B_PAD * E_PAD * H4          # hoisted layer-0 input proj
                 + T * B_PAD * H * H4            # layer-0 recurrent matmul
                 + T * B_PAD * 2 * H * H4        # layer-1 fused matmul
                 + B_PAD * H * C_PAD)            # final FC
    bytes_accessed = 4 * (x_emb.size + wih0_p.size + params["whh0"].size
                          + w1.size + wfc_p.size + B_PAD * C_PAD + 2 * H4 + C_PAD)
    cost = pl.CostEstimate(flops=flops,
                           transcendentals=T * B_PAD * H * 10,
                           bytes_accessed=bytes_accessed)

    out = pl.pallas_call(
        _lstm_kernel,
        out_shape=jax.ShapeDtypeStruct((B_PAD, C_PAD), jnp.float32),
        in_specs=[vmem] * 8,
        out_specs=vmem,
        scratch_shapes=[pltpu.VMEM((T, B_PAD, H4), jnp.float32)],
        cost_estimate=cost,
    )(x_emb, wih0_p, params["whh0"], params["b0"],
      w1, params["b1"], wfc_p, bfc_p)

    return out[:B, :NUM_CLASSES]


def init_params(key):
    ks = jax.random.split(key, 12)
    s_h = 1.0 / jnp.sqrt(HIDDEN_DIM)
    H4 = 4 * HIDDEN_DIM
    p = {
        "embedding": jax.random.normal(ks[0], (VOCAB_SIZE, EMBED_DIM), jnp.float32),
        # layer 0: input size E
        "wih0": jax.random.uniform(ks[1], (EMBED_DIM, H4), jnp.float32, -s_h, s_h),
        "whh0": jax.random.uniform(ks[2], (HIDDEN_DIM, H4), jnp.float32, -s_h, s_h),
        "b0": jax.random.uniform(ks[3], (1, H4), jnp.float32, -s_h, s_h)
              + jax.random.uniform(ks[4], (1, H4), jnp.float32, -s_h, s_h),  # b_ih + b_hh
        # layer 1: input size H
        "wih1": jax.random.uniform(ks[5], (HIDDEN_DIM, H4), jnp.float32, -s_h, s_h),
        "whh1": jax.random.uniform(ks[6], (HIDDEN_DIM, H4), jnp.float32, -s_h, s_h),
        "b1": jax.random.uniform(ks[7], (1, H4), jnp.float32, -s_h, s_h)
              + jax.random.uniform(ks[8], (1, H4), jnp.float32, -s_h, s_h),
        # fc: (H, C) pre-transposed, plus bias
        "wfc": jax.random.uniform(ks[9], (HIDDEN_DIM, NUM_CLASSES), jnp.float32, -s_h, s_h),
        "bfc": jax.random.uniform(ks[10], (1, NUM_CLASSES), jnp.float32, -s_h, s_h),
    }
    return p


def _reference_forward(tokens, params):
    """Pure-JAX reference mirroring PyTorch nn.LSTM (batch_first) semantics."""
    x = jnp.take(params["embedding"], tokens, axis=0)   # (B, T, E)
    B, T, _ = x.shape
    H = HIDDEN_DIM

    def run_layer(seq, wih, whh, b):
        def cell(carry, x_t):
            h, c = carry
            g = x_t @ wih + h @ whh + b
            i = jax.nn.sigmoid(g[:, 0 * H:1 * H])
            f = jax.nn.sigmoid(g[:, 1 * H:2 * H])
            gg = jnp.tanh(g[:, 2 * H:3 * H])
            o = jax.nn.sigmoid(g[:, 3 * H:4 * H])
            c = f * c + i * gg
            h = o * jnp.tanh(c)
            return (h, c), h
        init = (jnp.zeros((B, H)), jnp.zeros((B, H)))
        _, hs = lax.scan(cell, init, jnp.transpose(seq, (1, 0, 2)))
        return jnp.transpose(hs, (1, 0, 2))

    h = run_layer(x, params["wih0"], params["whh0"], params["b0"])
    h = run_layer(h, params["wih1"], params["whh1"], params["b1"])
    last = h[:, -1, :]
    return last @ params["wfc"] + params["bfc"]


if __name__ == "__main__":
    key = jax.random.PRNGKey(0)
    k_params, k_tokens = jax.random.split(key)
    params = init_params(k_params)

    B, T = 2, 8
    tokens = jax.random.randint(k_tokens, (B, T), 0, VOCAB_SIZE, dtype=jnp.int32)

    logits = jax.block_until_ready(text_lstm_forward(tokens, params))
    ref = jax.block_until_ready(_reference_forward(tokens, params))

    assert logits.shape == (B, NUM_CLASSES), logits.shape
    assert jnp.allclose(logits, ref, atol=1e-4, rtol=1e-4), (logits, ref)
    print("KERNEL_OK")
</pallas_src>

<mosaic_0001>
module attributes {stable_mosaic.version = 11 : i64} {
  func.func @_lstm_kernel(%arg0: memref<8x8x128xf32, #tpu.memory_space<vmem>>, %arg1: memref<128x512xf32, #tpu.memory_space<vmem>>, %arg2: memref<128x512xf32, #tpu.memory_space<vmem>>, %arg3: memref<1x512xf32, #tpu.memory_space<vmem>>, %arg4: memref<256x512xf32, #tpu.memory_space<vmem>>, %arg5: memref<1x512xf32, #tpu.memory_space<vmem>>, %arg6: memref<128x128xf32, #tpu.memory_space<vmem>>, %arg7: memref<1x128xf32, #tpu.memory_space<vmem>>, %arg8: memref<8x128xf32, #tpu.memory_space<vmem>>, %arg9: memref<8x8x512xf32, #tpu.memory_space<vmem>>) attributes {dimension_semantics = [], scalar_prefetch = 0 : i64, scratch_operands = 1 : i64, tpu.core_type = #tpu.core_type<tc>} {
    %c0 = arith.constant 0 : index
    %c0_0 = arith.constant 0 : index
    %0 = vector.load %arg2[%c0, %c0_0] : memref<128x512xf32, #tpu.memory_space<vmem>>, vector<128x512xf32>
    %c0_1 = arith.constant 0 : index
    %c0_2 = arith.constant 0 : index
    %1 = vector.load %arg4[%c0_1, %c0_2] : memref<256x512xf32, #tpu.memory_space<vmem>>, vector<256x512xf32>
    %c0_3 = arith.constant 0 : index
    %c0_4 = arith.constant 0 : index
    %2 = vector.load %arg5[%c0_3, %c0_4] : memref<1x512xf32, #tpu.memory_space<vmem>>, vector<1x512xf32>
    %3 = vector.shape_cast %2 : vector<1x512xf32> to vector<1x512xf32>
    %4 = vector.broadcast %3 : vector<1x512xf32> to vector<8x512xf32>
    %c0_5 = arith.constant 0 : index
    %c0_6 = arith.constant 0 : index
    %c0_7 = arith.constant 0 : index
    %5 = vector.load %arg0[%c0_5, %c0_6, %c0_7] : memref<8x8x128xf32, #tpu.memory_space<vmem>>, vector<8x8x128xf32>
    %6 = vector.shape_cast %5 : vector<8x8x128xf32> to vector<64x128xf32>
    %c0_8 = arith.constant 0 : index
    %c0_9 = arith.constant 0 : index
    %7 = vector.load %arg1[%c0_8, %c0_9] : memref<128x512xf32, #tpu.memory_space<vmem>>, vector<128x512xf32>
    %cst = arith.constant dense<0.000000e+00> : vector<64x512xf32>
    %8 = tpu.matmul %6, %7, %cst {dimension_numbers = #tpu.dot_dimension_numbers<[1], [0], [0], [1], [0, 0, 1, 1], [], []>} : vector<64x128xf32>, vector<128x512xf32>, vector<64x512xf32> -> vector<64x512xf32>
    %c0_10 = arith.constant 0 : index
    %c0_11 = arith.constant 0 : index
    %9 = vector.load %arg3[%c0_10, %c0_11] : memref<1x512xf32, #tpu.memory_space<vmem>>, vector<1x512xf32>
    %10 = vector.broadcast %9 : vector<1x512xf32> to vector<64x512xf32>
    %11 = arith.addf %8, %10 : vector<64x512xf32>
    %12 = vector.shape_cast %11 : vector<64x512xf32> to vector<8x8x512xf32>
    %c0_12 = arith.constant 0 : index
    %c0_13 = arith.constant 0 : index
    %c0_14 = arith.constant 0 : index
    %13 = vector.load %arg9[%c0_12, %c0_13, %c0_14] : memref<8x8x512xf32, #tpu.memory_space<vmem>>, vector<8x8x512xf32>
    tpu.vector_store %arg9[%c0_12, %c0_13, %c0_14], %12 {strides = array<i32>} : memref<8x8x512xf32, #tpu.memory_space<vmem>>, vector<8x8x512xf32>,
    %cst_15 = arith.constant 0.000000e+00 : f32
    %14 = vector.broadcast %cst_15 : f32 to vector<8x128xf32>
    %c0_i32 = arith.constant 0 : i32
    %15 = arith.index_cast %c0_i32 : i32 to index
    %c0_16 = arith.constant 0 : index
    %c0_17 = arith.constant 0 : index
    %16 = vector.load %arg9[%15, %c0_16, %c0_17] : memref<8x8x512xf32, #tpu.memory_space<vmem>>, vector<1x8x512xf32>
    %17 = vector.shape_cast %16 : vector<1x8x512xf32> to vector<8x512xf32>
    %cst_18 = arith.constant dense<0.000000e+00> : vector<8x512xf32>
    %18 = tpu.matmul %14, %0, %cst_18 {dimension_numbers = #tpu.dot_dimension_numbers<[1], [0], [0], [1], [0, 0, 1, 1], [], []>} : vector<8x128xf32>, vector<128x512xf32>, vector<8x512xf32> -> vector<8x512xf32>
    %19 = arith.addf %17, %18 : vector<8x512xf32>
    %20 = vector.extract_strided_slice %19 {offsets = [0, 0], sizes = [8, 128], strides = [1, 1]} : vector<8x512xf32> to vector<8x128xf32>
    %21 = arith.negf %20 : vector<8x128xf32>
    %22 = math.exp %21 : vector<8x128xf32>
    %cst_19 = arith.constant 1.000000e+00 : f32
    %23 = vector.broadcast %cst_19 : f32 to vector<8x128xf32>
    %24 = arith.addf %23, %22 : vector<8x128xf32>
    %25 = arith.divf %23, %24 : vector<8x128xf32>
    %26 = vector.extract_strided_slice %19 {offsets = [0, 128], sizes = [8, 128], strides = [1, 1]} : vector<8x512xf32> to vector<8x128xf32>
    %27 = arith.negf %26 : vector<8x128xf32>
    %28 = math.exp %27 : vector<8x128xf32>
    %cst_20 = arith.constant 1.000000e+00 : f32
    %29 = vector.broadcast %cst_20 : f32 to vector<8x128xf32>
    %30 = arith.addf %29, %28 : vector<8x128xf32>
    %31 = arith.divf %29, %30 : vector<8x128xf32>
    %32 = vector.extract_strided_slice %19 {offsets = [0, 256], sizes = [8, 128], strides = [1, 1]} : vector<8x512xf32> to vector<8x128xf32>
    %33 = math.tanh %32 : vector<8x128xf32>
    %34 = vector.extract_strided_slice %19 {offsets = [0, 384], sizes = [8, 128], strides = [1, 1]} : vector<8x512xf32> to vector<8x128xf32>
    %35 = arith.negf %34 : vector<8x128xf32>
    %36 = math.exp %35 : vector<8x128xf32>
    %cst_21 = arith.constant 1.000000e+00 : f32
    %37 = vector.broadcast %cst_21 : f32 to vector<8x128xf32>
    %38 = arith.addf %37, %36 : vector<8x128xf32>
    %39 = arith.divf %37, %38 : vector<8x128xf32>
    %40 = arith.mulf %31, %14 : vector<8x128xf32>
    %41 = arith.mulf %25, %33 : vector<8x128xf32>
    %42 = arith.addf %40, %41 : vector<8x128xf32>
    %43 = math.tanh %42 : vector<8x128xf32>
    %44 = arith.mulf %39, %43 : vector<8x128xf32>
    %45 = tpu.concatenate %44, %14 in 1 : vector<8x128xf32>, vector<8x128xf32> -> vector<8x256xf32>
    %cst_22 = arith.constant dense<0.000000e+00> : vector<8x512xf32>
    %46 = tpu.matmul %45, %1, %cst_22 {dimension_numbers = #tpu.dot_dimension_numbers<[1], [0], [0], [1], [0, 0, 1, 1], [], []>} : vector<8x256xf32>, vector<256x512xf32>, vector<8x512xf32> -> vector<8x512xf32>
    %47 = arith.addf %46, %4 : vector<8x512xf32>
    %48 = vector.extract_strided_slice %47 {offsets = [0, 0], sizes = [8, 128], strides = [1, 1]} : vector<8x512xf32> to vector<8x128xf32>
    %49 = arith.negf %48 : vector<8x128xf32>
    %50 = math.exp %49 : vector<8x128xf32>
    %cst_23 = arith.constant 1.000000e+00 : f32
    %51 = vector.broadcast %cst_23 : f32 to vector<8x128xf32>
    %52 = arith.addf %51, %50 : vector<8x128xf32>
    %53 = arith.divf %51, %52 : vector<8x128xf32>
    %54 = vector.extract_strided_slice %47 {offsets = [0, 128], sizes = [8, 128], strides = [1, 1]} : vector<8x512xf32> to vector<8x128xf32>
    %55 = arith.negf %54 : vector<8x128xf32>
    %56 = math.exp %55 : vector<8x128xf32>
    %cst_24 = arith.constant 1.000000e+00 : f32
    %57 = vector.broadcast %cst_24 : f32 to vector<8x128xf32>
    %58 = arith.addf %57, %56 : vector<8x128xf32>
    %59 = arith.divf %57, %58 : vector<8x128xf32>
    %60 = vector.extract_strided_slice %47 {offsets = [0, 256], sizes = [8, 128], strides = [1, 1]} : vector<8x512xf32> to vector<8x128xf32>
    %61 = math.tanh %60 : vector<8x128xf32>
    %62 = vector.extract_strided_slice %47 {offsets = [0, 384], sizes = [8, 128], strides = [1, 1]} : vector<8x512xf32> to vector<8x128xf32>
    %63 = arith.negf %62 : vector<8x128xf32>
    %64 = math.exp %63 : vector<8x128xf32>
    %cst_25 = arith.constant 1.000000e+00 : f32
    %65 = vector.broadcast %cst_25 : f32 to vector<8x128xf32>
    %66 = arith.addf %65, %64 : vector<8x128xf32>
    %67 = arith.divf %65, %66 : vector<8x128xf32>
    %68 = arith.mulf %59, %14 : vector<8x128xf32>
    %69 = arith.mulf %53, %61 : vector<8x128xf32>
    %70 = arith.addf %68, %69 : vector<8x128xf32>
    %71 = math.tanh %70 : vector<8x128xf32>
    %72 = arith.mulf %67, %71 : vector<8x128xf32>
    %c1_i32 = arith.constant 1 : i32
    %73 = arith.index_cast %c1_i32 : i32 to index
    %c0_26 = arith.constant 0 : index
    %c0_27 = arith.constant 0 : index
    %74 = vector.load %arg9[%73, %c0_26, %c0_27] : memref<8x8x512xf32, #tpu.memory_space<vmem>>, vector<1x8x512xf32>
    %75 = vector.shape_cast %74 : vector<1x8x512xf32> to vector<8x512xf32>
    %cst_28 = arith.constant dense<0.000000e+00> : vector<8x512xf32>
    %76 = tpu.matmul %44, %0, %cst_28 {dimension_numbers = #tpu.dot_dimension_numbers<[1], [0], [0], [1], [0, 0, 1, 1], [], []>} : vector<8x128xf32>, vector<128x512xf32>, vector<8x512xf32> -> vector<8x512xf32>
    %77 = arith.addf %75, %76 : vector<8x512xf32>
    %78 = vector.extract_strided_slice %77 {offsets = [0, 0], sizes = [8, 128], strides = [1, 1]} : vector<8x512xf32> to vector<8x128xf32>
    %79 = arith.negf %78 : vector<8x128xf32>
    %80 = math.exp %79 : vector<8x128xf32>
    %cst_29 = arith.constant 1.000000e+00 : f32
    %81 = vector.broadcast %cst_29 : f32 to vector<8x128xf32>
    %82 = arith.addf %81, %80 : vector<8x128xf32>
    %83 = arith.divf %81, %82 : vector<8x128xf32>
    %84 = vector.extract_strided_slice %77 {offsets = [0, 128], sizes = [8, 128], strides = [1, 1]} : vector<8x512xf32> to vector<8x128xf32>
    %85 = arith.negf %84 : vector<8x128xf32>
    %86 = math.exp %85 : vector<8x128xf32>
    %cst_30 = arith.constant 1.000000e+00 : f32
    %87 = vector.broadcast %cst_30 : f32 to vector<8x128xf32>
    %88 = arith.addf %87, %86 : vector<8x128xf32>
    %89 = arith.divf %87, %88 : vector<8x128xf32>
    %90 = vector.extract_strided_slice %77 {offsets = [0, 256], sizes = [8, 128], strides = [1, 1]} : vector<8x512xf32> to vector<8x128xf32>
    %91 = math.tanh %90 : vector<8x128xf32>
    %92 = vector.extract_strided_slice %77 {offsets = [0, 384], sizes = [8, 128], strides = [1, 1]} : vector<8x512xf32> to vector<8x128xf32>
    %93 = arith.negf %92 : vector<8x128xf32>
    %94 = math.exp %93 : vector<8x128xf32>
    %cst_31 = arith.constant 1.000000e+00 : f32
    %95 = vector.broadcast %cst_31 : f32 to vector<8x128xf32>
    %96 = arith.addf %95, %94 : vector<8x128xf32>
    %97 = arith.divf %95, %96 : vector<8x128xf32>
    %98 = arith.mulf %89, %42 : vector<8x128xf32>
    %99 = arith.mulf %83, %91 : vector<8x128xf32>
    %100 = arith.addf %98, %99 : vector<8x128xf32>
    %101 = math.tanh %100 : vector<8x128xf32>
    %102 = arith.mulf %97, %101 : vector<8x128xf32>
    %103 = tpu.concatenate %102, %72 in 1 : vector<8x128xf32>, vector<8x128xf32> -> vector<8x256xf32>
    %cst_32 = arith.constant dense<0.000000e+00> : vector<8x512xf32>
    %104 = tpu.matmul %103, %1, %cst_32 {dimension_numbers = #tpu.dot_dimension_numbers<[1], [0], [0], [1], [0, 0, 1, 1], [], []>} : vector<8x256xf32>, vector<256x512xf32>, vector<8x512xf32> -> vector<8x512xf32>
    %105 = arith.addf %104, %4 : vector<8x512xf32>
    %106 = vector.extract_strided_slice %105 {offsets = [0, 0], sizes = [8, 128], strides = [1, 1]} : vector<8x512xf32> to vector<8x128xf32>
    %107 = arith.negf %106 : vector<8x128xf32>
    %108 = math.exp %107 : vector<8x128xf32>
    %cst_33 = arith.constant 1.000000e+00 : f32
    %109 = vector.broadcast %cst_33 : f32 to vector<8x128xf32>
    %110 = arith.addf %109, %108 : vector<8x128xf32>
    %111 = arith.divf %109, %110 : vector<8x128xf32>
    %112 = vector.extract_strided_slice %105 {offsets = [0, 128], sizes = [8, 128], strides = [1, 1]} : vector<8x512xf32> to vector<8x128xf32>
    %113 = arith.negf %112 : vector<8x128xf32>
    %114 = math.exp %113 : vector<8x128xf32>
    %cst_34 = arith.constant 1.000000e+00 : f32
    %115 = vector.broadcast %cst_34 : f32 to vector<8x128xf32>
    %116 = arith.addf %115, %114 : vector<8x128xf32>
    %117 = arith.divf %115, %116 : vector<8x128xf32>
    %118 = vector.extract_strided_slice %105 {offsets = [0, 256], sizes = [8, 128], strides = [1, 1]} : vector<8x512xf32> to vector<8x128xf32>
    %119 = math.tanh %118 : vector<8x128xf32>
    %120 = vector.extract_strided_slice %105 {offsets = [0, 384], sizes = [8, 128], strides = [1, 1]} : vector<8x512xf32> to vector<8x128xf32>
    %121 = arith.negf %120 : vector<8x128xf32>
    %122 = math.exp %121 : vector<8x128xf32>
    %cst_35 = arith.constant 1.000000e+00 : f32
    %123 = vector.broadcast %cst_35 : f32 to vector<8x128xf32>
    %124 = arith.addf %123, %122 : vector<8x128xf32>
    %125 = arith.divf %123, %124 : vector<8x128xf32>
    %126 = arith.mulf %117, %70 : vector<8x128xf32>
    %127 = arith.mulf %111, %119 : vector<8x128xf32>
    %128 = arith.addf %126, %127 : vector<8x128xf32>
    %129 = math.tanh %128 : vector<8x128xf32>
    %130 = arith.mulf %125, %129 : vector<8x128xf32>
    %c2_i32 = arith.constant 2 : i32
    %131 = arith.index_cast %c2_i32 : i32 to index
    %c0_36 = arith.constant 0 : index
    %c0_37 = arith.constant 0 : index
    %132 = vector.load %arg9[%131, %c0_36, %c0_37] : memref<8x8x512xf32, #tpu.memory_space<vmem>>, vector<1x8x512xf32>
    %133 = vector.shape_cast %132 : vector<1x8x512xf32> to vector<8x512xf32>
    %cst_38 = arith.constant dense<0.000000e+00> : vector<8x512xf32>
    %134 = tpu.matmul %102, %0, %cst_38 {dimension_numbers = #tpu.dot_dimension_numbers<[1], [0], [0], [1], [0, 0, 1, 1], [], []>} : vector<8x128xf32>, vector<128x512xf32>, vector<8x512xf32> -> vector<8x512xf32>
    %135 = arith.addf %133, %134 : vector<8x512xf32>
    %136 = vector.extract_strided_slice %135 {offsets = [0, 0], sizes = [8, 128], strides = [1, 1]} : vector<8x512xf32> to vector<8x128xf32>
    %137 = arith.negf %136 : vector<8x128xf32>
    %138 = math.exp %137 : vector<8x128xf32>
    %cst_39 = arith.constant 1.000000e+00 : f32
    %139 = vector.broadcast %cst_39 : f32 to vector<8x128xf32>
    %140 = arith.addf %139, %138 : vector<8x128xf32>
    %141 = arith.divf %139, %140 : vector<8x128xf32>
    %142 = vector.extract_strided_slice %135 {offsets = [0, 128], sizes = [8, 128], strides = [1, 1]} : vector<8x512xf32> to vector<8x128xf32>
    %143 = arith.negf %142 : vector<8x128xf32>
    %144 = math.exp %143 : vector<8x128xf32>
    %cst_40 = arith.constant 1.000000e+00 : f32
    %145 = vector.broadcast %cst_40 : f32 to vector<8x128xf32>
    %146 = arith.addf %145, %144 : vector<8x128xf32>
    %147 = arith.divf %145, %146 : vector<8x128xf32>
    %148 = vector.extract_strided_slice %135 {offsets = [0, 256], sizes = [8, 128], strides = [1, 1]} : vector<8x512xf32> to vector<8x128xf32>
    %149 = math.tanh %148 : vector<8x128xf32>
    %150 = vector.extract_strided_slice %135 {offsets = [0, 384], sizes = [8, 128], strides = [1, 1]} : vector<8x512xf32> to vector<8x128xf32>
    %151 = arith.negf %150 : vector<8x128xf32>
    %152 = math.exp %151 : vector<8x128xf32>
    %cst_41 = arith.constant 1.000000e+00 : f32
    %153 = vector.broadcast %cst_41 : f32 to vector<8x128xf32>
    %154 = arith.addf %153, %152 : vector<8x128xf32>
    %155 = arith.divf %153, %154 : vector<8x128xf32>
    %156 = arith.mulf %147, %100 : vector<8x128xf32>
    %157 = arith.mulf %141, %149 : vector<8x128xf32>
    %158 = arith.addf %156, %157 : vector<8x128xf32>
    %159 = math.tanh %158 : vector<8x128xf32>
    %160 = arith.mulf %155, %159 : vector<8x128xf32>
    %161 = tpu.concatenate %160, %130 in 1 : vector<8x128xf32>, vector<8x128xf32> -> vector<8x256xf32>
    %cst_42 = arith.constant dense<0.000000e+00> : vector<8x512xf32>
    %162 = tpu.matmul %161, %1, %cst_42 {dimension_numbers = #tpu.dot_dimension_numbers<[1], [0], [0], [1], [0, 0, 1, 1], [], []>} : vector<8x256xf32>, vector<256x512xf32>, vector<8x512xf32> -> vector<8x512xf32>
    %163 = arith.addf %162, %4 : vector<8x512xf32>
    %164 = vector.extract_strided_slice %163 {offsets = [0, 0], sizes = [8, 128], strides = [1, 1]} : vector<8x512xf32> to vector<8x128xf32>
    %165 = arith.negf %164 : vector<8x128xf32>
    %166 = math.exp %165 : vector<8x128xf32>
    %cst_43 = arith.constant 1.000000e+00 : f32
    %167 = vector.broadcast %cst_43 : f32 to vector<8x128xf32>
    %168 = arith.addf %167, %166 : vector<8x128xf32>
    %169 = arith.divf %167, %168 : vector<8x128xf32>
    %170 = vector.extract_strided_slice %163 {offsets = [0, 128], sizes = [8, 128], strides = [1, 1]} : vector<8x512xf32> to vector<8x128xf32>
    %171 = arith.negf %170 : vector<8x128xf32>
    %172 = math.exp %171 : vector<8x128xf32>
    %cst_44 = arith.constant 1.000000e+00 : f32
    %173 = vector.broadcast %cst_44 : f32 to vector<8x128xf32>
    %174 = arith.addf %173, %172 : vector<8x128xf32>
    %175 = arith.divf %173, %174 : vector<8x128xf32>
    %176 = vector.extract_strided_slice %163 {offsets = [0, 256], sizes = [8, 128], strides = [1, 1]} : vector<8x512xf32> to vector<8x128xf32>
    %177 = math.tanh %176 : vector<8x128xf32>
    %178 = vector.extract_strided_slice %163 {offsets = [0, 384], sizes = [8, 128], strides = [1, 1]} : vector<8x512xf32> to vector<8x128xf32>
    %179 = arith.negf %178 : vector<8x128xf32>
    %180 = math.exp %179 : vector<8x128xf32>
    %cst_45 = arith.constant 1.000000e+00 : f32
    %181 = vector.broadcast %cst_45 : f32 to vector<8x128xf32>
    %182 = arith.addf %181, %180 : vector<8x128xf32>
    %183 = arith.divf %181, %182 : vector<8x128xf32>
    %184 = arith.mulf %175, %128 : vector<8x128xf32>
    %185 = arith.mulf %169, %177 : vector<8x128xf32>
    %186 = arith.addf %184, %185 : vector<8x128xf32>
    %187 = math.tanh %186 : vector<8x128xf32>
    %188 = arith.mulf %183, %187 : vector<8x128xf32>
    %c3_i32 = arith.constant 3 : i32
    %189 = arith.index_cast %c3_i32 : i32 to index
    %c0_46 = arith.constant 0 : index
    %c0_47 = arith.constant 0 : index
    %190 = vector.load %arg9[%189, %c0_46, %c0_47] : memref<8x8x512xf32, #tpu.memory_space<vmem>>, vector<1x8x512xf32>
    %191 = vector.shape_cast %190 : vector<1x8x512xf32> to vector<8x512xf32>
    %cst_48 = arith.constant dense<0.000000e+00> : vector<8x512xf32>
    %192 = tpu.matmul %160, %0, %cst_48 {dimension_numbers = #tpu.dot_dimension_numbers<[1], [0], [0], [1], [0, 0, 1, 1], [], []>} : vector<8x128xf32>, vector<128x512xf32>, vector<8x512xf32> -> vector<8x512xf32>
    %193 = arith.addf %191, %192 : vector<8x512xf32>
    %194 = vector.extract_strided_slice %193 {offsets = [0, 0], sizes = [8, 128], strides = [1, 1]} : vector<8x512xf32> to vector<8x128xf32>
    %195 = arith.negf %194 : vector<8x128xf32>
    %196 = math.exp %195 : vector<8x128xf32>
    %cst_49 = arith.constant 1.000000e+00 : f32
    %197 = vector.broadcast %cst_49 : f32 to vector<8x128xf32>
    %198 = arith.addf %197, %196 : vector<8x128xf32>
    %199 = arith.divf %197, %198 : vector<8x128xf32>
    %200 = vector.extract_strided_slice %193 {offsets = [0, 128], sizes = [8, 128], strides = [1, 1]} : vector<8x512xf32> to vector<8x128xf32>
    %201 = arith.negf %200 : vector<8x128xf32>
    %202 = math.exp %201 : vector<8x128xf32>
    %cst_50 = arith.constant 1.000000e+00 : f32
    %203 = vector.broadcast %cst_50 : f32 to vector<8x128xf32>
    %204 = arith.addf %203, %202 : vector<8x128xf32>
    %205 = arith.divf %203, %204 : vector<8x128xf32>
    %206 = vector.extract_strided_slice %193 {offsets = [0, 256], sizes = [8, 128], strides = [1, 1]} : vector<8x512xf32> to vector<8x128xf32>
    %207 = math.tanh %206 : vector<8x128xf32>
    %208 = vector.extract_strided_slice %193 {offsets = [0, 384], sizes = [8, 128], strides = [1, 1]} : vector<8x512xf32> to vector<8x128xf32>
    %209 = arith.negf %208 : vector<8x128xf32>
    %210 = math.exp %209 : vector<8x128xf32>
    %cst_51 = arith.constant 1.000000e+00 : f32
    %211 = vector.broadcast %cst_51 : f32 to vector<8x128xf32>
    %212 = arith.addf %211, %210 : vector<8x128xf32>
    %213 = arith.divf %211, %212 : vector<8x128xf32>
    %214 = arith.mulf %205, %158 : vector<8x128xf32>
    %215 = arith.mulf %199, %207 : vector<8x128xf32>
    %216 = arith.addf %214, %215 : vector<8x128xf32>
    %217 = math.tanh %216 : vector<8x128xf32>
    %218 = arith.mulf %213, %217 : vector<8x128xf32>
    %219 = tpu.concatenate %218, %188 in 1 : vector<8x128xf32>, vector<8x128xf32> -> vector<8x256xf32>
    %cst_52 = arith.constant dense<0.000000e+00> : vector<8x512xf32>
    %220 = tpu.matmul %219, %1, %cst_52 {dimension_numbers = #tpu.dot_dimension_numbers<[1], [0], [0], [1], [0, 0, 1, 1], [], []>} : vector<8x256xf32>, vector<256x512xf32>, vector<8x512xf32> -> vector<8x512xf32>
    %221 = arith.addf %220, %4 : vector<8x512xf32>
    %222 = vector.extract_strided_slice %221 {offsets = [0, 0], sizes = [8, 128], strides = [1, 1]} : vector<8x512xf32> to vector<8x128xf32>
    %223 = arith.negf %222 : vector<8x128xf32>
    %224 = math.exp %223 : vector<8x128xf32>
    %cst_53 = arith.constant 1.000000e+00 : f32
    %225 = vector.broadcast %cst_53 : f32 to vector<8x128xf32>
    %226 = arith.addf %225, %224 : vector<8x128xf32>
    %227 = arith.divf %225, %226 : vector<8x128xf32>
    %228 = vector.extract_strided_slice %221 {offsets = [0, 128], sizes = [8, 128], strides = [1, 1]} : vector<8x512xf32> to vector<8x128xf32>
    %229 = arith.negf %228 : vector<8x128xf32>
    %230 = math.exp %229 : vector<8x128xf32>
    %cst_54 = arith.constant 1.000000e+00 : f32
    %231 = vector.broadcast %cst_54 : f32 to vector<8x128xf32>
    %232 = arith.addf %231, %230 : vector<8x128xf32>
    %233 = arith.divf %231, %232 : vector<8x128xf32>
    %234 = vector.extract_strided_slice %221 {offsets = [0, 256], sizes = [8, 128], strides = [1, 1]} : vector<8x512xf32> to vector<8x128xf32>
    %235 = math.tanh %234 : vector<8x128xf32>
    %236 = vector.extract_strided_slice %221 {offsets = [0, 384], sizes = [8, 128], strides = [1, 1]} : vector<8x512xf32> to vector<8x128xf32>
    %237 = arith.negf %236 : vector<8x128xf32>
    %238 = math.exp %237 : vector<8x128xf32>
    %cst_55 = arith.constant 1.000000e+00 : f32
    %239 = vector.broadcast %cst_55 : f32 to vector<8x128xf32>
    %240 = arith.addf %239, %238 : vector<8x128xf32>
    %241 = arith.divf %239, %240 : vector<8x128xf32>
    %242 = arith.mulf %233, %186 : vector<8x128xf32>
    %243 = arith.mulf %227, %235 : vector<8x128xf32>
    %244 = arith.addf %242, %243 : vector<8x128xf32>
    %245 = math.tanh %244 : vector<8x128xf32>
    %246 = arith.mulf %241, %245 : vector<8x128xf32>
    %c4_i32 = arith.constant 4 : i32
    %247 = arith.index_cast %c4_i32 : i32 to index
    %c0_56 = arith.constant 0 : index
    %c0_57 = arith.constant 0 : index
    %248 = vector.load %arg9[%247, %c0_56, %c0_57] : memref<8x8x512xf32, #tpu.memory_space<vmem>>, vector<1x8x512xf32>
    %249 = vector.shape_cast %248 : vector<1x8x512xf32> to vector<8x512xf32>
    %cst_58 = arith.constant dense<0.000000e+00> : vector<8x512xf32>
    %250 = tpu.matmul %218, %0, %cst_58 {dimension_numbers = #tpu.dot_dimension_numbers<[1], [0], [0], [1], [0, 0, 1, 1], [], []>} : vector<8x128xf32>, vector<128x512xf32>, vector<8x512xf32> -> vector<8x512xf32>
    %251 = arith.addf %249, %250 : vector<8x512xf32>
    %252 = vector.extract_strided_slice %251 {offsets = [0, 0], sizes = [8, 128], strides = [1, 1]} : vector<8x512xf32> to vector<8x128xf32>
    %253 = arith.negf %252 : vector<8x128xf32>
    %254 = math.exp %253 : vector<8x128xf32>
    %cst_59 = arith.constant 1.000000e+00 : f32
    %255 = vector.broadcast %cst_59 : f32 to vector<8x128xf32>
    %256 = arith.addf %255, %254 : vector<8x128xf32>
    %257 = arith.divf %255, %256 : vector<8x128xf32>
    %258 = vector.extract_strided_slice %251 {offsets = [0, 128], sizes = [8, 128], strides = [1, 1]} : vector<8x512xf32> to vector<8x128xf32>
    %259 = arith.negf %258 : vector<8x128xf32>
    %260 = math.exp %259 : vector<8x128xf32>
    %cst_60 = arith.constant 1.000000e+00 : f32
    %261 = vector.broadcast %cst_60 : f32 to vector<8x128xf32>
    %262 = arith.addf %261, %260 : vector<8x128xf32>
    %263 = arith.divf %261, %262 : vector<8x128xf32>
    %264 = vector.extract_strided_slice %251 {offsets = [0, 256], sizes = [8, 128], strides = [1, 1]} : vector<8x512xf32> to vector<8x128xf32>
    %265 = math.tanh %264 : vector<8x128xf32>
    %266 = vector.extract_strided_slice %251 {offsets = [0, 384], sizes = [8, 128], strides = [1, 1]} : vector<8x512xf32> to vector<8x128xf32>
    %267 = arith.negf %266 : vector<8x128xf32>
    %268 = math.exp %267 : vector<8x128xf32>
    %cst_61 = arith.constant 1.000000e+00 : f32
    %269 = vector.broadcast %cst_61 : f32 to vector<8x128xf32>
    %270 = arith.addf %269, %268 : vector<8x128xf32>
    %271 = arith.divf %269, %270 : vector<8x128xf32>
    %272 = arith.mulf %263, %216 : vector<8x128xf32>
    %273 = arith.mulf %257, %265 : vector<8x128xf32>
    %274 = arith.addf %272, %273 : vector<8x128xf32>
    %275 = math.tanh %274 : vector<8x128xf32>
    %276 = arith.mulf %271, %275 : vector<8x128xf32>
    %277 = tpu.concatenate %276, %246 in 1 : vector<8x128xf32>, vector<8x128xf32> -> vector<8x256xf32>
    %cst_62 = arith.constant dense<0.000000e+00> : vector<8x512xf32>
    %278 = tpu.matmul %277, %1, %cst_62 {dimension_numbers = #tpu.dot_dimension_numbers<[1], [0], [0], [1], [0, 0, 1, 1], [], []>} : vector<8x256xf32>, vector<256x512xf32>, vector<8x512xf32> -> vector<8x512xf32>
    %279 = arith.addf %278, %4 : vector<8x512xf32>
    %280 = vector.extract_strided_slice %279 {offsets = [0, 0], sizes = [8, 128], strides = [1, 1]} : vector<8x512xf32> to vector<8x128xf32>
    %281 = arith.negf %280 : vector<8x128xf32>
    %282 = math.exp %281 : vector<8x128xf32>
    %cst_63 = arith.constant 1.000000e+00 : f32
    %283 = vector.broadcast %cst_63 : f32 to vector<8x128xf32>
    %284 = arith.addf %283, %282 : vector<8x128xf32>
    %285 = arith.divf %283, %284 : vector<8x128xf32>
    %286 = vector.extract_strided_slice %279 {offsets = [0, 128], sizes = [8, 128], strides = [1, 1]} : vector<8x512xf32> to vector<8x128xf32>
    %287 = arith.negf %286 : vector<8x128xf32>
    %288 = math.exp %287 : vector<8x128xf32>
    %cst_64 = arith.constant 1.000000e+00 : f32
    %289 = vector.broadcast %cst_64 : f32 to vector<8x128xf32>
    %290 = arith.addf %289, %288 : vector<8x128xf32>
    %291 = arith.divf %289, %290 : vector<8x128xf32>
    %292 = vector.extract_strided_slice %279 {offsets = [0, 256], sizes = [8, 128], strides = [1, 1]} : vector<8x512xf32> to vector<8x128xf32>
    %293 = math.tanh %292 : vector<8x128xf32>
    %294 = vector.extract_strided_slice %279 {offsets = [0, 384], sizes = [8, 128], strides = [1, 1]} : vector<8x512xf32> to vector<8x128xf32>
    %295 = arith.negf %294 : vector<8x128xf32>
    %296 = math.exp %295 : vector<8x128xf32>
    %cst_65 = arith.constant 1.000000e+00 : f32
    %297 = vector.broadcast %cst_65 : f32 to vector<8x128xf32>
    %298 = arith.addf %297, %296 : vector<8x128xf32>
    %299 = arith.divf %297, %298 : vector<8x128xf32>
    %300 = arith.mulf %291, %244 : vector<8x128xf32>
    %301 = arith.mulf %285, %293 : vector<8x128xf32>
    %302 = arith.addf %300, %301 : vector<8x128xf32>
    %303 = math.tanh %302 : vector<8x128xf32>
    %304 = arith.mulf %299, %303 : vector<8x128xf32>
    %c5_i32 = arith.constant 5 : i32
    %305 = arith.index_cast %c5_i32 : i32 to index
    %c0_66 = arith.constant 0 : index
    %c0_67 = arith.constant 0 : index
    %306 = vector.load %arg9[%305, %c0_66, %c0_67] : memref<8x8x512xf32, #tpu.memory_space<vmem>>, vector<1x8x512xf32>
    %307 = vector.shape_cast %306 : vector<1x8x512xf32> to vector<8x512xf32>
    %cst_68 = arith.constant dense<0.000000e+00> : vector<8x512xf32>
    %308 = tpu.matmul %276, %0, %cst_68 {dimension_numbers = #tpu.dot_dimension_numbers<[1], [0], [0], [1], [0, 0, 1, 1], [], []>} : vector<8x128xf32>, vector<128x512xf32>, vector<8x512xf32> -> vector<8x512xf32>
    %309 = arith.addf %307, %308 : vector<8x512xf32>
    %310 = vector.extract_strided_slice %309 {offsets = [0, 0], sizes = [8, 128], strides = [1, 1]} : vector<8x512xf32> to vector<8x128xf32>
    %311 = arith.negf %310 : vector<8x128xf32>
    %312 = math.exp %311 : vector<8x128xf32>
    %cst_69 = arith.constant 1.000000e+00 : f32
    %313 = vector.broadcast %cst_69 : f32 to vector<8x128xf32>
    %314 = arith.addf %313, %312 : vector<8x128xf32>
    %315 = arith.divf %313, %314 : vector<8x128xf32>
    %316 = vector.extract_strided_slice %309 {offsets = [0, 128], sizes = [8, 128], strides = [1, 1]} : vector<8x512xf32> to vector<8x128xf32>
    %317 = arith.negf %316 : vector<8x128xf32>
    %318 = math.exp %317 : vector<8x128xf32>
    %cst_70 = arith.constant 1.000000e+00 : f32
    %319 = vector.broadcast %cst_70 : f32 to vector<8x128xf32>
    %320 = arith.addf %319, %318 : vector<8x128xf32>
    %321 = arith.divf %319, %320 : vector<8x128xf32>
    %322 = vector.extract_strided_slice %309 {offsets = [0, 256], sizes = [8, 128], strides = [1, 1]} : vector<8x512xf32> to vector<8x128xf32>
    %323 = math.tanh %322 : vector<8x128xf32>
    %324 = vector.extract_strided_slice %309 {offsets = [0, 384], sizes = [8, 128], strides = [1, 1]} : vector<8x512xf32> to vector<8x128xf32>
    %325 = arith.negf %324 : vector<8x128xf32>
    %326 = math.exp %325 : vector<8x128xf32>
    %cst_71 = arith.constant 1.000000e+00 : f32
    %327 = vector.broadcast %cst_71 : f32 to vector<8x128xf32>
    %328 = arith.addf %327, %326 : vector<8x128xf32>
    %329 = arith.divf %327, %328 : vector<8x128xf32>
    %330 = arith.mulf %321, %274 : vector<8x128xf32>
    %331 = arith.mulf %315, %323 : vector<8x128xf32>
    %332 = arith.addf %330, %331 : vector<8x128xf32>
    %333 = math.tanh %332 : vector<8x128xf32>
    %334 = arith.mulf %329, %333 : vector<8x128xf32>
    %335 = tpu.concatenate %334, %304 in 1 : vector<8x128xf32>, vector<8x128xf32> -> vector<8x256xf32>
    %cst_72 = arith.constant dense<0.000000e+00> : vector<8x512xf32>
    %336 = tpu.matmul %335, %1, %cst_72 {dimension_numbers = #tpu.dot_dimension_numbers<[1], [0], [0], [1], [0, 0, 1, 1], [], []>} : vector<8x256xf32>, vector<256x512xf32>, vector<8x512xf32> -> vector<8x512xf32>
    %337 = arith.addf %336, %4 : vector<8x512xf32>
    %338 = vector.extract_strided_slice %337 {offsets = [0, 0], sizes = [8, 128], strides = [1, 1]} : vector<8x512xf32> to vector<8x128xf32>
    %339 = arith.negf %338 : vector<8x128xf32>
    %340 = math.exp %339 : vector<8x128xf32>
    %cst_73 = arith.constant 1.000000e+00 : f32
    %341 = vector.broadcast %cst_73 : f32 to vector<8x128xf32>
    %342 = arith.addf %341, %340 : vector<8x128xf32>
    %343 = arith.divf %341, %342 : vector<8x128xf32>
    %344 = vector.extract_strided_slice %337 {offsets = [0, 128], sizes = [8, 128], strides = [1, 1]} : vector<8x512xf32> to vector<8x128xf32>
    %345 = arith.negf %344 : vector<8x128xf32>
    %346 = math.exp %345 : vector<8x128xf32>
    %cst_74 = arith.constant 1.000000e+00 : f32
    %347 = vector.broadcast %cst_74 : f32 to vector<8x128xf32>
    %348 = arith.addf %347, %346 : vector<8x128xf32>
    %349 = arith.divf %347, %348 : vector<8x128xf32>
    %350 = vector.extract_strided_slice %337 {offsets = [0, 256], sizes = [8, 128], strides = [1, 1]} : vector<8x512xf32> to vector<8x128xf32>
    %351 = math.tanh %350 : vector<8x128xf32>
    %352 = vector.extract_strided_slice %337 {offsets = [0, 384], sizes = [8, 128], strides = [1, 1]} : vector<8x512xf32> to vector<8x128xf32>
    %353 = arith.negf %352 : vector<8x128xf32>
    %354 = math.exp %353 : vector<8x128xf32>
    %cst_75 = arith.constant 1.000000e+00 : f32
    %355 = vector.broadcast %cst_75 : f32 to vector<8x128xf32>
    %356 = arith.addf %355, %354 : vector<8x128xf32>
    %357 = arith.divf %355, %356 : vector<8x128xf32>
    %358 = arith.mulf %349, %302 : vector<8x128xf32>
    %359 = arith.mulf %343, %351 : vector<8x128xf32>
    %360 = arith.addf %358, %359 : vector<8x128xf32>
    %361 = math.tanh %360 : vector<8x128xf32>
    %362 = arith.mulf %357, %361 : vector<8x128xf32>
    %c6_i32 = arith.constant 6 : i32
    %363 = arith.index_cast %c6_i32 : i32 to index
    %c0_76 = arith.constant 0 : index
    %c0_77 = arith.constant 0 : index
    %364 = vector.load %arg9[%363, %c0_76, %c0_77] : memref<8x8x512xf32, #tpu.memory_space<vmem>>, vector<1x8x512xf32>
    %365 = vector.shape_cast %364 : vector<1x8x512xf32> to vector<8x512xf32>
    %cst_78 = arith.constant dense<0.000000e+00> : vector<8x512xf32>
    %366 = tpu.matmul %334, %0, %cst_78 {dimension_numbers = #tpu.dot_dimension_numbers<[1], [0], [0], [1], [0, 0, 1, 1], [], []>} : vector<8x128xf32>, vector<128x512xf32>, vector<8x512xf32> -> vector<8x512xf32>
    %367 = arith.addf %365, %366 : vector<8x512xf32>
    %368 = vector.extract_strided_slice %367 {offsets = [0, 0], sizes = [8, 128], strides = [1, 1]} : vector<8x512xf32> to vector<8x128xf32>
    %369 = arith.negf %368 : vector<8x128xf32>
    %370 = math.exp %369 : vector<8x128xf32>
    %cst_79 = arith.constant 1.000000e+00 : f32
    %371 = vector.broadcast %cst_79 : f32 to vector<8x128xf32>
    %372 = arith.addf %371, %370 : vector<8x128xf32>
    %373 = arith.divf %371, %372 : vector<8x128xf32>
    %374 = vector.extract_strided_slice %367 {offsets = [0, 128], sizes = [8, 128], strides = [1, 1]} : vector<8x512xf32> to vector<8x128xf32>
    %375 = arith.negf %374 : vector<8x128xf32>
    %376 = math.exp %375 : vector<8x128xf32>
    %cst_80 = arith.constant 1.000000e+00 : f32
    %377 = vector.broadcast %cst_80 : f32 to vector<8x128xf32>
    %378 = arith.addf %377, %376 : vector<8x128xf32>
    %379 = arith.divf %377, %378 : vector<8x128xf32>
    %380 = vector.extract_strided_slice %367 {offsets = [0, 256], sizes = [8, 128], strides = [1, 1]} : vector<8x512xf32> to vector<8x128xf32>
    %381 = math.tanh %380 : vector<8x128xf32>
    %382 = vector.extract_strided_slice %367 {offsets = [0, 384], sizes = [8, 128], strides = [1, 1]} : vector<8x512xf32> to vector<8x128xf32>
    %383 = arith.negf %382 : vector<8x128xf32>
    %384 = math.exp %383 : vector<8x128xf32>
    %cst_81 = arith.constant 1.000000e+00 : f32
    %385 = vector.broadcast %cst_81 : f32 to vector<8x128xf32>
    %386 = arith.addf %385, %384 : vector<8x128xf32>
    %387 = arith.divf %385, %386 : vector<8x128xf32>
    %388 = arith.mulf %379, %332 : vector<8x128xf32>
    %389 = arith.mulf %373, %381 : vector<8x128xf32>
    %390 = arith.addf %388, %389 : vector<8x128xf32>
    %391 = math.tanh %390 : vector<8x128xf32>
    %392 = arith.mulf %387, %391 : vector<8x128xf32>
    %393 = tpu.concatenate %392, %362 in 1 : vector<8x128xf32>, vector<8x128xf32> -> vector<8x256xf32>
    %cst_82 = arith.constant dense<0.000000e+00> : vector<8x512xf32>
    %394 = tpu.matmul %393, %1, %cst_82 {dimension_numbers = #tpu.dot_dimension_numbers<[1], [0], [0], [1], [0, 0, 1, 1], [], []>} : vector<8x256xf32>, vector<256x512xf32>, vector<8x512xf32> -> vector<8x512xf32>
    %395 = arith.addf %394, %4 : vector<8x512xf32>
    %396 = vector.extract_strided_slice %395 {offsets = [0, 0], sizes = [8, 128], strides = [1, 1]} : vector<8x512xf32> to vector<8x128xf32>
    %397 = arith.negf %396 : vector<8x128xf32>
    %398 = math.exp %397 : vector<8x128xf32>
    %cst_83 = arith.constant 1.000000e+00 : f32
    %399 = vector.broadcast %cst_83 : f32 to vector<8x128xf32>
    %400 = arith.addf %399, %398 : vector<8x128xf32>
    %401 = arith.divf %399, %400 : vector<8x128xf32>
    %402 = vector.extract_strided_slice %395 {offsets = [0, 128], sizes = [8, 128], strides = [1, 1]} : vector<8x512xf32> to vector<8x128xf32>
    %403 = arith.negf %402 : vector<8x128xf32>
    %404 = math.exp %403 : vector<8x128xf32>
    %cst_84 = arith.constant 1.000000e+00 : f32
    %405 = vector.broadcast %cst_84 : f32 to vector<8x128xf32>
    %406 = arith.addf %405, %404 : vector<8x128xf32>
    %407 = arith.divf %405, %406 : vector<8x128xf32>
    %408 = vector.extract_strided_slice %395 {offsets = [0, 256], sizes = [8, 128], strides = [1, 1]} : vector<8x512xf32> to vector<8x128xf32>
    %409 = math.tanh %408 : vector<8x128xf32>
    %410 = vector.extract_strided_slice %395 {offsets = [0, 384], sizes = [8, 128], strides = [1, 1]} : vector<8x512xf32> to vector<8x128xf32>
    %411 = arith.negf %410 : vector<8x128xf32>
    %412 = math.exp %411 : vector<8x128xf32>
    %cst_85 = arith.constant 1.000000e+00 : f32
    %413 = vector.broadcast %cst_85 : f32 to vector<8x128xf32>
    %414 = arith.addf %413, %412 : vector<8x128xf32>
    %415 = arith.divf %413, %414 : vector<8x128xf32>
    %416 = arith.mulf %407, %360 : vector<8x128xf32>
    %417 = arith.mulf %401, %409 : vector<8x128xf32>
    %418 = arith.addf %416, %417 : vector<8x128xf32>
    %419 = math.tanh %418 : vector<8x128xf32>
    %420 = arith.mulf %415, %419 : vector<8x128xf32>
    %c7_i32 = arith.constant 7 : i32
    %421 = arith.index_cast %c7_i32 : i32 to index
    %c0_86 = arith.constant 0 : index
    %c0_87 = arith.constant 0 : index
    %422 = vector.load %arg9[%421, %c0_86, %c0_87] : memref<8x8x512xf32, #tpu.memory_space<vmem>>, vector<1x8x512xf32>
    %423 = vector.shape_cast %422 : vector<1x8x512xf32> to vector<8x512xf32>
    %cst_88 = arith.constant dense<0.000000e+00> : vector<8x512xf32>
    %424 = tpu.matmul %392, %0, %cst_88 {dimension_numbers = #tpu.dot_dimension_numbers<[1], [0], [0], [1], [0, 0, 1, 1], [], []>} : vector<8x128xf32>, vector<128x512xf32>, vector<8x512xf32> -> vector<8x512xf32>
    %425 = arith.addf %423, %424 : vector<8x512xf32>
    %426 = vector.extract_strided_slice %425 {offsets = [0, 0], sizes = [8, 128], strides = [1, 1]} : vector<8x512xf32> to vector<8x128xf32>
    %427 = arith.negf %426 : vector<8x128xf32>
    %428 = math.exp %427 : vector<8x128xf32>
    %cst_89 = arith.constant 1.000000e+00 : f32
    %429 = vector.broadcast %cst_89 : f32 to vector<8x128xf32>
    %430 = arith.addf %429, %428 : vector<8x128xf32>
    %431 = arith.divf %429, %430 : vector<8x128xf32>
    %432 = vector.extract_strided_slice %425 {offsets = [0, 128], sizes = [8, 128], strides = [1, 1]} : vector<8x512xf32> to vector<8x128xf32>
    %433 = arith.negf %432 : vector<8x128xf32>
    %434 = math.exp %433 : vector<8x128xf32>
    %cst_90 = arith.constant 1.000000e+00 : f32
    %435 = vector.broadcast %cst_90 : f32 to vector<8x128xf32>
    %436 = arith.addf %435, %434 : vector<8x128xf32>
    %437 = arith.divf %435, %436 : vector<8x128xf32>
    %438 = vector.extract_strided_slice %425 {offsets = [0, 256], sizes = [8, 128], strides = [1, 1]} : vector<8x512xf32> to vector<8x128xf32>
    %439 = math.tanh %438 : vector<8x128xf32>
    %440 = vector.extract_strided_slice %425 {offsets = [0, 384], sizes = [8, 128], strides = [1, 1]} : vector<8x512xf32> to vector<8x128xf32>
    %441 = arith.negf %440 : vector<8x128xf32>
    %442 = math.exp %441 : vector<8x128xf32>
    %cst_91 = arith.constant 1.000000e+00 : f32
    %443 = vector.broadcast %cst_91 : f32 to vector<8x128xf32>
    %444 = arith.addf %443, %442 : vector<8x128xf32>
    %445 = arith.divf %443, %444 : vector<8x128xf32>
    %446 = arith.mulf %437, %390 : vector<8x128xf32>
    %447 = arith.mulf %431, %439 : vector<8x128xf32>
    %448 = arith.addf %446, %447 : vector<8x128xf32>
    %449 = math.tanh %448 : vector<8x128xf32>
    %450 = arith.mulf %445, %449 : vector<8x128xf32>
    %451 = tpu.concatenate %450, %420 in 1 : vector<8x128xf32>, vector<8x128xf32> -> vector<8x256xf32>
    %cst_92 = arith.constant dense<0.000000e+00> : vector<8x512xf32>
    %452 = tpu.matmul %451, %1, %cst_92 {dimension_numbers = #tpu.dot_dimension_numbers<[1], [0], [0], [1], [0, 0, 1, 1], [], []>} : vector<8x256xf32>, vector<256x512xf32>, vector<8x512xf32> -> vector<8x512xf32>
    %453 = arith.addf %452, %4 : vector<8x512xf32>
    %454 = vector.extract_strided_slice %453 {offsets = [0, 0], sizes = [8, 128], strides = [1, 1]} : vector<8x512xf32> to vector<8x128xf32>
    %455 = arith.negf %454 : vector<8x128xf32>
    %456 = math.exp %455 : vector<8x128xf32>
    %cst_93 = arith.constant 1.000000e+00 : f32
    %457 = vector.broadcast %cst_93 : f32 to vector<8x128xf32>
    %458 = arith.addf %457, %456 : vector<8x128xf32>
    %459 = arith.divf %457, %458 : vector<8x128xf32>
    %460 = vector.extract_strided_slice %453 {offsets = [0, 128], sizes = [8, 128], strides = [1, 1]} : vector<8x512xf32> to vector<8x128xf32>
    %461 = arith.negf %460 : vector<8x128xf32>
    %462 = math.exp %461 : vector<8x128xf32>
    %cst_94 = arith.constant 1.000000e+00 : f32
    %463 = vector.broadcast %cst_94 : f32 to vector<8x128xf32>
    %464 = arith.addf %463, %462 : vector<8x128xf32>
    %465 = arith.divf %463, %464 : vector<8x128xf32>
    %466 = vector.extract_strided_slice %453 {offsets = [0, 256], sizes = [8, 128], strides = [1, 1]} : vector<8x512xf32> to vector<8x128xf32>
    %467 = math.tanh %466 : vector<8x128xf32>
    %468 = vector.extract_strided_slice %453 {offsets = [0, 384], sizes = [8, 128], strides = [1, 1]} : vector<8x512xf32> to vector<8x128xf32>
    %469 = arith.negf %468 : vector<8x128xf32>
    %470 = math.exp %469 : vector<8x128xf32>
    %cst_95 = arith.constant 1.000000e+00 : f32
    %471 = vector.broadcast %cst_95 : f32 to vector<8x128xf32>
    %472 = arith.addf %471, %470 : vector<8x128xf32>
    %473 = arith.divf %471, %472 : vector<8x128xf32>
    %474 = arith.mulf %465, %418 : vector<8x128xf32>
    %475 = arith.mulf %459, %467 : vector<8x128xf32>
    %476 = arith.addf %474, %475 : vector<8x128xf32>
    %477 = math.tanh %476 : vector<8x128xf32>
    %478 = arith.mulf %473, %477 : vector<8x128xf32>
    %c8_i32 = arith.constant 8 : i32
    %c0_96 = arith.constant 0 : index
    %c0_97 = arith.constant 0 : index
    %479 = vector.load %arg6[%c0_96, %c0_97] : memref<128x128xf32, #tpu.memory_space<vmem>>, vector<128x128xf32>
    %cst_98 = arith.constant dense<0.000000e+00> : vector<8x128xf32>
    %480 = tpu.matmul %478, %479, %cst_98 {dimension_numbers = #tpu.dot_dimension_numbers<[1], [0], [0], [1], [0, 0, 1, 1], [], []>} : vector<8x128xf32>, vector<128x128xf32>, vector<8x128xf32> -> vector<8x128xf32>
    %c0_99 = arith.constant 0 : index
    %c0_100 = arith.constant 0 : index
    %481 = vector.load %arg7[%c0_99, %c0_100] : memref<1x128xf32, #tpu.memory_space<vmem>>, vector<1x128xf32>
    %482 = vector.broadcast %481 : vector<1x128xf32> to vector<8x128xf32>
    %483 = arith.addf %480, %482 : vector<8x128xf32>
    %c0_101 = arith.constant 0 : index
    %c0_102 = arith.constant 0 : index
    %484 = vector.load %arg8[%c0_101, %c0_102] : memref<8x128xf32, #tpu.memory_space<vmem>>, vector<8x128xf32>
    tpu.vector_store %arg8[%c0_101, %c0_102], %483 {strides = array<i32>} : memref<8x128xf32, #tpu.memory_space<vmem>>, vector<8x128xf32>,
    return
  }
}

</mosaic_0001>

<llo_original>
// kernel: tpu_custom_call.1
$region0: #{tpu_custom_call.1}
  #allocation0 [shape = 'u32[]', space=smem, size = 0x4, offset = 0x4, fixed_abs, tag = 'smem constant byte address 0x4 - core index']
  #allocation1 [shape = 'u32[72,128]{1,0:T(1,128)}', space=vmem, size = 0x9000, scoped, tag = 'internal scratch']
  #allocation2 [shape = 'f32[8,8,512]{2,1,0:T(8,128)}', space=vmem, size = 0x20000, scoped, tag = 'scratch operand']
  %s0 = inlined_call_operand.hbm [shape: f32[8,8,128], index: 0, kind: input, shape index: {}]
  %s1 = inlined_call_operand.hbm [shape: f32[128,512], index: 1, kind: input, shape index: {}]
  %s2 = inlined_call_operand.hbm [shape: f32[128,512], index: 2, kind: input, shape index: {}]
  %s3 = inlined_call_operand.hbm [shape: f32[1,512], index: 3, kind: input, shape index: {}]
  %s4 = inlined_call_operand.hbm [shape: f32[256,512], index: 4, kind: input, shape index: {}]
  %s5 = inlined_call_operand.vmem [shape: f32[1,512], index: 5, kind: input, shape index: {}]
  %s6 = inlined_call_operand.hbm [shape: f32[128,128], index: 6, kind: input, shape index: {}]
  %s7 = inlined_call_operand.vmem [shape: f32[1,128], index: 7, kind: input, shape index: {}]
  %s8 = inlined_call_operand.hbm [shape: f32[8,128], index: 8, kind: output, shape index: {}]
  %s9 = sld [smem:[#allocation0]]
  $region66: #{tpu_custom_call.1} parent=0
    _
  %s11 = ssub.s32 1, %s9
  %s12 = scalar_select 0, %s11, %s9
  $region1: #{tpu_custom_call.1} parent=0
    #allocation3 [shape = 'u8[32768]{0}', space=vmem, size = 0x8000, scoped, tag = 'input window, operand 0, single buffered']
    #allocation4 [shape = 's32[1]{0}', space=sflag, size = 0x4, scoped, tag = 'scoped memory for tpu_custom_call.1']
    #allocation5 [shape = 's32[1]{0}', space=sflag, size = 0x4, scoped, tag = 'scoped memory for tpu_custom_call.1']
    #allocation6 [shape = 'u8[262144]{0}', space=vmem, size = 0x40000, scoped, tag = 'input window, operand 1, single buffered']
    #allocation7 [shape = 's32[1]{0}', space=sflag, size = 0x4, scoped, tag = 'scoped memory for tpu_custom_call.1']
    #allocation8 [shape = 'u8[262144]{0}', space=vmem, size = 0x40000, scoped, tag = 'input window, operand 2, single buffered']
    #allocation9 [shape = 'u8[2048]{0}', space=vmem, size = 0x800, scoped, tag = 'input window, operand 3, single buffered']
    #allocation10 [shape = 's32[1]{0}', space=sflag, size = 0x4, scoped, tag = 'scoped memory for tpu_custom_call.1']
    #allocation11 [shape = 'u8[524288]{0}', space=vmem, size = 0x80000, scoped, tag = 'input window, operand 4, single buffered']
    #allocation12 [shape = 'u8[65536]{0}', space=vmem, size = 0x10000, scoped, tag = 'input window, operand 6, single buffered']
    #allocation13 [shape = 's32[1]{0}', space=sflag, size = 0x4, scoped, tag = 'scoped memory for tpu_custom_call.1']
    #allocation14 [shape = 'u8[4096]{0}', space=vmem, size = 0x1000, scoped, tag = 'output window, operand 0, single buffered']
    %13 = vsyncpa [#allocation4], 0
    %14 = vsyncpa [#allocation7], 0
    %15 = vsyncpa [#allocation10], 0
    %16 = vsyncpa [#allocation13], 0
    %17 = vsyncpa [#allocation5], 0
    // Predicated region
    $region2: #{tpu_custom_call.1} parent=1 // pred_check
      _
    $region3: #{tpu_custom_call.1} parent=1 // pred_check_branch
      %19 = sbr.rel (0) target = $region5
    $region4: #{tpu_custom_call.1} parent=1 // pred_region
      %21 = vsyncadd [#allocation4], 0
      %s22 = sshll.u32 %s0, 4
      %s23 = int_to_ptr.hbm [resolvable:$true] %s22
      %s24 = sshll.u32 [#allocation3], 4
      %s25 = int_to_ptr.vmem [resolvable:$true] %s24
      %30 = dma.hbm_to_vmem [thread:$0]  %s23, 1024, %s25, [#allocation4], 128, 128, 8
    $region5: #{tpu_custom_call.1} parent=1 // pred_fallthru
      _
    // Predicated region
    $region6: #{tpu_custom_call.1} parent=1 // pred_check
      _
    $region7: #{tpu_custom_call.1} parent=1 // pred_check_branch
      %32 = sbr.rel (0) target = $region9
    $region8: #{tpu_custom_call.1} parent=1 // pred_region
      %34 = vsyncadd [#allocation7], 0
      %s35 = sshll.u32 %s1, 4
      %s36 = int_to_ptr.hbm [resolvable:$true] %s35
      %s37 = sshll.u32 [#allocation6], 4
      %s38 = int_to_ptr.vmem [resolvable:$true] %s37
      %43 = dma.hbm_to_vmem [thread:$0]  %s36, 8192, %s38, [#allocation7], 512, 512, 32
    $region9: #{tpu_custom_call.1} parent=1 // pred_fallthru
      _
    // Predicated region
    $region10: #{tpu_custom_call.1} parent=1 // pred_check
      _
    $region11: #{tpu_custom_call.1} parent=1 // pred_check_branch
      %45 = sbr.rel (0) target = $region13
    $region12: #{tpu_custom_call.1} parent=1 // pred_region
      %47 = vsyncadd [#allocation7], 0
      %s48 = sshll.u32 %s2, 4
      %s49 = int_to_ptr.hbm [resolvable:$true] %s48
      %s50 = sshll.u32 [#allocation8], 4
      %s51 = int_to_ptr.vmem [resolvable:$true] %s50
      %56 = dma.hbm_to_vmem [thread:$0]  %s49, 8192, %s51, [#allocation7], 512, 512, 32
    $region13: #{tpu_custom_call.1} parent=1 // pred_fallthru
      _
    // Predicated region
    $region14: #{tpu_custom_call.1} parent=1 // pred_check
      _
    $region15: #{tpu_custom_call.1} parent=1 // pred_check_branch
      %58 = sbr.rel (0) target = $region17
    $region16: #{tpu_custom_call.1} parent=1 // pred_region
      %60 = vsyncadd [#allocation10], 0
      %s62 = sshll.u32 %s3, 4
      %s63 = int_to_ptr.hbm [resolvable:$true] %s62
      %s64 = sshll.u32 [#allocation9], 4
      %s65 = int_to_ptr.vmem [resolvable:$true] %s64
      %67 = dma.hbm_to_vmem [thread:$0]  %s63, 64, %s65, [#allocation10]
    $region17: #{tpu_custom_call.1} parent=1 // pred_fallthru
      _
    // Predicated region
    $region18: #{tpu_custom_call.1} parent=1 // pred_check
      _
    $region19: #{tpu_custom_call.1} parent=1 // pred_check_branch
      %69 = sbr.rel (0) target = $region21
    $region20: #{tpu_custom_call.1} parent=1 // pred_region
      %71 = vsyncadd [#allocation10], 0
      %s72 = sshll.u32 %s4, 4
      %s73 = int_to_ptr.hbm [resolvable:$true] %s72
      %s74 = sshll.u32 [#allocation11], 4
      %s75 = int_to_ptr.vmem [resolvable:$true] %s74
      %80 = dma.hbm_to_vmem [thread:$0]  %s73, 16384, %s75, [#allocation10], 512, 512, 32
    $region21: #{tpu_custom_call.1} parent=1 // pred_fallthru
      _
    // Predicated region
    $region22: #{tpu_custom_call.1} parent=1 // pred_check
      _
    $region23: #{tpu_custom_call.1} parent=1 // pred_check_branch
      %82 = sbr.rel (0) target = $region25
    $region24: #{tpu_custom_call.1} parent=1 // pred_region
      _
    $region25: #{tpu_custom_call.1} parent=1 // pred_fallthru
      _
    // Predicated region
    $region26: #{tpu_custom_call.1} parent=1 // pred_check
      _
    $region27: #{tpu_custom_call.1} parent=1 // pred_check_branch
      %84 = sbr.rel (0) target = $region29
    $region28: #{tpu_custom_call.1} parent=1 // pred_region
      %86 = vsyncadd [#allocation13], 0
      %s87 = sshll.u32 %s6, 4
      %s88 = int_to_ptr.hbm [resolvable:$true] %s87
      %s89 = sshll.u32 [#allocation12], 4
      %s90 = int_to_ptr.vmem [resolvable:$true] %s89
      %95 = dma.hbm_to_vmem [thread:$0]  %s88, 2048, %s90, [#allocation13], 128, 128, 8
    $region29: #{tpu_custom_call.1} parent=1 // pred_fallthru
      _
    // Predicated region
    $region30: #{tpu_custom_call.1} parent=1 // pred_check
      _
    $region31: #{tpu_custom_call.1} parent=1 // pred_check_branch
      %97 = sbr.rel (0) target = $region33
    $region32: #{tpu_custom_call.1} parent=1 // pred_region
      _
    $region33: #{tpu_custom_call.1} parent=1 // pred_fallthru
      _
    // Predicated region
    $region34: #{tpu_custom_call.1} parent=1 // pred_check
      _
    $region35: #{tpu_custom_call.1} parent=1 // pred_check_branch
      %99 = sbr.rel (0) target = $region37
    $region36: #{tpu_custom_call.1} parent=1 // pred_region
      %101 = dma.done [#allocation4], 1024
    $region37: #{tpu_custom_call.1} parent=1 // pred_fallthru
      _
    // Predicated region
    $region38: #{tpu_custom_call.1} parent=1 // pred_check
      _
    $region39: #{tpu_custom_call.1} parent=1 // pred_check_branch
      %103 = sbr.rel (0) target = $region41
    $region40: #{tpu_custom_call.1} parent=1 // pred_region
      %105 = dma.done [#allocation7], 8192
    $region41: #{tpu_custom_call.1} parent=1 // pred_fallthru
      _
    // Predicated region
    $region42: #{tpu_custom_call.1} parent=1 // pred_check
      _
    $region43: #{tpu_custom_call.1} parent=1 // pred_check_branch
      %107 = sbr.rel (0) target = $region45
    $region44: #{tpu_custom_call.1} parent=1 // pred_region
      %109 = dma.done [#allocation7], 8192
    $region45: #{tpu_custom_call.1} parent=1 // pred_fallthru
      _
    // Predicated region
    $region46: #{tpu_custom_call.1} parent=1 // pred_check
      _
    $region47: #{tpu_custom_call.1} parent=1 // pred_check_branch
      %111 = sbr.rel (0) target = $region49
    $region48: #{tpu_custom_call.1} parent=1 // pred_region
      %113 = dma.done [#allocation10], 64
    $region49: #{tpu_custom_call.1} parent=1 // pred_fallthru
      _
    // Predicated region
    $region50: #{tpu_custom_call.1} parent=1 // pred_check
      _
    $region51: #{tpu_custom_call.1} parent=1 // pred_check_branch
      %115 = sbr.rel (0) target = $region53
    $region52: #{tpu_custom_call.1} parent=1 // pred_region
      %117 = dma.done [#allocation10], 16384
    $region53: #{tpu_custom_call.1} parent=1 // pred_fallthru
      _
    // Predicated region
    $region54: #{tpu_custom_call.1} parent=1 // pred_check
      _
    $region55: #{tpu_custom_call.1} parent=1 // pred_check_branch
      %119 = sbr.rel (0) target = $region57
    $region56: #{tpu_custom_call.1} parent=1 // pred_region
      %121 = dma.done [#allocation13], 2048
    $region57: #{tpu_custom_call.1} parent=1 // pred_fallthru
      _
    %v122 = vld [vmem:[#allocation8] sm:$0xff]
    %v123 = vld [vmem:[#allocation8 + $0x8] sm:$0xff]
    %v124 = vld [vmem:[#allocation8 + $0x10] sm:$0xff]
    %v125 = vld [vmem:[#allocation8 + $0x18] sm:$0xff]
    %v126 = vld [vmem:[#allocation8 + $0x20] sm:$0xff]
    %v127 = vld [vmem:[#allocation8 + $0x28] sm:$0xff]
    %v128 = vld [vmem:[#allocation8 + $0x30] sm:$0xff]
    %v129 = vld [vmem:[#allocation8 + $0x38] sm:$0xff]
    %v130 = vld [vmem:[#allocation8 + $0x40] sm:$0xff]
    %v131 = vld [vmem:[#allocation8 + $0x48] sm:$0xff]
    %v132 = vld [vmem:[#allocation8 + $0x50] sm:$0xff]
    %v133 = vld [vmem:[#allocation8 + $0x58] sm:$0xff]
    %v134 = vld [vmem:[#allocation8 + $0x60] sm:$0xff]
    %v135 = vld [vmem:[#allocation8 + $0x68] sm:$0xff]
    %v136 = vld [vmem:[#allocation8 + $0x70] sm:$0xff]
    %v137 = vld [vmem:[#allocation8 + $0x78] sm:$0xff]
    %v138 = vld [vmem:[#allocation8 + $0x80] sm:$0xff]
    %v139 = vld [vmem:[#allocation8 + $0x88] sm:$0xff]
    %v140 = vld [vmem:[#allocation8 + $0x90] sm:$0xff]
    %v141 = vld [vmem:[#allocation8 + $0x98] sm:$0xff]
    %v142 = vld [vmem:[#allocation8 + $0xa0] sm:$0xff]
    %v143 = vld [vmem:[#allocation8 + $0xa8] sm:$0xff]
    %v144 = vld [vmem:[#allocation8 + $0xb0] sm:$0xff]
    %v145 = vld [vmem:[#allocation8 + $0xb8] sm:$0xff]
    %v146 = vld [vmem:[#allocation8 + $0xc0] sm:$0xff]
    %v147 = vld [vmem:[#allocation8 + $0xc8] sm:$0xff]
    %v148 = vld [vmem:[#allocation8 + $0xd0] sm:$0xff]
    %v149 = vld [vmem:[#allocation8 + $0xd8] sm:$0xff]
    %v150 = vld [vmem:[#allocation8 + $0xe0] sm:$0xff]
    %v151 = vld [vmem:[#allocation8 + $0xe8] sm:$0xff]
    %v152 = vld [vmem:[#allocation8 + $0xf0] sm:$0xff]
    %v153 = vld [vmem:[#allocation8 + $0xf8] sm:$0xff]
    %v154 = vld [vmem:[#allocation8 + $0x100] sm:$0xff]
    %v155 = vld [vmem:[#allocation8 + $0x108] sm:$0xff]
    %v156 = vld [vmem:[#allocation8 + $0x110] sm:$0xff]
    %v157 = vld [vmem:[#allocation8 + $0x118] sm:$0xff]
    %v158 = vld [vmem:[#allocation8 + $0x120] sm:$0xff]
    %v159 = vld [vmem:[#allocation8 + $0x128] sm:$0xff]
    %v160 = vld [vmem:[#allocation8 + $0x130] sm:$0xff]
    %v161 = vld [vmem:[#allocation8 + $0x138] sm:$0xff]
    %v162 = vld [vmem:[#allocation8 + $0x140] sm:$0xff]
    %v163 = vld [vmem:[#allocation8 + $0x148] sm:$0xff]
    %v164 = vld [vmem:[#allocation8 + $0x150] sm:$0xff]
    %v165 = vld [vmem:[#allocation8 + $0x158] sm:$0xff]
    %v166 = vld [vmem:[#allocation8 + $0x160] sm:$0xff]
    %v167 = vld [vmem:[#allocation8 + $0x168] sm:$0xff]
    %v168 = vld [vmem:[#allocation8 + $0x170] sm:$0xff]
    %v169 = vld [vmem:[#allocation8 + $0x178] sm:$0xff]
    %v170 = vld [vmem:[#allocation8 + $0x180] sm:$0xff]
    %v171 = vld [vmem:[#allocation8 + $0x188] sm:$0xff]
    %v172 = vld [vmem:[#allocation8 + $0x190] sm:$0xff]
    %v173 = vld [vmem:[#allocation8 + $0x198] sm:$0xff]
    %v174 = vld [vmem:[#allocation8 + $0x1a0] sm:$0xff]
    %v175 = vld [vmem:[#allocation8 + $0x1a8] sm:$0xff]
    %v176 = vld [vmem:[#allocation8 + $0x1b0] sm:$0xff]
    %v177 = vld [vmem:[#allocation8 + $0x1b8] sm:$0xff]
    %v178 = vld [vmem:[#allocation8 + $0x1c0] sm:$0xff]
    %v179 = vld [vmem:[#allocation8 + $0x1c8] sm:$0xff]
    %v180 = vld [vmem:[#allocation8 + $0x1d0] sm:$0xff]
    %v181 = vld [vmem:[#allocation8 + $0x1d8] sm:$0xff]
    %v182 = vld [vmem:[#allocation8 + $0x1e0] sm:$0xff]
    %v183 = vld [vmem:[#allocation8 + $0x1e8] sm:$0xff]
    %v184 = vld [vmem:[#allocation8 + $0x1f0] sm:$0xff]
    %v185 = vld [vmem:[#allocation8 + $0x1f8] sm:$0xff]
    %v186 = vld [vmem:[#allocation11] sm:$0xff]
    %v187 = vld [vmem:[#allocation11 + $0x8] sm:$0xff]
    %v188 = vld [vmem:[#allocation11 + $0x10] sm:$0xff]
    %v189 = vld [vmem:[#allocation11 + $0x18] sm:$0xff]
    %v190 = vld [vmem:[#allocation11 + $0x20] sm:$0xff]
    %v191 = vld [vmem:[#allocation11 + $0x28] sm:$0xff]
    %v192 = vld [vmem:[#allocation11 + $0x30] sm:$0xff]
    %v193 = vld [vmem:[#allocation11 + $0x38] sm:$0xff]
    %v194 = vld [vmem:[#allocation11 + $0x40] sm:$0xff]
    %v195 = vld [vmem:[#allocation11 + $0x48] sm:$0xff]
    %v196 = vld [vmem:[#allocation11 + $0x50] sm:$0xff]
    %v197 = vld [vmem:[#allocation11 + $0x58] sm:$0xff]
    %v198 = vld [vmem:[#allocation11 + $0x60] sm:$0xff]
    %v199 = vld [vmem:[#allocation11 + $0x68] sm:$0xff]
    %v200 = vld [vmem:[#allocation11 + $0x70] sm:$0xff]
    %v201 = vld [vmem:[#allocation11 + $0x78] sm:$0xff]
    %v202 = vld [vmem:[#allocation11 + $0x80] sm:$0xff]
    %v203 = vld [vmem:[#allocation11 + $0x88] sm:$0xff]
    %v204 = vld [vmem:[#allocation11 + $0x90] sm:$0xff]
    %v205 = vld [vmem:[#allocation11 + $0x98] sm:$0xff]
    %v206 = vld [vmem:[#allocation11 + $0xa0] sm:$0xff]
    %v207 = vld [vmem:[#allocation11 + $0xa8] sm:$0xff]
    %v208 = vld [vmem:[#allocation11 + $0xb0] sm:$0xff]
    %v209 = vld [vmem:[#allocation11 + $0xb8] sm:$0xff]
    %v210 = vld [vmem:[#allocation11 + $0xc0] sm:$0xff]
    %v211 = vld [vmem:[#allocation11 + $0xc8] sm:$0xff]
    %v212 = vld [vmem:[#allocation11 + $0xd0] sm:$0xff]
    %v213 = vld [vmem:[#allocation11 + $0xd8] sm:$0xff]
    %v214 = vld [vmem:[#allocation11 + $0xe0] sm:$0xff]
    %v215 = vld [vmem:[#allocation11 + $0xe8] sm:$0xff]
    %v216 = vld [vmem:[#allocation11 + $0xf0] sm:$0xff]
    %v217 = vld [vmem:[#allocation11 + $0xf8] sm:$0xff]
    %v218 = vld [vmem:[#allocation11 + $0x100] sm:$0xff]
    %v219 = vld [vmem:[#allocation11 + $0x108] sm:$0xff]
    %v220 = vld [vmem:[#allocation11 + $0x110] sm:$0xff]
    %v221 = vld [vmem:[#allocation11 + $0x118] sm:$0xff]
    %v222 = vld [vmem:[#allocation11 + $0x120] sm:$0xff]
    %v223 = vld [vmem:[#allocation11 + $0x128] sm:$0xff]
    %v224 = vld [vmem:[#allocation11 + $0x130] sm:$0xff]
    %v225 = vld [vmem:[#allocation11 + $0x138] sm:$0xff]
    %v226 = vld [vmem:[#allocation11 + $0x140] sm:$0xff]
    %v227 = vld [vmem:[#allocation11 + $0x148] sm:$0xff]
    %v228 = vld [vmem:[#allocation11 + $0x150] sm:$0xff]
    %v229 = vld [vmem:[#allocation11 + $0x158] sm:$0xff]
    %v230 = vld [vmem:[#allocation11 + $0x160] sm:$0xff]
    %v231 = vld [vmem:[#allocation11 + $0x168] sm:$0xff]
    %v232 = vld [vmem:[#allocation11 + $0x170] sm:$0xff]
    %v233 = vld [vmem:[#allocation11 + $0x178] sm:$0xff]
    %v234 = vld [vmem:[#allocation11 + $0x180] sm:$0xff]
    %v235 = vld [vmem:[#allocation11 + $0x188] sm:$0xff]
    %v236 = vld [vmem:[#allocation11 + $0x190] sm:$0xff]
    %v237 = vld [vmem:[#allocation11 + $0x198] sm:$0xff]
    %v238 = vld [vmem:[#allocation11 + $0x1a0] sm:$0xff]
    %v239 = vld [vmem:[#allocation11 + $0x1a8] sm:$0xff]
    %v240 = vld [vmem:[#allocation11 + $0x1b0] sm:$0xff]
    %v241 = vld [vmem:[#allocation11 + $0x1b8] sm:$0xff]
    %v242 = vld [vmem:[#allocation11 + $0x1c0] sm:$0xff]
    %v243 = vld [vmem:[#allocation11 + $0x1c8] sm:$0xff]
    %v244 = vld [vmem:[#allocation11 + $0x1d0] sm:$0xff]
    %v245 = vld [vmem:[#allocation11 + $0x1d8] sm:$0xff]
    %v246 = vld [vmem:[#allocation11 + $0x1e0] sm:$0xff]
    %v247 = vld [vmem:[#allocation11 + $0x1e8] sm:$0xff]
    %v248 = vld [vmem:[#allocation11 + $0x1f0] sm:$0xff]
    %v249 = vld [vmem:[#allocation11 + $0x1f8] sm:$0xff]
    %v250 = vld [vmem:[#allocation11 + $0x200] sm:$0xff]
    %v251 = vld [vmem:[#allocation11 + $0x208] sm:$0xff]
    %v252 = vld [vmem:[#allocation11 + $0x210] sm:$0xff]
    %v253 = vld [vmem:[#allocation11 + $0x218] sm:$0xff]
    %v254 = vld [vmem:[#allocation11 + $0x220] sm:$0xff]
    %v255 = vld [vmem:[#allocation11 + $0x228] sm:$0xff]
    %v256 = vld [vmem:[#allocation11 + $0x230] sm:$0xff]
    %v257 = vld [vmem:[#allocation11 + $0x238] sm:$0xff]
    %v258 = vld [vmem:[#allocation11 + $0x240] sm:$0xff]
    %v259 = vld [vmem:[#allocation11 + $0x248] sm:$0xff]
    %v260 = vld [vmem:[#allocation11 + $0x250] sm:$0xff]
    %v261 = vld [vmem:[#allocation11 + $0x258] sm:$0xff]
    %v262 = vld [vmem:[#allocation11 + $0x260] sm:$0xff]
    %v263 = vld [vmem:[#allocation11 + $0x268] sm:$0xff]
    %v264 = vld [vmem:[#allocation11 + $0x270] sm:$0xff]
    %v265 = vld [vmem:[#allocation11 + $0x278] sm:$0xff]
    %v266 = vld [vmem:[#allocation11 + $0x280] sm:$0xff]
    %v267 = vld [vmem:[#allocation11 + $0x288] sm:$0xff]
    %v268 = vld [vmem:[#allocation11 + $0x290] sm:$0xff]
    %v269 = vld [vmem:[#allocation11 + $0x298] sm:$0xff]
    %v270 = vld [vmem:[#allocation11 + $0x2a0] sm:$0xff]
    %v271 = vld [vmem:[#allocation11 + $0x2a8] sm:$0xff]
    %v272 = vld [vmem:[#allocation11 + $0x2b0] sm:$0xff]
    %v273 = vld [vmem:[#allocation11 + $0x2b8] sm:$0xff]
    %v274 = vld [vmem:[#allocation11 + $0x2c0] sm:$0xff]
    %v275 = vld [vmem:[#allocation11 + $0x2c8] sm:$0xff]
    %v276 = vld [vmem:[#allocation11 + $0x2d0] sm:$0xff]
    %v277 = vld [vmem:[#allocation11 + $0x2d8] sm:$0xff]
    %v278 = vld [vmem:[#allocation11 + $0x2e0] sm:$0xff]
    %v279 = vld [vmem:[#allocation11 + $0x2e8] sm:$0xff]
    %v280 = vld [vmem:[#allocation11 + $0x2f0] sm:$0xff]
    %v281 = vld [vmem:[#allocation11 + $0x2f8] sm:$0xff]
    %v282 = vld [vmem:[#allocation11 + $0x300] sm:$0xff]
    %v283 = vld [vmem:[#allocation11 + $0x308] sm:$0xff]
    %v284 = vld [vmem:[#allocation11 + $0x310] sm:$0xff]
    %v285 = vld [vmem:[#allocation11 + $0x318] sm:$0xff]
    %v286 = vld [vmem:[#allocation11 + $0x320] sm:$0xff]
    %v287 = vld [vmem:[#allocation11 + $0x328] sm:$0xff]
    %v288 = vld [vmem:[#allocation11 + $0x330] sm:$0xff]
    %v289 = vld [vmem:[#allocation11 + $0x338] sm:$0xff]
    %v290 = vld [vmem:[#allocation11 + $0x340] sm:$0xff]
    %v291 = vld [vmem:[#allocation11 + $0x348] sm:$0xff]
    %v292 = vld [vmem:[#allocation11 + $0x350] sm:$0xff]
    %v293 = vld [vmem:[#allocation11 + $0x358] sm:$0xff]
    %v294 = vld [vmem:[#allocation11 + $0x360] sm:$0xff]
    %v295 = vld [vmem:[#allocation11 + $0x368] sm:$0xff]
    %v296 = vld [vmem:[#allocation11 + $0x370] sm:$0xff]
    %v297 = vld [vmem:[#allocation11 + $0x378] sm:$0xff]
    %v298 = vld [vmem:[#allocation11 + $0x380] sm:$0xff]
    %v299 = vld [vmem:[#allocation11 + $0x388] sm:$0xff]
    %v300 = vld [vmem:[#allocation11 + $0x390] sm:$0xff]
    %v301 = vld [vmem:[#allocation11 + $0x398] sm:$0xff]
    %v302 = vld [vmem:[#allocation11 + $0x3a0] sm:$0xff]
    %v303 = vld [vmem:[#allocation11 + $0x3a8] sm:$0xff]
    %v304 = vld [vmem:[#allocation11 + $0x3b0] sm:$0xff]
    %v305 = vld [vmem:[#allocation11 + $0x3b8] sm:$0xff]
    %v306 = vld [vmem:[#allocation11 + $0x3c0] sm:$0xff]
    %v307 = vld [vmem:[#allocation11 + $0x3c8] sm:$0xff]
    %v308 = vld [vmem:[#allocation11 + $0x3d0] sm:$0xff]
    %v309 = vld [vmem:[#allocation11 + $0x3d8] sm:$0xff]
    %v310 = vld [vmem:[#allocation11 + $0x3e0] sm:$0xff]
    %v311 = vld [vmem:[#allocation11 + $0x3e8] sm:$0xff]
    %v312 = vld [vmem:[#allocation11 + $0x3f0] sm:$0xff]
    %v313 = vld [vmem:[#allocation11 + $0x3f8] sm:$0xff]
    %v314 = vld [vmem:[%s5] sm:$0xf]
    %v316 = vperm.slane %v314, 0
    %v317 = vperm.slane %v314, 1
    %v318 = vperm.slane %v314, 2
    %v319 = vperm.slane %v314, 3
    %v324 = vld [vmem:[#allocation3] sm:$0xff]
    %v325 = vld [vmem:[#allocation3 + $0x8] sm:$0xff]
    %v326 = vld [vmem:[#allocation3 + $0x10] sm:$0xff]
    %v327 = vld [vmem:[#allocation3 + $0x18] sm:$0xff]
    %v328 = vld [vmem:[#allocation3 + $0x20] sm:$0xff]
    %v329 = vld [vmem:[#allocation3 + $0x28] sm:$0xff]
    %v330 = vld [vmem:[#allocation3 + $0x30] sm:$0xff]
    %v331 = vld [vmem:[#allocation3 + $0x38] sm:$0xff]
    %v332 = vld [vmem:[#allocation6] sm:$0xff]
    %v333 = vld [vmem:[#allocation6 + $0x8] sm:$0xff]
    %v334 = vld [vmem:[#allocation6 + $0x10] sm:$0xff]
    %v335 = vld [vmem:[#allocation6 + $0x18] sm:$0xff]
    %v336 = vld [vmem:[#allocation6 + $0x20] sm:$0xff]
    %v337 = vld [vmem:[#allocation6 + $0x28] sm:$0xff]
    %v338 = vld [vmem:[#allocation6 + $0x30] sm:$0xff]
    %v339 = vld [vmem:[#allocation6 + $0x38] sm:$0xff]
    %v340 = vld [vmem:[#allocation6 + $0x40] sm:$0xff]
    %v341 = vld [vmem:[#allocation6 + $0x48] sm:$0xff]
    %v342 = vld [vmem:[#allocation6 + $0x50] sm:$0xff]
    %v343 = vld [vmem:[#allocation6 + $0x58] sm:$0xff]
    %v344 = vld [vmem:[#allocation6 + $0x60] sm:$0xff]
    %v345 = vld [vmem:[#allocation6 + $0x68] sm:$0xff]
    %v346 = vld [vmem:[#allocation6 + $0x70] sm:$0xff]
    %v347 = vld [vmem:[#allocation6 + $0x78] sm:$0xff]
    %v348 = vld [vmem:[#allocation6 + $0x80] sm:$0xff]
    %v349 = vld [vmem:[#allocation6 + $0x88] sm:$0xff]
    %v350 = vld [vmem:[#allocation6 + $0x90] sm:$0xff]
    %v351 = vld [vmem:[#allocation6 + $0x98] sm:$0xff]
    %v352 = vld [vmem:[#allocation6 + $0xa0] sm:$0xff]
    %v353 = vld [vmem:[#allocation6 + $0xa8] sm:$0xff]
    %v354 = vld [vmem:[#allocation6 + $0xb0] sm:$0xff]
    %v355 = vld [vmem:[#allocation6 + $0xb8] sm:$0xff]
    %v356 = vld [vmem:[#allocation6 + $0xc0] sm:$0xff]
    %v357 = vld [vmem:[#allocation6 + $0xc8] sm:$0xff]
    %v358 = vld [vmem:[#allocation6 + $0xd0] sm:$0xff]
    %v359 = vld [vmem:[#allocation6 + $0xd8] sm:$0xff]
    %v360 = vld [vmem:[#allocation6 + $0xe0] sm:$0xff]
    %v361 = vld [vmem:[#allocation6 + $0xe8] sm:$0xff]
    %v362 = vld [vmem:[#allocation6 + $0xf0] sm:$0xff]
    %v363 = vld [vmem:[#allocation6 + $0xf8] sm:$0xff]
    %v364 = vld [vmem:[#allocation6 + $0x100] sm:$0xff]
    %v365 = vld [vmem:[#allocation6 + $0x108] sm:$0xff]
    %v366 = vld [vmem:[#allocation6 + $0x110] sm:$0xff]
    %v367 = vld [vmem:[#allocation6 + $0x118] sm:$0xff]
    %v368 = vld [vmem:[#allocation6 + $0x120] sm:$0xff]
    %v369 = vld [vmem:[#allocation6 + $0x128] sm:$0xff]
    %v370 = vld [vmem:[#allocation6 + $0x130] sm:$0xff]
    %v371 = vld [vmem:[#allocation6 + $0x138] sm:$0xff]
    %v372 = vld [vmem:[#allocation6 + $0x140] sm:$0xff]
    %v373 = vld [vmem:[#allocation6 + $0x148] sm:$0xff]
    %v374 = vld [vmem:[#allocation6 + $0x150] sm:$0xff]
    %v375 = vld [vmem:[#allocation6 + $0x158] sm:$0xff]
    %v376 = vld [vmem:[#allocation6 + $0x160] sm:$0xff]
    %v377 = vld [vmem:[#allocation6 + $0x168] sm:$0xff]
    %v378 = vld [vmem:[#allocation6 + $0x170] sm:$0xff]
    %v379 = vld [vmem:[#allocation6 + $0x178] sm:$0xff]
    %v380 = vld [vmem:[#allocation6 + $0x180] sm:$0xff]
    %v381 = vld [vmem:[#allocation6 + $0x188] sm:$0xff]
    %v382 = vld [vmem:[#allocation6 + $0x190] sm:$0xff]
    %v383 = vld [vmem:[#allocation6 + $0x198] sm:$0xff]
    %v384 = vld [vmem:[#allocation6 + $0x1a0] sm:$0xff]
    %v385 = vld [vmem:[#allocation6 + $0x1a8] sm:$0xff]
    %v386 = vld [vmem:[#allocation6 + $0x1b0] sm:$0xff]
    %v387 = vld [vmem:[#allocation6 + $0x1b8] sm:$0xff]
    %v388 = vld [vmem:[#allocation6 + $0x1c0] sm:$0xff]
    %v389 = vld [vmem:[#allocation6 + $0x1c8] sm:$0xff]
    %v390 = vld [vmem:[#allocation6 + $0x1d0] sm:$0xff]
    %v391 = vld [vmem:[#allocation6 + $0x1d8] sm:$0xff]
    %v392 = vld [vmem:[#allocation6 + $0x1e0] sm:$0xff]
    %v393 = vld [vmem:[#allocation6 + $0x1e8] sm:$0xff]
    %v394 = vld [vmem:[#allocation6 + $0x1f0] sm:$0xff]
    %v395 = vld [vmem:[#allocation6 + $0x1f8] sm:$0xff]
    %v396 = vld [vmem:[#allocation9] sm:$0xf]
    %v398 = vperm.slane %v396, 0
    %v399 = vperm.slane %v396, 1
    %v400 = vperm.slane %v396, 2
    %v401 = vperm.slane %v396, 3
    %406 = vmatpush.msra.mxu0 %v392
    %407 = vmatpush.msra.mxu0 %v388
    %408 = vmatpush.msra.mxu0 %v384
    %409 = vmatpush.msra.mxu0 %v380
    %410 = vmatpush.msra.mxu0 %v376
    %411 = vmatpush.msra.mxu0 %v372
    %412 = vmatpush.msra.mxu0 %v368
    %413 = vmatpush.msra.mxu0 %v364
    %414 = vmatpush.msra.mxu0 %v360
    %415 = vmatpush.msra.mxu0 %v356
    %416 = vmatpush.msra.mxu0 %v352
    %417 = vmatpush.msra.mxu0 %v348
    %418 = vmatpush.msra.mxu0 %v344
    %419 = vmatpush.msra.mxu0 %v340
    %420 = vmatpush.msra.mxu0 %v336
    %421 = vmatpush.msra.mxu0 %v332
    %422 = vmatmul.f32.gmra.mxu0 %v324
    %v423 = vpop.f32.mrf.mxu0
    %v424 = vadd.f32 %v398, %v423
    %425 = vmatmul.f32.gmra.mxu0 %v325
    %v426 = vpop.f32.mrf.mxu0
    %v427 = vadd.f32 %v398, %v426
    %428 = vmatmul.f32.gmra.mxu0 %v326
    %v429 = vpop.f32.mrf.mxu0
    %v430 = vadd.f32 %v398, %v429
    %431 = vmatmul.f32.gmra.mxu0 %v327
    %v432 = vpop.f32.mrf.mxu0
    %v433 = vadd.f32 %v398, %v432
    %434 = vmatmul.f32.gmra.mxu0 %v328
    %v435 = vpop.f32.mrf.mxu0
    %v436 = vadd.f32 %v398, %v435
    %437 = vmatmul.f32.gmra.mxu0 %v329
    %v438 = vpop.f32.mrf.mxu0
    %v439 = vadd.f32 %v398, %v438
    %440 = vmatmul.f32.gmra.mxu0 %v330
    %v441 = vpop.f32.mrf.mxu0
    %v442 = vadd.f32 %v398, %v441
    %443 = vmatmul.f32.gmra.mxu0 %v331
    %v444 = vpop.f32.mrf.mxu0
    %v445 = vadd.f32 %v398, %v444
    %446 = vdwg.mxu0
    %447 = vmatpush.msra.mxu0 %v393
    %448 = vmatpush.msra.mxu0 %v389
    %449 = vmatpush.msra.mxu0 %v385
    %450 = vmatpush.msra.mxu0 %v381
    %451 = vmatpush.msra.mxu0 %v377
    %452 = vmatpush.msra.mxu0 %v373
    %453 = vmatpush.msra.mxu0 %v369
    %454 = vmatpush.msra.mxu0 %v365
    %455 = vmatpush.msra.mxu0 %v361
    %456 = vmatpush.msra.mxu0 %v357
    %457 = vmatpush.msra.mxu0 %v353
    %458 = vmatpush.msra.mxu0 %v349
    %459 = vmatpush.msra.mxu0 %v345
    %460 = vmatpush.msra.mxu0 %v341
    %461 = vmatpush.msra.mxu0 %v337
    %462 = vmatpush.msra.mxu0 %v333
    %463 = vmatmul.f32.gmra.mxu0 %v324
    %v464 = vpop.f32.mrf.mxu0
    %v465 = vadd.f32 %v399, %v464
    %466 = vmatmul.f32.gmra.mxu0 %v325
    %v467 = vpop.f32.mrf.mxu0
    %v468 = vadd.f32 %v399, %v467
    %469 = vmatmul.f32.gmra.mxu0 %v326
    %v470 = vpop.f32.mrf.mxu0
    %v471 = vadd.f32 %v399, %v470
    %472 = vmatmul.f32.gmra.mxu0 %v327
    %v473 = vpop.f32.mrf.mxu0
    %v474 = vadd.f32 %v399, %v473
    %475 = vmatmul.f32.gmra.mxu0 %v328
    %v476 = vpop.f32.mrf.mxu0
    %v477 = vadd.f32 %v399, %v476
    %478 = vmatmul.f32.gmra.mxu0 %v329
    %v479 = vpop.f32.mrf.mxu0
    %v480 = vadd.f32 %v399, %v479
    %481 = vmatmul.f32.gmra.mxu0 %v330
    %v482 = vpop.f32.mrf.mxu0
    %v483 = vadd.f32 %v399, %v482
    %484 = vmatmul.f32.gmra.mxu0 %v331
    %v485 = vpop.f32.mrf.mxu0
    %v486 = vadd.f32 %v399, %v485
    %487 = vdwg.mxu0
    %488 = vmatpush.msra.mxu0 %v394
    %489 = vmatpush.msra.mxu0 %v390
    %490 = vmatpush.msra.mxu0 %v386
    %491 = vmatpush.msra.mxu0 %v382
    %492 = vmatpush.msra.mxu0 %v378
    %493 = vmatpush.msra.mxu0 %v374
    %494 = vmatpush.msra.mxu0 %v370
    %495 = vmatpush.msra.mxu0 %v366
    %496 = vmatpush.msra.mxu0 %v362
    %497 = vmatpush.msra.mxu0 %v358
    %498 = vmatpush.msra.mxu0 %v354
    %499 = vmatpush.msra.mxu0 %v350
    %500 = vmatpush.msra.mxu0 %v346
    %501 = vmatpush.msra.mxu0 %v342
    %502 = vmatpush.msra.mxu0 %v338
    %503 = vmatpush.msra.mxu0 %v334
    %504 = vmatmul.f32.gmra.mxu0 %v324
    %v505 = vpop.f32.mrf.mxu0
    %v506 = vadd.f32 %v400, %v505
    %507 = vmatmul.f32.gmra.mxu0 %v325
    %v508 = vpop.f32.mrf.mxu0
    %v509 = vadd.f32 %v400, %v508
    %510 = vmatmul.f32.gmra.mxu0 %v326
    %v511 = vpop.f32.mrf.mxu0
    %v512 = vadd.f32 %v400, %v511
    %513 = vmatmul.f32.gmra.mxu0 %v327
    %v514 = vpop.f32.mrf.mxu0
    %v515 = vadd.f32 %v400, %v514
    %516 = vmatmul.f32.gmra.mxu0 %v328
    %v517 = vpop.f32.mrf.mxu0
    %v518 = vadd.f32 %v400, %v517
    %519 = vmatmul.f32.gmra.mxu0 %v329
    %v520 = vpop.f32.mrf.mxu0
    %v521 = vadd.f32 %v400, %v520
    %522 = vmatmul.f32.gmra.mxu0 %v330
    %v523 = vpop.f32.mrf.mxu0
    %v524 = vadd.f32 %v400, %v523
    %525 = vmatmul.f32.gmra.mxu0 %v331
    %v526 = vpop.f32.mrf.mxu0
    %v527 = vadd.f32 %v400, %v526
    %528 = vdwg.mxu0
    %529 = vmatpush.msra.mxu0 %v395
    %530 = vmatpush.msra.mxu0 %v391
    %531 = vmatpush.msra.mxu0 %v387
    %532 = vmatpush.msra.mxu0 %v383
    %533 = vmatpush.msra.mxu0 %v379
    %534 = vmatpush.msra.mxu0 %v375
    %535 = vmatpush.msra.mxu0 %v371
    %536 = vmatpush.msra.mxu0 %v367
    %537 = vmatpush.msra.mxu0 %v363
    %538 = vmatpush.msra.mxu0 %v359
    %539 = vmatpush.msra.mxu0 %v355
    %540 = vmatpush.msra.mxu0 %v351
    %541 = vmatpush.msra.mxu0 %v347
    %542 = vmatpush.msra.mxu0 %v343
    %543 = vmatpush.msra.mxu0 %v339
    %544 = vmatpush.msra.mxu0 %v335
    %545 = vmatmul.f32.gmra.mxu0 %v324
    %v546 = vpop.f32.mrf.mxu0
    %v547 = vadd.f32 %v401, %v546
    %548 = vmatmul.f32.gmra.mxu0 %v325
    %v549 = vpop.f32.mrf.mxu0
    %v550 = vadd.f32 %v401, %v549
    %551 = vmatmul.f32.gmra.mxu0 %v326
    %v552 = vpop.f32.mrf.mxu0
    %v553 = vadd.f32 %v401, %v552
    %554 = vmatmul.f32.gmra.mxu0 %v327
    %v555 = vpop.f32.mrf.mxu0
    %v556 = vadd.f32 %v401, %v555
    %557 = vmatmul.f32.gmra.mxu0 %v328
    %v558 = vpop.f32.mrf.mxu0
    %v559 = vadd.f32 %v401, %v558
    %560 = vmatmul.f32.gmra.mxu0 %v329
    %v561 = vpop.f32.mrf.mxu0
    %v562 = vadd.f32 %v401, %v561
    %563 = vmatmul.f32.gmra.mxu0 %v330
    %v564 = vpop.f32.mrf.mxu0
    %v565 = vadd.f32 %v401, %v564
    %566 = vmatmul.f32.gmra.mxu0 %v331
    %v567 = vpop.f32.mrf.mxu0
    %v568 = vadd.f32 %v401, %v567
    %569 = vdwg.mxu0
    %570 = vst [vmem:[#allocation2] sm:$0xff] %v424
    %571 = vst [vmem:[#allocation2 + $0x8] sm:$0xff] %v465
    %572 = vst [vmem:[#allocation2 + $0x10] sm:$0xff] %v506
    %573 = vst [vmem:[#allocation2 + $0x18] sm:$0xff] %v547
    %574 = vst [vmem:[#allocation2 + $0x20] sm:$0xff] %v427
    %575 = vst [vmem:[#allocation2 + $0x28] sm:$0xff] %v468
    %576 = vst [vmem:[#allocation2 + $0x30] sm:$0xff] %v509
    %577 = vst [vmem:[#allocation2 + $0x38] sm:$0xff] %v550
    %578 = vst [vmem:[#allocation2 + $0x40] sm:$0xff] %v430
    %579 = vst [vmem:[#allocation2 + $0x48] sm:$0xff] %v471
    %580 = vst [vmem:[#allocation2 + $0x50] sm:$0xff] %v512
    %581 = vst [vmem:[#allocation2 + $0x58] sm:$0xff] %v553
    %582 = vst [vmem:[#allocation2 + $0x60] sm:$0xff] %v433
    %583 = vst [vmem:[#allocation2 + $0x68] sm:$0xff] %v474
    %584 = vst [vmem:[#allocation2 + $0x70] sm:$0xff] %v515
    %585 = vst [vmem:[#allocation2 + $0x78] sm:$0xff] %v556
    %586 = vst [vmem:[#allocation2 + $0x80] sm:$0xff] %v436
    %587 = vst [vmem:[#allocation2 + $0x88] sm:$0xff] %v477
    %588 = vst [vmem:[#allocation2 + $0x90] sm:$0xff] %v518
    %589 = vst [vmem:[#allocation2 + $0x98] sm:$0xff] %v559
    %590 = vst [vmem:[#allocation2 + $0xa0] sm:$0xff] %v439
    %591 = vst [vmem:[#allocation2 + $0xa8] sm:$0xff] %v480
    %592 = vst [vmem:[#allocation2 + $0xb0] sm:$0xff] %v521
    %593 = vst [vmem:[#allocation2 + $0xb8] sm:$0xff] %v562
    %594 = vst [vmem:[#allocation2 + $0xc0] sm:$0xff] %v442
    %595 = vst [vmem:[#allocation2 + $0xc8] sm:$0xff] %v483
    %596 = vst [vmem:[#allocation2 + $0xd0] sm:$0xff] %v524
    %597 = vst [vmem:[#allocation2 + $0xd8] sm:$0xff] %v565
    %598 = vst [vmem:[#allocation2 + $0xe0] sm:$0xff] %v445
    %599 = vst [vmem:[#allocation2 + $0xe8] sm:$0xff] %v486
    %600 = vst [vmem:[#allocation2 + $0xf0] sm:$0xff] %v527
    %601 = vst [vmem:[#allocation2 + $0xf8] sm:$0xff] %v568
    %v602 = vld [vmem:[#allocation2] sm:$0xff]
    %v603 = vld [vmem:[#allocation2 + $0x8] sm:$0xff]
    %v604 = vld [vmem:[#allocation2 + $0x10] sm:$0xff]
    %v605 = vld [vmem:[#allocation2 + $0x18] sm:$0xff]
    %606 = vmatpush.msra.mxu0 %v182
    %607 = vmatpush.msra.mxu0 %v178
    %608 = vmatpush.msra.mxu0 %v174
    %609 = vmatpush.msra.mxu0 %v170
    %610 = vmatpush.msra.mxu0 %v166
    %611 = vmatpush.msra.mxu0 %v162
    %612 = vmatpush.msra.mxu0 %v158
    %613 = vmatpush.msra.mxu0 %v154
    %614 = vmatpush.msra.mxu0 %v150
    %615 = vmatpush.msra.mxu0 %v146
    %616 = vmatpush.msra.mxu0 %v142
    %617 = vmatpush.msra.mxu0 %v138
    %618 = vmatpush.msra.mxu0 %v134
    %619 = vmatpush.msra.mxu0 %v130
    %620 = vmatpush.msra.mxu0 %v126
    %621 = vmatpush.msra.mxu0 %v122
    %622 = vmatmul.f32.gmra.mxu0 0.0
    %v623 = vpop.f32.mrf.mxu0
    %v624 = vadd.f32 0.0, %v623
    %625 = vdwg.mxu0
    %626 = vmatpush.msra.mxu0 %v183
    %627 = vmatpush.msra.mxu0 %v179
    %628 = vmatpush.msra.mxu0 %v175
    %629 = vmatpush.msra.mxu0 %v171
    %630 = vmatpush.msra.mxu0 %v167
    %631 = vmatpush.msra.mxu0 %v163
    %632 = vmatpush.msra.mxu0 %v159
    %633 = vmatpush.msra.mxu0 %v155
    %634 = vmatpush.msra.mxu0 %v151
    %635 = vmatpush.msra.mxu0 %v147
    %636 = vmatpush.msra.mxu0 %v143
    %637 = vmatpush.msra.mxu0 %v139
    %638 = vmatpush.msra.mxu0 %v135
    %639 = vmatpush.msra.mxu0 %v131
    %640 = vmatpush.msra.mxu0 %v127
    %641 = vmatpush.msra.mxu0 %v123
    %642 = vmatmul.f32.gmra.mxu0 0.0
    %v643 = vpop.f32.mrf.mxu0
    %v644 = vadd.f32 0.0, %v643
    %645 = vdwg.mxu0
    %646 = vmatpush.msra.mxu0 %v184
    %647 = vmatpush.msra.mxu0 %v180
    %648 = vmatpush.msra.mxu0 %v176
    %649 = vmatpush.msra.mxu0 %v172
    %650 = vmatpush.msra.mxu0 %v168
    %651 = vmatpush.msra.mxu0 %v164
    %652 = vmatpush.msra.mxu0 %v160
    %653 = vmatpush.msra.mxu0 %v156
    %654 = vmatpush.msra.mxu0 %v152
    %655 = vmatpush.msra.mxu0 %v148
    %656 = vmatpush.msra.mxu0 %v144
    %657 = vmatpush.msra.mxu0 %v140
    %658 = vmatpush.msra.mxu0 %v136
    %659 = vmatpush.msra.mxu0 %v132
    %660 = vmatpush.msra.mxu0 %v128
    %661 = vmatpush.msra.mxu0 %v124
    %662 = vmatmul.f32.gmra.mxu0 0.0
    %v663 = vpop.f32.mrf.mxu0
    %v664 = vadd.f32 0.0, %v663
    %665 = vdwg.mxu0
    %666 = vmatpush.msra.mxu0 %v185
    %667 = vmatpush.msra.mxu0 %v181
    %668 = vmatpush.msra.mxu0 %v177
    %669 = vmatpush.msra.mxu0 %v173
    %670 = vmatpush.msra.mxu0 %v169
    %671 = vmatpush.msra.mxu0 %v165
    %672 = vmatpush.msra.mxu0 %v161
    %673 = vmatpush.msra.mxu0 %v157
    %674 = vmatpush.msra.mxu0 %v153
    %675 = vmatpush.msra.mxu0 %v149
    %676 = vmatpush.msra.mxu0 %v145
    %677 = vmatpush.msra.mxu0 %v141
    %678 = vmatpush.msra.mxu0 %v137
    %679 = vmatpush.msra.mxu0 %v133
    %680 = vmatpush.msra.mxu0 %v129
    %681 = vmatpush.msra.mxu0 %v125
    %682 = vmatmul.f32.gmra.mxu0 0.0
    %v683 = vpop.f32.mrf.mxu0
    %v684 = vadd.f32 0.0, %v683
    %685 = vdwg.mxu0
    %v686 = vadd.f32 %v602, %v624
    %v687 = vadd.f32 %v603, %v644
    %v688 = vadd.f32 %v604, %v664
    %v689 = vadd.f32 %v605, %v684
    %v690 = vxor.u32 %v686, 2147483648
    %v691 = vmul.f32 %v690, 1.442695
    %v692 = vpow.pop %v691
    %v693 = vadd.f32 %v692, 1.0
    %v694 = vrcp.pop %v693
    %v695 = vmul.f32 %v693, %v694
    %v696 = vsub.f32 1.0, %v695
    %v697 = vmul.f32 %v694, %v696
    %v698 = vadd.f32 %v694, %v697
    %vm699 = vweird.f32 %v693
    %vm700 = vweird.f32 %v694
    %vm701 = vmor %vm699, %vm700
    %v702 = vsel %vm701, %v694, %v698
    %v703 = vand.u32 2147483647, %v693
    %vm704 = vcmp.eq.f32.partialorder %v703, 8.507059e+37
    %v705 = vand.u32 %v693, 2147483648
    %v706 = vor.u32 1.1754944e-38, %v705
    %v707 = vsel %vm704, %v706, %v702
    %v708 = vmul.f32 1.0, %v707
    %v709 = vxor.u32 %v687, 2147483648
    %v710 = vmul.f32 %v709, 1.442695
    %v711 = vpow.pop %v710
    %v712 = vadd.f32 %v711, 1.0
    %v713 = vrcp.pop %v712
    %v714 = vmul.f32 %v712, %v713
    %v715 = vsub.f32 1.0, %v714
    %v716 = vmul.f32 %v713, %v715
    %v717 = vadd.f32 %v713, %v716
    %vm718 = vweird.f32 %v712
    %vm719 = vweird.f32 %v713
    %vm720 = vmor %vm718, %vm719
    %v721 = vsel %vm720, %v713, %v717
    %v722 = vand.u32 2147483647, %v712
    %vm723 = vcmp.eq.f32.partialorder %v722, 8.507059e+37
    %v724 = vand.u32 %v712, 2147483648
    %v725 = vor.u32 1.1754944e-38, %v724
    %v726 = vsel %vm723, %v725, %v721
    %v727 = vmul.f32 1.0, %v726
    %v728 = vtanh.pop %v688
    %v729 = vxor.u32 %v689, 2147483648
    %v730 = vmul.f32 %v729, 1.442695
    %v731 = vpow.pop %v730
    %v732 = vadd.f32 %v731, 1.0
    %v733 = vrcp.pop %v732
    %v734 = vmul.f32 %v732, %v733
    %v735 = vsub.f32 1.0, %v734
    %v736 = vmul.f32 %v733, %v735
    %v737 = vadd.f32 %v733, %v736
    %vm738 = vweird.f32 %v732
    %vm739 = vweird.f32 %v733
    %vm740 = vmor %vm738, %vm739
    %v741 = vsel %vm740, %v733, %v737
    %v742 = vand.u32 2147483647, %v732
    %vm743 = vcmp.eq.f32.partialorder %v742, 8.507059e+37
    %v744 = vand.u32 %v732, 2147483648
    %v745 = vor.u32 1.1754944e-38, %v744
    %v746 = vsel %vm743, %v745, %v741
    %v747 = vmul.f32 1.0, %v746
    %v748 = vmul.f32 %v727, 0.0
    %v749 = vmul.f32 %v708, %v728
    %v750 = vadd.f32 %v748, %v749
    %v751 = vtanh.pop %v750
    %v752 = vmul.f32 %v747, %v751
    %753 = vmatpush.msra.mxu0 %v246
    %754 = vmatpush.msra.mxu0 %v242
    %755 = vmatpush.msra.mxu0 %v238
    %756 = vmatpush.msra.mxu0 %v234
    %757 = vmatpush.msra.mxu0 %v230
    %758 = vmatpush.msra.mxu0 %v226
    %759 = vmatpush.msra.mxu0 %v222
    %760 = vmatpush.msra.mxu0 %v218
    %761 = vmatpush.msra.mxu0 %v214
    %762 = vmatpush.msra.mxu0 %v210
    %763 = vmatpush.msra.mxu0 %v206
    %764 = vmatpush.msra.mxu0 %v202
    %765 = vmatpush.msra.mxu0 %v198
    %766 = vmatpush.msra.mxu0 %v194
    %767 = vmatpush.msra.mxu0 %v190
    %768 = vmatpush.msra.mxu0 %v186
    %769 = vmatmul.f32.gmra.mxu0 %v752
    %v770 = vpop.f32.mrf.mxu0
    %v771 = vadd.f32 %v316, %v770
    %772 = vdwg.mxu0
    %773 = vmatpush.msra.mxu0 %v310
    %774 = vmatpush.msra.mxu0 %v306
    %775 = vmatpush.msra.mxu0 %v302
    %776 = vmatpush.msra.mxu0 %v298
    %777 = vmatpush.msra.mxu0 %v294
    %778 = vmatpush.msra.mxu0 %v290
    %779 = vmatpush.msra.mxu0 %v286
    %780 = vmatpush.msra.mxu0 %v282
    %781 = vmatpush.msra.mxu0 %v278
    %782 = vmatpush.msra.mxu0 %v274
    %783 = vmatpush.msra.mxu0 %v270
    %784 = vmatpush.msra.mxu0 %v266
    %785 = vmatpush.msra.mxu0 %v262
    %786 = vmatpush.msra.mxu0 %v258
    %787 = vmatpush.msra.mxu0 %v254
    %788 = vmatpush.msra.mxu0 %v250
    %789 = vmatmul.f32.gmra.mxu0 0.0
    %v790 = vpop.f32.mrf.mxu0
    %v791 = vadd.f32 %v771, %v790
    %792 = vdwg.mxu0
    %793 = vmatpush.msra.mxu0 %v247
    %794 = vmatpush.msra.mxu0 %v243
    %795 = vmatpush.msra.mxu0 %v239
    %796 = vmatpush.msra.mxu0 %v235
    %797 = vmatpush.msra.mxu0 %v231
    %798 = vmatpush.msra.mxu0 %v227
    %799 = vmatpush.msra.mxu0 %v223
    %800 = vmatpush.msra.mxu0 %v219
    %801 = vmatpush.msra.mxu0 %v215
    %802 = vmatpush.msra.mxu0 %v211
    %803 = vmatpush.msra.mxu0 %v207
    %804 = vmatpush.msra.mxu0 %v203
    %805 = vmatpush.msra.mxu0 %v199
    %806 = vmatpush.msra.mxu0 %v195
    %807 = vmatpush.msra.mxu0 %v191
    %808 = vmatpush.msra.mxu0 %v187
    %809 = vmatmul.f32.gmra.mxu0 %v752
    %v810 = vpop.f32.mrf.mxu0
    %v811 = vadd.f32 %v317, %v810
    %812 = vdwg.mxu0
    %813 = vmatpush.msra.mxu0 %v311
    %814 = vmatpush.msra.mxu0 %v307
    %815 = vmatpush.msra.mxu0 %v303
    %816 = vmatpush.msra.mxu0 %v299
    %817 = vmatpush.msra.mxu0 %v295
    %818 = vmatpush.msra.mxu0 %v291
    %819 = vmatpush.msra.mxu0 %v287
    %820 = vmatpush.msra.mxu0 %v283
    %821 = vmatpush.msra.mxu0 %v279
    %822 = vmatpush.msra.mxu0 %v275
    %823 = vmatpush.msra.mxu0 %v271
    %824 = vmatpush.msra.mxu0 %v267
    %825 = vmatpush.msra.mxu0 %v263
    %826 = vmatpush.msra.mxu0 %v259
    %827 = vmatpush.msra.mxu0 %v255
    %828 = vmatpush.msra.mxu0 %v251
    %829 = vmatmul.f32.gmra.mxu0 0.0
    %v830 = vpop.f32.mrf.mxu0
    %v831 = vadd.f32 %v811, %v830
    %832 = vdwg.mxu0
    %833 = vmatpush.msra.mxu0 %v248
    %834 = vmatpush.msra.mxu0 %v244
    %835 = vmatpush.msra.mxu0 %v240
    %836 = vmatpush.msra.mxu0 %v236
    %837 = vmatpush.msra.mxu0 %v232
    %838 = vmatpush.msra.mxu0 %v228
    %839 = vmatpush.msra.mxu0 %v224
    %840 = vmatpush.msra.mxu0 %v220
    %841 = vmatpush.msra.mxu0 %v216
    %842 = vmatpush.msra.mxu0 %v212
    %843 = vmatpush.msra.mxu0 %v208
    %844 = vmatpush.msra.mxu0 %v204
    %845 = vmatpush.msra.mxu0 %v200
    %846 = vmatpush.msra.mxu0 %v196
    %847 = vmatpush.msra.mxu0 %v192
    %848 = vmatpush.msra.mxu0 %v188
    %849 = vmatmul.f32.gmra.mxu0 %v752
    %v850 = vpop.f32.mrf.mxu0
    %v851 = vadd.f32 %v318, %v850
    %852 = vdwg.mxu0
    %853 = vmatpush.msra.mxu0 %v312
    %854 = vmatpush.msra.mxu0 %v308
    %855 = vmatpush.msra.mxu0 %v304
    %856 = vmatpush.msra.mxu0 %v300
    %857 = vmatpush.msra.mxu0 %v296
    %858 = vmatpush.msra.mxu0 %v292
    %859 = vmatpush.msra.mxu0 %v288
    %860 = vmatpush.msra.mxu0 %v284
    %861 = vmatpush.msra.mxu0 %v280
    %862 = vmatpush.msra.mxu0 %v276
    %863 = vmatpush.msra.mxu0 %v272
    %864 = vmatpush.msra.mxu0 %v268
    %865 = vmatpush.msra.mxu0 %v264
    %866 = vmatpush.msra.mxu0 %v260
    %867 = vmatpush.msra.mxu0 %v256
    %868 = vmatpush.msra.mxu0 %v252
    %869 = vmatmul.f32.gmra.mxu0 0.0
    %v870 = vpop.f32.mrf.mxu0
    %v871 = vadd.f32 %v851, %v870
    %872 = vdwg.mxu0
    %873 = vmatpush.msra.mxu0 %v249
    %874 = vmatpush.msra.mxu0 %v245
    %875 = vmatpush.msra.mxu0 %v241
    %876 = vmatpush.msra.mxu0 %v237
    %877 = vmatpush.msra.mxu0 %v233
    %878 = vmatpush.msra.mxu0 %v229
    %879 = vmatpush.msra.mxu0 %v225
    %880 = vmatpush.msra.mxu0 %v221
    %881 = vmatpush.msra.mxu0 %v217
    %882 = vmatpush.msra.mxu0 %v213
    %883 = vmatpush.msra.mxu0 %v209
    %884 = vmatpush.msra.mxu0 %v205
    %885 = vmatpush.msra.mxu0 %v201
    %886 = vmatpush.msra.mxu0 %v197
    %887 = vmatpush.msra.mxu0 %v193
    %888 = vmatpush.msra.mxu0 %v189
    %889 = vmatmul.f32.gmra.mxu0 %v752
    %v890 = vpop.f32.mrf.mxu0
    %v891 = vadd.f32 %v319, %v890
    %892 = vdwg.mxu0
    %893 = vmatpush.msra.mxu0 %v313
    %894 = vmatpush.msra.mxu0 %v309
    %895 = vmatpush.msra.mxu0 %v305
    %896 = vmatpush.msra.mxu0 %v301
    %897 = vmatpush.msra.mxu0 %v297
    %898 = vmatpush.msra.mxu0 %v293
    %899 = vmatpush.msra.mxu0 %v289
    %900 = vmatpush.msra.mxu0 %v285
    %901 = vmatpush.msra.mxu0 %v281
    %902 = vmatpush.msra.mxu0 %v277
    %903 = vmatpush.msra.mxu0 %v273
    %904 = vmatpush.msra.mxu0 %v269
    %905 = vmatpush.msra.mxu0 %v265
    %906 = vmatpush.msra.mxu0 %v261
    %907 = vmatpush.msra.mxu0 %v257
    %908 = vmatpush.msra.mxu0 %v253
    %909 = vmatmul.f32.gmra.mxu0 0.0
    %v910 = vpop.f32.mrf.mxu0
    %v911 = vadd.f32 %v891, %v910
    %912 = vdwg.mxu0
    %v913 = vxor.u32 %v791, 2147483648
    %v914 = vmul.f32 %v913, 1.442695
    %v915 = vpow.pop %v914
    %v916 = vadd.f32 %v915, 1.0
    %v917 = vrcp.pop %v916
    %v918 = vmul.f32 %v916, %v917
    %v919 = vsub.f32 1.0, %v918
    %v920 = vmul.f32 %v917, %v919
    %v921 = vadd.f32 %v917, %v920
    %vm922 = vweird.f32 %v916
    %vm923 = vweird.f32 %v917
    %vm924 = vmor %vm922, %vm923
    %v925 = vsel %vm924, %v917, %v921
    %v926 = vand.u32 2147483647, %v916
    %vm927 = vcmp.eq.f32.partialorder %v926, 8.507059e+37
    %v928 = vand.u32 %v916, 2147483648
    %v929 = vor.u32 1.1754944e-38, %v928
    %v930 = vsel %vm927, %v929, %v925
    %v931 = vmul.f32 1.0, %v930
    %v932 = vxor.u32 %v831, 2147483648
    %v933 = vmul.f32 %v932, 1.442695
    %v934 = vpow.pop %v933
    %v935 = vadd.f32 %v934, 1.0
    %v936 = vrcp.pop %v935
    %v937 = vmul.f32 %v935, %v936
    %v938 = vsub.f32 1.0, %v937
    %v939 = vmul.f32 %v936, %v938
    %v940 = vadd.f32 %v936, %v939
    %vm941 = vweird.f32 %v935
    %vm942 = vweird.f32 %v936
    %vm943 = vmor %vm941, %vm942
    %v944 = vsel %vm943, %v936, %v940
    %v945 = vand.u32 2147483647, %v935
    %vm946 = vcmp.eq.f32.partialorder %v945, 8.507059e+37
    %v947 = vand.u32 %v935, 2147483648
    %v948 = vor.u32 1.1754944e-38, %v947
    %v949 = vsel %vm946, %v948, %v944
    %v950 = vmul.f32 1.0, %v949
    %v951 = vtanh.pop %v871
    %v952 = vxor.u32 %v911, 2147483648
    %v953 = vmul.f32 %v952, 1.442695
    %v954 = vpow.pop %v953
    %v955 = vadd.f32 %v954, 1.0
    %v956 = vrcp.pop %v955
    %v957 = vmul.f32 %v955, %v956
    %v958 = vsub.f32 1.0, %v957
    %v959 = vmul.f32 %v956, %v958
    %v960 = vadd.f32 %v956, %v959
    %vm961 = vweird.f32 %v955
    %vm962 = vweird.f32 %v956
    %vm963 = vmor %vm961, %vm962
    %v964 = vsel %vm963, %v956, %v960
    %v965 = vand.u32 2147483647, %v955
    %vm966 = vcmp.eq.f32.partialorder %v965, 8.507059e+37
    %v967 = vand.u32 %v955, 2147483648
    %v968 = vor.u32 1.1754944e-38, %v967
    %v969 = vsel %vm966, %v968, %v964
    %v970 = vmul.f32 1.0, %v969
    %v971 = vmul.f32 %v950, 0.0
    %v972 = vmul.f32 %v931, %v951
    %v973 = vadd.f32 %v971, %v972
    %v974 = vtanh.pop %v973
    %v975 = vmul.f32 %v970, %v974
    %s976 = scalar_lea.vmem [#allocation2], 32
    %v977 = vld [vmem:[%s976] sm:$0xff]
    %v978 = vld [vmem:[%s976 + $0x8] sm:$0xff]
    %v979 = vld [vmem:[%s976 + $0x10] sm:$0xff]
    %v980 = vld [vmem:[%s976 + $0x18] sm:$0xff]
    %981 = vmatpush.msra.mxu0 %v182
    %982 = vmatpush.msra.mxu0 %v178
    %983 = vmatpush.msra.mxu0 %v174
    %984 = vmatpush.msra.mxu0 %v170
    %985 = vmatpush.msra.mxu0 %v166
    %986 = vmatpush.msra.mxu0 %v162
    %987 = vmatpush.msra.mxu0 %v158
    %988 = vmatpush.msra.mxu0 %v154
    %989 = vmatpush.msra.mxu0 %v150
    %990 = vmatpush.msra.mxu0 %v146
    %991 = vmatpush.msra.mxu0 %v142
    %992 = vmatpush.msra.mxu0 %v138
    %993 = vmatpush.msra.mxu0 %v134
    %994 = vmatpush.msra.mxu0 %v130
    %995 = vmatpush.msra.mxu0 %v126
    %996 = vmatpush.msra.mxu0 %v122
    %997 = vmatmul.f32.gmra.mxu0 %v752
    %v998 = vpop.f32.mrf.mxu0
    %v999 = vadd.f32 0.0, %v998
    %1000 = vdwg.mxu0
    %1001 = vmatpush.msra.mxu0 %v183
    %1002 = vmatpush.msra.mxu0 %v179
    %1003 = vmatpush.msra.mxu0 %v175
    %1004 = vmatpush.msra.mxu0 %v171
    %1005 = vmatpush.msra.mxu0 %v167
    %1006 = vmatpush.msra.mxu0 %v163
    %1007 = vmatpush.msra.mxu0 %v159
    %1008 = vmatpush.msra.mxu0 %v155
    %1009 = vmatpush.msra.mxu0 %v151
    %1010 = vmatpush.msra.mxu0 %v147
    %1011 = vmatpush.msra.mxu0 %v143
    %1012 = vmatpush.msra.mxu0 %v139
    %1013 = vmatpush.msra.mxu0 %v135
    %1014 = vmatpush.msra.mxu0 %v131
    %1015 = vmatpush.msra.mxu0 %v127
    %1016 = vmatpush.msra.mxu0 %v123
    %1017 = vmatmul.f32.gmra.mxu0 %v752
    %v1018 = vpop.f32.mrf.mxu0
    %v1019 = vadd.f32 0.0, %v1018
    %1020 = vdwg.mxu0
    %1021 = vmatpush.msra.mxu0 %v184
    %1022 = vmatpush.msra.mxu0 %v180
    %1023 = vmatpush.msra.mxu0 %v176
    %1024 = vmatpush.msra.mxu0 %v172
    %1025 = vmatpush.msra.mxu0 %v168
    %1026 = vmatpush.msra.mxu0 %v164
    %1027 = vmatpush.msra.mxu0 %v160
    %1028 = vmatpush.msra.mxu0 %v156
    %1029 = vmatpush.msra.mxu0 %v152
    %1030 = vmatpush.msra.mxu0 %v148
    %1031 = vmatpush.msra.mxu0 %v144
    %1032 = vmatpush.msra.mxu0 %v140
    %1033 = vmatpush.msra.mxu0 %v136
    %1034 = vmatpush.msra.mxu0 %v132
    %1035 = vmatpush.msra.mxu0 %v128
    %1036 = vmatpush.msra.mxu0 %v124
    %1037 = vmatmul.f32.gmra.mxu0 %v752
    %v1038 = vpop.f32.mrf.mxu0
    %v1039 = vadd.f32 0.0, %v1038
    %1040 = vdwg.mxu0
    %1041 = vmatpush.msra.mxu0 %v185
    %1042 = vmatpush.msra.mxu0 %v181
    %1043 = vmatpush.msra.mxu0 %v177
    %1044 = vmatpush.msra.mxu0 %v173
    %1045 = vmatpush.msra.mxu0 %v169
    %1046 = vmatpush.msra.mxu0 %v165
    %1047 = vmatpush.msra.mxu0 %v161
    %1048 = vmatpush.msra.mxu0 %v157
    %1049 = vmatpush.msra.mxu0 %v153
    %1050 = vmatpush.msra.mxu0 %v149
    %1051 = vmatpush.msra.mxu0 %v145
    %1052 = vmatpush.msra.mxu0 %v141
    %1053 = vmatpush.msra.mxu0 %v137
    %1054 = vmatpush.msra.mxu0 %v133
    %1055 = vmatpush.msra.mxu0 %v129
    %1056 = vmatpush.msra.mxu0 %v125
    %1057 = vmatmul.f32.gmra.mxu0 %v752
    %v1058 = vpop.f32.mrf.mxu0
    %v1059 = vadd.f32 0.0, %v1058
    %1060 = vdwg.mxu0
    %v1061 = vadd.f32 %v977, %v999
    %v1062 = vadd.f32 %v978, %v1019
    %v1063 = vadd.f32 %v979, %v1039
    %v1064 = vadd.f32 %v980, %v1059
    %v1065 = vxor.u32 %v1061, 2147483648
    %v1066 = vmul.f32 %v1065, 1.442695
    %v1067 = vpow.pop %v1066
    %v1068 = vadd.f32 %v1067, 1.0
    %v1069 = vrcp.pop %v1068
    %v1070 = vmul.f32 %v1068, %v1069
    %v1071 = vsub.f32 1.0, %v1070
    %v1072 = vmul.f32 %v1069, %v1071
    %v1073 = vadd.f32 %v1069, %v1072
    %vm1074 = vweird.f32 %v1068
    %vm1075 = vweird.f32 %v1069
    %vm1076 = vmor %vm1074, %vm1075
    %v1077 = vsel %vm1076, %v1069, %v1073
    %v1078 = vand.u32 2147483647, %v1068
    %vm1079 = vcmp.eq.f32.partialorder %v1078, 8.507059e+37
    %v1080 = vand.u32 %v1068, 2147483648
    %v1081 = vor.u32 1.1754944e-38, %v1080
    %v1082 = vsel %vm1079, %v1081, %v1077
    %v1083 = vmul.f32 1.0, %v1082
    %v1084 = vxor.u32 %v1062, 2147483648
    %v1085 = vmul.f32 %v1084, 1.442695
    %v1086 = vpow.pop %v1085
    %v1087 = vadd.f32 %v1086, 1.0
    %v1088 = vrcp.pop %v1087
    %v1089 = vmul.f32 %v1087, %v1088
    %v1090 = vsub.f32 1.0, %v1089
    %v1091 = vmul.f32 %v1088, %v1090
    %v1092 = vadd.f32 %v1088, %v1091
    %vm1093 = vweird.f32 %v1087
    %vm1094 = vweird.f32 %v1088
    %vm1095 = vmor %vm1093, %vm1094
    %v1096 = vsel %vm1095, %v1088, %v1092
    %v1097 = vand.u32 2147483647, %v1087
    %vm1098 = vcmp.eq.f32.partialorder %v1097, 8.507059e+37
    %v1099 = vand.u32 %v1087, 2147483648
    %v1100 = vor.u32 1.1754944e-38, %v1099
    %v1101 = vsel %vm1098, %v1100, %v1096
    %v1102 = vmul.f32 1.0, %v1101
    %v1103 = vtanh.pop %v1063
    %v1104 = vxor.u32 %v1064, 2147483648
    %v1105 = vmul.f32 %v1104, 1.442695
    %v1106 = vpow.pop %v1105
    %v1107 = vadd.f32 %v1106, 1.0
    %v1108 = vrcp.pop %v1107
    %v1109 = vmul.f32 %v1107, %v1108
    %v1110 = vsub.f32 1.0, %v1109
    %v1111 = vmul.f32 %v1108, %v1110
    %v1112 = vadd.f32 %v1108, %v1111
    %vm1113 = vweird.f32 %v1107
    %vm1114 = vweird.f32 %v1108
    %vm1115 = vmor %vm1113, %vm1114
    %v1116 = vsel %vm1115, %v1108, %v1112
    %v1117 = vand.u32 2147483647, %v1107
    %vm1118 = vcmp.eq.f32.partialorder %v1117, 8.507059e+37
    %v1119 = vand.u32 %v1107, 2147483648
    %v1120 = vor.u32 1.1754944e-38, %v1119
    %v1121 = vsel %vm1118, %v1120, %v1116
    %v1122 = vmul.f32 1.0, %v1121
    %v1123 = vmul.f32 %v1102, %v750
    %v1124 = vmul.f32 %v1083, %v1103
    %v1125 = vadd.f32 %v1123, %v1124
    %v1126 = vtanh.pop %v1125
    %v1127 = vmul.f32 %v1122, %v1126
    %1128 = vmatpush.msra.mxu0 %v246
    %1129 = vmatpush.msra.mxu0 %v242
    %1130 = vmatpush.msra.mxu0 %v238
    %1131 = vmatpush.msra.mxu0 %v234
    %1132 = vmatpush.msra.mxu0 %v230
    %1133 = vmatpush.msra.mxu0 %v226
    %1134 = vmatpush.msra.mxu0 %v222
    %1135 = vmatpush.msra.mxu0 %v218
    %1136 = vmatpush.msra.mxu0 %v214
    %1137 = vmatpush.msra.mxu0 %v210
    %1138 = vmatpush.msra.mxu0 %v206
    %1139 = vmatpush.msra.mxu0 %v202
    %1140 = vmatpush.msra.mxu0 %v198
    %1141 = vmatpush.msra.mxu0 %v194
    %1142 = vmatpush.msra.mxu0 %v190
    %1143 = vmatpush.msra.mxu0 %v186
    %1144 = vmatmul.f32.gmra.mxu0 %v1127
    %v1145 = vpop.f32.mrf.mxu0
    %v1146 = vadd.f32 %v316, %v1145
    %1147 = vdwg.mxu0
    %1148 = vmatpush.msra.mxu0 %v310
    %1149 = vmatpush.msra.mxu0 %v306
    %1150 = vmatpush.msra.mxu0 %v302
    %1151 = vmatpush.msra.mxu0 %v298
    %1152 = vmatpush.msra.mxu0 %v294
    %1153 = vmatpush.msra.mxu0 %v290
    %1154 = vmatpush.msra.mxu0 %v286
    %1155 = vmatpush.msra.mxu0 %v282
    %1156 = vmatpush.msra.mxu0 %v278
    %1157 = vmatpush.msra.mxu0 %v274
    %1158 = vmatpush.msra.mxu0 %v270
    %1159 = vmatpush.msra.mxu0 %v266
    %1160 = vmatpush.msra.mxu0 %v262
    %1161 = vmatpush.msra.mxu0 %v258
    %1162 = vmatpush.msra.mxu0 %v254
    %1163 = vmatpush.msra.mxu0 %v250
    %1164 = vmatmul.f32.gmra.mxu0 %v975
    %v1165 = vpop.f32.mrf.mxu0
    %v1166 = vadd.f32 %v1146, %v1165
    %1167 = vdwg.mxu0
    %1168 = vmatpush.msra.mxu0 %v247
    %1169 = vmatpush.msra.mxu0 %v243
    %1170 = vmatpush.msra.mxu0 %v239
    %1171 = vmatpush.msra.mxu0 %v235
    %1172 = vmatpush.msra.mxu0 %v231
    %1173 = vmatpush.msra.mxu0 %v227
    %1174 = vmatpush.msra.mxu0 %v223
    %1175 = vmatpush.msra.mxu0 %v219
    %1176 = vmatpush.msra.mxu0 %v215
    %1177 = vmatpush.msra.mxu0 %v211
    %1178 = vmatpush.msra.mxu0 %v207
    %1179 = vmatpush.msra.mxu0 %v203
    %1180 = vmatpush.msra.mxu0 %v199
    %1181 = vmatpush.msra.mxu0 %v195
    %1182 = vmatpush.msra.mxu0 %v191
    %1183 = vmatpush.msra.mxu0 %v187
    %1184 = vmatmul.f32.gmra.mxu0 %v1127
    %v1185 = vpop.f32.mrf.mxu0
    %v1186 = vadd.f32 %v317, %v1185
    %1187 = vdwg.mxu0
    %1188 = vmatpush.msra.mxu0 %v311
    %1189 = vmatpush.msra.mxu0 %v307
    %1190 = vmatpush.msra.mxu0 %v303
    %1191 = vmatpush.msra.mxu0 %v299
    %1192 = vmatpush.msra.mxu0 %v295
    %1193 = vmatpush.msra.mxu0 %v291
    %1194 = vmatpush.msra.mxu0 %v287
    %1195 = vmatpush.msra.mxu0 %v283
    %1196 = vmatpush.msra.mxu0 %v279
    %1197 = vmatpush.msra.mxu0 %v275
    %1198 = vmatpush.msra.mxu0 %v271
    %1199 = vmatpush.msra.mxu0 %v267
    %1200 = vmatpush.msra.mxu0 %v263
    %1201 = vmatpush.msra.mxu0 %v259
    %1202 = vmatpush.msra.mxu0 %v255
    %1203 = vmatpush.msra.mxu0 %v251
    %1204 = vmatmul.f32.gmra.mxu0 %v975
    %v1205 = vpop.f32.mrf.mxu0
    %v1206 = vadd.f32 %v1186, %v1205
    %1207 = vdwg.mxu0
    %1208 = vmatpush.msra.mxu0 %v248
    %1209 = vmatpush.msra.mxu0 %v244
    %1210 = vmatpush.msra.mxu0 %v240
    %1211 = vmatpush.msra.mxu0 %v236
    %1212 = vmatpush.msra.mxu0 %v232
    %1213 = vmatpush.msra.mxu0 %v228
    %1214 = vmatpush.msra.mxu0 %v224
    %1215 = vmatpush.msra.mxu0 %v220
    %1216 = vmatpush.msra.mxu0 %v216
    %1217 = vmatpush.msra.mxu0 %v212
    %1218 = vmatpush.msra.mxu0 %v208
    %1219 = vmatpush.msra.mxu0 %v204
    %1220 = vmatpush.msra.mxu0 %v200
    %1221 = vmatpush.msra.mxu0 %v196
    %1222 = vmatpush.msra.mxu0 %v192
    %1223 = vmatpush.msra.mxu0 %v188
    %1224 = vmatmul.f32.gmra.mxu0 %v1127
    %v1225 = vpop.f32.mrf.mxu0
    %v1226 = vadd.f32 %v318, %v1225
    %1227 = vdwg.mxu0
    %1228 = vmatpush.msra.mxu0 %v312
    %1229 = vmatpush.msra.mxu0 %v308
    %1230 = vmatpush.msra.mxu0 %v304
    %1231 = vmatpush.msra.mxu0 %v300
    %1232 = vmatpush.msra.mxu0 %v296
    %1233 = vmatpush.msra.mxu0 %v292
    %1234 = vmatpush.msra.mxu0 %v288
    %1235 = vmatpush.msra.mxu0 %v284
    %1236 = vmatpush.msra.mxu0 %v280
    %1237 = vmatpush.msra.mxu0 %v276
    %1238 = vmatpush.msra.mxu0 %v272
    %1239 = vmatpush.msra.mxu0 %v268
    %1240 = vmatpush.msra.mxu0 %v264
    %1241 = vmatpush.msra.mxu0 %v260
    %1242 = vmatpush.msra.mxu0 %v256
    %1243 = vmatpush.msra.mxu0 %v252
    %1244 = vmatmul.f32.gmra.mxu0 %v975
    %v1245 = vpop.f32.mrf.mxu0
    %v1246 = vadd.f32 %v1226, %v1245
    %1247 = vdwg.mxu0
    %1248 = vmatpush.msra.mxu0 %v249
    %1249 = vmatpush.msra.mxu0 %v245
    %1250 = vmatpush.msra.mxu0 %v241
    %1251 = vmatpush.msra.mxu0 %v237
    %1252 = vmatpush.msra.mxu0 %v233
    %1253 = vmatpush.msra.mxu0 %v229
    %1254 = vmatpush.msra.mxu0 %v225
    %1255 = vmatpush.msra.mxu0 %v221
    %1256 = vmatpush.msra.mxu0 %v217
    %1257 = vmatpush.msra.mxu0 %v213
    %1258 = vmatpush.msra.mxu0 %v209
    %1259 = vmatpush.msra.mxu0 %v205
    %1260 = vmatpush.msra.mxu0 %v201
    %1261 = vmatpush.msra.mxu0 %v197
    %1262 = vmatpush.msra.mxu0 %v193
    %1263 = vmatpush.msra.mxu0 %v189
    %1264 = vmatmul.f32.gmra.mxu0 %v1127
    %v1265 = vpop.f32.mrf.mxu0
    %v1266 = vadd.f32 %v319, %v1265
    %1267 = vdwg.mxu0
    %1268 = vmatpush.msra.mxu0 %v313
    %1269 = vmatpush.msra.mxu0 %v309
    %1270 = vmatpush.msra.mxu0 %v305
    %1271 = vmatpush.msra.mxu0 %v301
    %1272 = vmatpush.msra.mxu0 %v297
    %1273 = vmatpush.msra.mxu0 %v293
    %1274 = vmatpush.msra.mxu0 %v289
    %1275 = vmatpush.msra.mxu0 %v285
    %1276 = vmatpush.msra.mxu0 %v281
    %1277 = vmatpush.msra.mxu0 %v277
    %1278 = vmatpush.msra.mxu0 %v273
    %1279 = vmatpush.msra.mxu0 %v269
    %1280 = vmatpush.msra.mxu0 %v265
    %1281 = vmatpush.msra.mxu0 %v261
    %1282 = vmatpush.msra.mxu0 %v257
    %1283 = vmatpush.msra.mxu0 %v253
    %1284 = vmatmul.f32.gmra.mxu0 %v975
    %v1285 = vpop.f32.mrf.mxu0
    %v1286 = vadd.f32 %v1266, %v1285
    %1287 = vdwg.mxu0
    %v1288 = vxor.u32 %v1166, 2147483648
    %v1289 = vmul.f32 %v1288, 1.442695
    %v1290 = vpow.pop %v1289
    %v1291 = vadd.f32 %v1290, 1.0
    %v1292 = vrcp.pop %v1291
    %v1293 = vmul.f32 %v1291, %v1292
    %v1294 = vsub.f32 1.0, %v1293
    %v1295 = vmul.f32 %v1292, %v1294
    %v1296 = vadd.f32 %v1292, %v1295
    %vm1297 = vweird.f32 %v1291
    %vm1298 = vweird.f32 %v1292
    %vm1299 = vmor %vm1297, %vm1298
    %v1300 = vsel %vm1299, %v1292, %v1296
    %v1301 = vand.u32 2147483647, %v1291
    %vm1302 = vcmp.eq.f32.partialorder %v1301, 8.507059e+37
    %v1303 = vand.u32 %v1291, 2147483648
    %v1304 = vor.u32 1.1754944e-38, %v1303
    %v1305 = vsel %vm1302, %v1304, %v1300
    %v1306 = vmul.f32 1.0, %v1305
    %v1307 = vxor.u32 %v1206, 2147483648
    %v1308 = vmul.f32 %v1307, 1.442695
    %v1309 = vpow.pop %v1308
    %v1310 = vadd.f32 %v1309, 1.0
    %v1311 = vrcp.pop %v1310
    %v1312 = vmul.f32 %v1310, %v1311
    %v1313 = vsub.f32 1.0, %v1312
    %v1314 = vmul.f32 %v1311, %v1313
    %v1315 = vadd.f32 %v1311, %v1314
    %vm1316 = vweird.f32 %v1310
    %vm1317 = vweird.f32 %v1311
    %vm1318 = vmor %vm1316, %vm1317
    %v1319 = vsel %vm1318, %v1311, %v1315
    %v1320 = vand.u32 2147483647, %v1310
    %vm1321 = vcmp.eq.f32.partialorder %v1320, 8.507059e+37
    %v1322 = vand.u32 %v1310, 2147483648
    %v1323 = vor.u32 1.1754944e-38, %v1322
    %v1324 = vsel %vm1321, %v1323, %v1319
    %v1325 = vmul.f32 1.0, %v1324
    %v1326 = vtanh.pop %v1246
    %v1327 = vxor.u32 %v1286, 2147483648
    %v1328 = vmul.f32 %v1327, 1.442695
    %v1329 = vpow.pop %v1328
    %v1330 = vadd.f32 %v1329, 1.0
    %v1331 = vrcp.pop %v1330
    %v1332 = vmul.f32 %v1330, %v1331
    %v1333 = vsub.f32 1.0, %v1332
    %v1334 = vmul.f32 %v1331, %v1333
    %v1335 = vadd.f32 %v1331, %v1334
    %vm1336 = vweird.f32 %v1330
    %vm1337 = vweird.f32 %v1331
    %vm1338 = vmor %vm1336, %vm1337
    %v1339 = vsel %vm1338, %v1331, %v1335
    %v1340 = vand.u32 2147483647, %v1330
    %vm1341 = vcmp.eq.f32.partialorder %v1340, 8.507059e+37
    %v1342 = vand.u32 %v1330, 2147483648
    %v1343 = vor.u32 1.1754944e-38, %v1342
    %v1344 = vsel %vm1341, %v1343, %v1339
    %v1345 = vmul.f32 1.0, %v1344
    %v1346 = vmul.f32 %v1325, %v973
    %v1347 = vmul.f32 %v1306, %v1326
    %v1348 = vadd.f32 %v1346, %v1347
    %v1349 = vtanh.pop %v1348
    %v1350 = vmul.f32 %v1345, %v1349
    %s1351 = scalar_lea.vmem [#allocation2], 64
    %v1352 = vld [vmem:[%s1351] sm:$0xff]
    %v1353 = vld [vmem:[%s1351 + $0x8] sm:$0xff]
    %v1354 = vld [vmem:[%s1351 + $0x10] sm:$0xff]
    %v1355 = vld [vmem:[%s1351 + $0x18] sm:$0xff]
    %1356 = vmatpush.msra.mxu0 %v182
    %1357 = vmatpush.msra.mxu0 %v178
    %1358 = vmatpush.msra.mxu0 %v174
    %1359 = vmatpush.msra.mxu0 %v170
    %1360 = vmatpush.msra.mxu0 %v166
    %1361 = vmatpush.msra.mxu0 %v162
    %1362 = vmatpush.msra.mxu0 %v158
    %1363 = vmatpush.msra.mxu0 %v154
    %1364 = vmatpush.msra.mxu0 %v150
    %1365 = vmatpush.msra.mxu0 %v146
    %1366 = vmatpush.msra.mxu0 %v142
    %1367 = vmatpush.msra.mxu0 %v138
    %1368 = vmatpush.msra.mxu0 %v134
    %1369 = vmatpush.msra.mxu0 %v130
    %1370 = vmatpush.msra.mxu0 %v126
    %1371 = vmatpush.msra.mxu0 %v122
    %1372 = vmatmul.f32.gmra.mxu0 %v1127
    %v1373 = vpop.f32.mrf.mxu0
    %v1374 = vadd.f32 0.0, %v1373
    %1375 = vdwg.mxu0
    %1376 = vmatpush.msra.mxu0 %v183
    %1377 = vmatpush.msra.mxu0 %v179
    %1378 = vmatpush.msra.mxu0 %v175
    %1379 = vmatpush.msra.mxu0 %v171
    %1380 = vmatpush.msra.mxu0 %v167
    %1381 = vmatpush.msra.mxu0 %v163
    %1382 = vmatpush.msra.mxu0 %v159
    %1383 = vmatpush.msra.mxu0 %v155
    %1384 = vmatpush.msra.mxu0 %v151
    %1385 = vmatpush.msra.mxu0 %v147
    %1386 = vmatpush.msra.mxu0 %v143
    %1387 = vmatpush.msra.mxu0 %v139
    %1388 = vmatpush.msra.mxu0 %v135
    %1389 = vmatpush.msra.mxu0 %v131
    %1390 = vmatpush.msra.mxu0 %v127
    %1391 = vmatpush.msra.mxu0 %v123
    %1392 = vmatmul.f32.gmra.mxu0 %v1127
    %v1393 = vpop.f32.mrf.mxu0
    %v1394 = vadd.f32 0.0, %v1393
    %1395 = vdwg.mxu0
    %1396 = vmatpush.msra.mxu0 %v184
    %1397 = vmatpush.msra.mxu0 %v180
    %1398 = vmatpush.msra.mxu0 %v176
    %1399 = vmatpush.msra.mxu0 %v172
    %1400 = vmatpush.msra.mxu0 %v168
    %1401 = vmatpush.msra.mxu0 %v164
    %1402 = vmatpush.msra.mxu0 %v160
    %1403 = vmatpush.msra.mxu0 %v156
    %1404 = vmatpush.msra.mxu0 %v152
    %1405 = vmatpush.msra.mxu0 %v148
    %1406 = vmatpush.msra.mxu0 %v144
    %1407 = vmatpush.msra.mxu0 %v140
    %1408 = vmatpush.msra.mxu0 %v136
    %1409 = vmatpush.msra.mxu0 %v132
    %1410 = vmatpush.msra.mxu0 %v128
    %1411 = vmatpush.msra.mxu0 %v124
    %1412 = vmatmul.f32.gmra.mxu0 %v1127
    %v1413 = vpop.f32.mrf.mxu0
    %v1414 = vadd.f32 0.0, %v1413
    %1415 = vdwg.mxu0
    %1416 = vmatpush.msra.mxu0 %v185
    %1417 = vmatpush.msra.mxu0 %v181
    %1418 = vmatpush.msra.mxu0 %v177
    %1419 = vmatpush.msra.mxu0 %v173
    %1420 = vmatpush.msra.mxu0 %v169
    %1421 = vmatpush.msra.mxu0 %v165
    %1422 = vmatpush.msra.mxu0 %v161
    %1423 = vmatpush.msra.mxu0 %v157
    %1424 = vmatpush.msra.mxu0 %v153
    %1425 = vmatpush.msra.mxu0 %v149
    %1426 = vmatpush.msra.mxu0 %v145
    %1427 = vmatpush.msra.mxu0 %v141
    %1428 = vmatpush.msra.mxu0 %v137
    %1429 = vmatpush.msra.mxu0 %v133
    %1430 = vmatpush.msra.mxu0 %v129
    %1431 = vmatpush.msra.mxu0 %v125
    %1432 = vmatmul.f32.gmra.mxu0 %v1127
    %v1433 = vpop.f32.mrf.mxu0
    %v1434 = vadd.f32 0.0, %v1433
    %1435 = vdwg.mxu0
    %v1436 = vadd.f32 %v1352, %v1374
    %v1437 = vadd.f32 %v1353, %v1394
    %v1438 = vadd.f32 %v1354, %v1414
    %v1439 = vadd.f32 %v1355, %v1434
    %v1440 = vxor.u32 %v1436, 2147483648
    %v1441 = vmul.f32 %v1440, 1.442695
    %v1442 = vpow.pop %v1441
    %v1443 = vadd.f32 %v1442, 1.0
    %v1444 = vrcp.pop %v1443
    %v1445 = vmul.f32 %v1443, %v1444
    %v1446 = vsub.f32 1.0, %v1445
    %v1447 = vmul.f32 %v1444, %v1446
    %v1448 = vadd.f32 %v1444, %v1447
    %vm1449 = vweird.f32 %v1443
    %vm1450 = vweird.f32 %v1444
    %vm1451 = vmor %vm1449, %vm1450
    %v1452 = vsel %vm1451, %v1444, %v1448
    %v1453 = vand.u32 2147483647, %v1443
    %vm1454 = vcmp.eq.f32.partialorder %v1453, 8.507059e+37
    %v1455 = vand.u32 %v1443, 2147483648
    %v1456 = vor.u32 1.1754944e-38, %v1455
    %v1457 = vsel %vm1454, %v1456, %v1452
    %v1458 = vmul.f32 1.0, %v1457
    %v1459 = vxor.u32 %v1437, 2147483648
    %v1460 = vmul.f32 %v1459, 1.442695
    %v1461 = vpow.pop %v1460
    %v1462 = vadd.f32 %v1461, 1.0
    %v1463 = vrcp.pop %v1462
    %v1464 = vmul.f32 %v1462, %v1463
    %v1465 = vsub.f32 1.0, %v1464
    %v1466 = vmul.f32 %v1463, %v1465
    %v1467 = vadd.f32 %v1463, %v1466
    %vm1468 = vweird.f32 %v1462
    %vm1469 = vweird.f32 %v1463
    %vm1470 = vmor %vm1468, %vm1469
    %v1471 = vsel %vm1470, %v1463, %v1467
    %v1472 = vand.u32 2147483647, %v1462
    %vm1473 = vcmp.eq.f32.partialorder %v1472, 8.507059e+37
    %v1474 = vand.u32 %v1462, 2147483648
    %v1475 = vor.u32 1.1754944e-38, %v1474
    %v1476 = vsel %vm1473, %v1475, %v1471
    %v1477 = vmul.f32 1.0, %v1476
    %v1478 = vtanh.pop %v1438
    %v1479 = vxor.u32 %v1439, 2147483648
    %v1480 = vmul.f32 %v1479, 1.442695
    %v1481 = vpow.pop %v1480
    %v1482 = vadd.f32 %v1481, 1.0
    %v1483 = vrcp.pop %v1482
    %v1484 = vmul.f32 %v1482, %v1483
    %v1485 = vsub.f32 1.0, %v1484
    %v1486 = vmul.f32 %v1483, %v1485
    %v1487 = vadd.f32 %v1483, %v1486
    %vm1488 = vweird.f32 %v1482
    %vm1489 = vweird.f32 %v1483
    %vm1490 = vmor %vm1488, %vm1489
    %v1491 = vsel %vm1490, %v1483, %v1487
    %v1492 = vand.u32 2147483647, %v1482
    %vm1493 = vcmp.eq.f32.partialorder %v1492, 8.507059e+37
    %v1494 = vand.u32 %v1482, 2147483648
    %v1495 = vor.u32 1.1754944e-38, %v1494
    %v1496 = vsel %vm1493, %v1495, %v1491
    %v1497 = vmul.f32 1.0, %v1496
    %v1498 = vmul.f32 %v1477, %v1125
    %v1499 = vmul.f32 %v1458, %v1478
    %v1500 = vadd.f32 %v1498, %v1499
    %v1501 = vtanh.pop %v1500
    %v1502 = vmul.f32 %v1497, %v1501
    %1503 = vmatpush.msra.mxu0 %v246
    %1504 = vmatpush.msra.mxu0 %v242
    %1505 = vmatpush.msra.mxu0 %v238
    %1506 = vmatpush.msra.mxu0 %v234
    %1507 = vmatpush.msra.mxu0 %v230
    %1508 = vmatpush.msra.mxu0 %v226
    %1509 = vmatpush.msra.mxu0 %v222
    %1510 = vmatpush.msra.mxu0 %v218
    %1511 = vmatpush.msra.mxu0 %v214
    %1512 = vmatpush.msra.mxu0 %v210
    %1513 = vmatpush.msra.mxu0 %v206
    %1514 = vmatpush.msra.mxu0 %v202
    %1515 = vmatpush.msra.mxu0 %v198
    %1516 = vmatpush.msra.mxu0 %v194
    %1517 = vmatpush.msra.mxu0 %v190
    %1518 = vmatpush.msra.mxu0 %v186
    %1519 = vmatmul.f32.gmra.mxu0 %v1502
    %v1520 = vpop.f32.mrf.mxu0
    %v1521 = vadd.f32 %v316, %v1520
    %1522 = vdwg.mxu0
    %1523 = vmatpush.msra.mxu0 %v310
    %1524 = vmatpush.msra.mxu0 %v306
    %1525 = vmatpush.msra.mxu0 %v302
    %1526 = vmatpush.msra.mxu0 %v298
    %1527 = vmatpush.msra.mxu0 %v294
    %1528 = vmatpush.msra.mxu0 %v290
    %1529 = vmatpush.msra.mxu0 %v286
    %1530 = vmatpush.msra.mxu0 %v282
    %1531 = vmatpush.msra.mxu0 %v278
    %1532 = vmatpush.msra.mxu0 %v274
    %1533 = vmatpush.msra.mxu0 %v270
    %1534 = vmatpush.msra.mxu0 %v266
    %1535 = vmatpush.msra.mxu0 %v262
    %1536 = vmatpush.msra.mxu0 %v258
    %1537 = vmatpush.msra.mxu0 %v254
    %1538 = vmatpush.msra.mxu0 %v250
    %1539 = vmatmul.f32.gmra.mxu0 %v1350
    %v1540 = vpop.f32.mrf.mxu0
    %v1541 = vadd.f32 %v1521, %v1540
    %1542 = vdwg.mxu0
    %1543 = vmatpush.msra.mxu0 %v247
    %1544 = vmatpush.msra.mxu0 %v243
    %1545 = vmatpush.msra.mxu0 %v239
    %1546 = vmatpush.msra.mxu0 %v235
    %1547 = vmatpush.msra.mxu0 %v231
    %1548 = vmatpush.msra.mxu0 %v227
    %1549 = vmatpush.msra.mxu0 %v223
    %1550 = vmatpush.msra.mxu0 %v219
    %1551 = vmatpush.msra.mxu0 %v215
    %1552 = vmatpush.msra.mxu0 %v211
    %1553 = vmatpush.msra.mxu0 %v207
    %1554 = vmatpush.msra.mxu0 %v203
    %1555 = vmatpush.msra.mxu0 %v199
    %1556 = vmatpush.msra.mxu0 %v195
    %1557 = vmatpush.msra.mxu0 %v191
    %1558 = vmatpush.msra.mxu0 %v187
    %1559 = vmatmul.f32.gmra.mxu0 %v1502
    %v1560 = vpop.f32.mrf.mxu0
    %v1561 = vadd.f32 %v317, %v1560
    %1562 = vdwg.mxu0
    %1563 = vmatpush.msra.mxu0 %v311
    %1564 = vmatpush.msra.mxu0 %v307
    %1565 = vmatpush.msra.mxu0 %v303
    %1566 = vmatpush.msra.mxu0 %v299
    %1567 = vmatpush.msra.mxu0 %v295
    %1568 = vmatpush.msra.mxu0 %v291
    %1569 = vmatpush.msra.mxu0 %v287
    %1570 = vmatpush.msra.mxu0 %v283
    %1571 = vmatpush.msra.mxu0 %v279
    %1572 = vmatpush.msra.mxu0 %v275
    %1573 = vmatpush.msra.mxu0 %v271
    %1574 = vmatpush.msra.mxu0 %v267
    %1575 = vmatpush.msra.mxu0 %v263
    %1576 = vmatpush.msra.mxu0 %v259
    %1577 = vmatpush.msra.mxu0 %v255
    %1578 = vmatpush.msra.mxu0 %v251
    %1579 = vmatmul.f32.gmra.mxu0 %v1350
    %v1580 = vpop.f32.mrf.mxu0
    %v1581 = vadd.f32 %v1561, %v1580
    %1582 = vdwg.mxu0
    %1583 = vmatpush.msra.mxu0 %v248
    %1584 = vmatpush.msra.mxu0 %v244
    %1585 = vmatpush.msra.mxu0 %v240
    %1586 = vmatpush.msra.mxu0 %v236
    %1587 = vmatpush.msra.mxu0 %v232
    %1588 = vmatpush.msra.mxu0 %v228
    %1589 = vmatpush.msra.mxu0 %v224
    %1590 = vmatpush.msra.mxu0 %v220
    %1591 = vmatpush.msra.mxu0 %v216
    %1592 = vmatpush.msra.mxu0 %v212
    %1593 = vmatpush.msra.mxu0 %v208
    %1594 = vmatpush.msra.mxu0 %v204
    %1595 = vmatpush.msra.mxu0 %v200
    %1596 = vmatpush.msra.mxu0 %v196
    %1597 = vmatpush.msra.mxu0 %v192
    %1598 = vmatpush.msra.mxu0 %v188
    %1599 = vmatmul.f32.gmra.mxu0 %v1502
    %v1600 = vpop.f32.mrf.mxu0
    %v1601 = vadd.f32 %v318, %v1600
    %1602 = vdwg.mxu0
    %1603 = vmatpush.msra.mxu0 %v312
    %1604 = vmatpush.msra.mxu0 %v308
    %1605 = vmatpush.msra.mxu0 %v304
    %1606 = vmatpush.msra.mxu0 %v300
    %1607 = vmatpush.msra.mxu0 %v296
    %1608 = vmatpush.msra.mxu0 %v292
    %1609 = vmatpush.msra.mxu0 %v288
    %1610 = vmatpush.msra.mxu0 %v284
    %1611 = vmatpush.msra.mxu0 %v280
    %1612 = vmatpush.msra.mxu0 %v276
    %1613 = vmatpush.msra.mxu0 %v272
    %1614 = vmatpush.msra.mxu0 %v268
    %1615 = vmatpush.msra.mxu0 %v264
    %1616 = vmatpush.msra.mxu0 %v260
    %1617 = vmatpush.msra.mxu0 %v256
    %1618 = vmatpush.msra.mxu0 %v252
    %1619 = vmatmul.f32.gmra.mxu0 %v1350
    %v1620 = vpop.f32.mrf.mxu0
    %v1621 = vadd.f32 %v1601, %v1620
    %1622 = vdwg.mxu0
    %1623 = vmatpush.msra.mxu0 %v249
    %1624 = vmatpush.msra.mxu0 %v245
    %1625 = vmatpush.msra.mxu0 %v241
    %1626 = vmatpush.msra.mxu0 %v237
    %1627 = vmatpush.msra.mxu0 %v233
    %1628 = vmatpush.msra.mxu0 %v229
    %1629 = vmatpush.msra.mxu0 %v225
    %1630 = vmatpush.msra.mxu0 %v221
    %1631 = vmatpush.msra.mxu0 %v217
    %1632 = vmatpush.msra.mxu0 %v213
    %1633 = vmatpush.msra.mxu0 %v209
    %1634 = vmatpush.msra.mxu0 %v205
    %1635 = vmatpush.msra.mxu0 %v201
    %1636 = vmatpush.msra.mxu0 %v197
    %1637 = vmatpush.msra.mxu0 %v193
    %1638 = vmatpush.msra.mxu0 %v189
    %1639 = vmatmul.f32.gmra.mxu0 %v1502
    %v1640 = vpop.f32.mrf.mxu0
    %v1641 = vadd.f32 %v319, %v1640
    %1642 = vdwg.mxu0
    %1643 = vmatpush.msra.mxu0 %v313
    %1644 = vmatpush.msra.mxu0 %v309
    %1645 = vmatpush.msra.mxu0 %v305
    %1646 = vmatpush.msra.mxu0 %v301
    %1647 = vmatpush.msra.mxu0 %v297
    %1648 = vmatpush.msra.mxu0 %v293
    %1649 = vmatpush.msra.mxu0 %v289
    %1650 = vmatpush.msra.mxu0 %v285
    %1651 = vmatpush.msra.mxu0 %v281
    %1652 = vmatpush.msra.mxu0 %v277
    %1653 = vmatpush.msra.mxu0 %v273
    %1654 = vmatpush.msra.mxu0 %v269
    %1655 = vmatpush.msra.mxu0 %v265
    %1656 = vmatpush.msra.mxu0 %v261
    %1657 = vmatpush.msra.mxu0 %v257
    %1658 = vmatpush.msra.mxu0 %v253
    %1659 = vmatmul.f32.gmra.mxu0 %v1350
    %v1660 = vpop.f32.mrf.mxu0
    %v1661 = vadd.f32 %v1641, %v1660
    %1662 = vdwg.mxu0
    %v1663 = vxor.u32 %v1541, 2147483648
    %v1664 = vmul.f32 %v1663, 1.442695
    %v1665 = vpow.pop %v1664
    %v1666 = vadd.f32 %v1665, 1.0
    %v1667 = vrcp.pop %v1666
    %v1668 = vmul.f32 %v1666, %v1667
    %v1669 = vsub.f32 1.0, %v1668
    %v1670 = vmul.f32 %v1667, %v1669
    %v1671 = vadd.f32 %v1667, %v1670
    %vm1672 = vweird.f32 %v1666
    %vm1673 = vweird.f32 %v1667
    %vm1674 = vmor %vm1672, %vm1673
    %v1675 = vsel %vm1674, %v1667, %v1671
    %v1676 = vand.u32 2147483647, %v1666
    %vm1677 = vcmp.eq.f32.partialorder %v1676, 8.507059e+37
    %v1678 = vand.u32 %v1666, 2147483648
    %v1679 = vor.u32 1.1754944e-38, %v1678
    %v1680 = vsel %vm1677, %v1679, %v1675
    %v1681 = vmul.f32 1.0, %v1680
    %v1682 = vxor.u32 %v1581, 2147483648
    %v1683 = vmul.f32 %v1682, 1.442695
    %v1684 = vpow.pop %v1683
    %v1685 = vadd.f32 %v1684, 1.0
    %v1686 = vrcp.pop %v1685
    %v1687 = vmul.f32 %v1685, %v1686
    %v1688 = vsub.f32 1.0, %v1687
    %v1689 = vmul.f32 %v1686, %v1688
    %v1690 = vadd.f32 %v1686, %v1689
    %vm1691 = vweird.f32 %v1685
    %vm1692 = vweird.f32 %v1686
    %vm1693 = vmor %vm1691, %vm1692
    %v1694 = vsel %vm1693, %v1686, %v1690
    %v1695 = vand.u32 2147483647, %v1685
    %vm1696 = vcmp.eq.f32.partialorder %v1695, 8.507059e+37
    %v1697 = vand.u32 %v1685, 2147483648
    %v1698 = vor.u32 1.1754944e-38, %v1697
    %v1699 = vsel %vm1696, %v1698, %v1694
    %v1700 = vmul.f32 1.0, %v1699
    %v1701 = vtanh.pop %v1621
    %v1702 = vxor.u32 %v1661, 2147483648
    %v1703 = vmul.f32 %v1702, 1.442695
    %v1704 = vpow.pop %v1703
    %v1705 = vadd.f32 %v1704, 1.0
    %v1706 = vrcp.pop %v1705
    %v1707 = vmul.f32 %v1705, %v1706
    %v1708 = vsub.f32 1.0, %v1707
    %v1709 = vmul.f32 %v1706, %v1708
    %v1710 = vadd.f32 %v1706, %v1709
    %vm1711 = vweird.f32 %v1705
    %vm1712 = vweird.f32 %v1706
    %vm1713 = vmor %vm1711, %vm1712
    %v1714 = vsel %vm1713, %v1706, %v1710
    %v1715 = vand.u32 2147483647, %v1705
    %vm1716 = vcmp.eq.f32.partialorder %v1715, 8.507059e+37
    %v1717 = vand.u32 %v1705, 2147483648
    %v1718 = vor.u32 1.1754944e-38, %v1717
    %v1719 = vsel %vm1716, %v1718, %v1714
    %v1720 = vmul.f32 1.0, %v1719
    %v1721 = vmul.f32 %v1700, %v1348
    %v1722 = vmul.f32 %v1681, %v1701
    %v1723 = vadd.f32 %v1721, %v1722
    %v1724 = vtanh.pop %v1723
    %v1725 = vmul.f32 %v1720, %v1724
    %s1726 = scalar_lea.vmem [#allocation2], 96
    %v1727 = vld [vmem:[%s1726] sm:$0xff]
    %v1728 = vld [vmem:[%s1726 + $0x8] sm:$0xff]
    %v1729 = vld [vmem:[%s1726 + $0x10] sm:$0xff]
    %v1730 = vld [vmem:[%s1726 + $0x18] sm:$0xff]
    %1731 = vmatpush.msra.mxu0 %v182
    %1732 = vmatpush.msra.mxu0 %v178
    %1733 = vmatpush.msra.mxu0 %v174
    %1734 = vmatpush.msra.mxu0 %v170
    %1735 = vmatpush.msra.mxu0 %v166
    %1736 = vmatpush.msra.mxu0 %v162
    %1737 = vmatpush.msra.mxu0 %v158
    %1738 = vmatpush.msra.mxu0 %v154
    %1739 = vmatpush.msra.mxu0 %v150
    %1740 = vmatpush.msra.mxu0 %v146
    %1741 = vmatpush.msra.mxu0 %v142
    %1742 = vmatpush.msra.mxu0 %v138
    %1743 = vmatpush.msra.mxu0 %v134
    %1744 = vmatpush.msra.mxu0 %v130
    %1745 = vmatpush.msra.mxu0 %v126
    %1746 = vmatpush.msra.mxu0 %v122
    %1747 = vmatmul.f32.gmra.mxu0 %v1502
    %v1748 = vpop.f32.mrf.mxu0
    %v1749 = vadd.f32 0.0, %v1748
    %1750 = vdwg.mxu0
    %1751 = vmatpush.msra.mxu0 %v183
    %1752 = vmatpush.msra.mxu0 %v179
    %1753 = vmatpush.msra.mxu0 %v175
    %1754 = vmatpush.msra.mxu0 %v171
    %1755 = vmatpush.msra.mxu0 %v167
    %1756 = vmatpush.msra.mxu0 %v163
    %1757 = vmatpush.msra.mxu0 %v159
    %1758 = vmatpush.msra.mxu0 %v155
    %1759 = vmatpush.msra.mxu0 %v151
    %1760 = vmatpush.msra.mxu0 %v147
    %1761 = vmatpush.msra.mxu0 %v143
    %1762 = vmatpush.msra.mxu0 %v139
    %1763 = vmatpush.msra.mxu0 %v135
    %1764 = vmatpush.msra.mxu0 %v131
    %1765 = vmatpush.msra.mxu0 %v127
    %1766 = vmatpush.msra.mxu0 %v123
    %1767 = vmatmul.f32.gmra.mxu0 %v1502
    %v1768 = vpop.f32.mrf.mxu0
    %v1769 = vadd.f32 0.0, %v1768
    %1770 = vdwg.mxu0
    %1771 = vmatpush.msra.mxu0 %v184
    %1772 = vmatpush.msra.mxu0 %v180
    %1773 = vmatpush.msra.mxu0 %v176
    %1774 = vmatpush.msra.mxu0 %v172
    %1775 = vmatpush.msra.mxu0 %v168
    %1776 = vmatpush.msra.mxu0 %v164
    %1777 = vmatpush.msra.mxu0 %v160
    %1778 = vmatpush.msra.mxu0 %v156
    %1779 = vmatpush.msra.mxu0 %v152
    %1780 = vmatpush.msra.mxu0 %v148
    %1781 = vmatpush.msra.mxu0 %v144
    %1782 = vmatpush.msra.mxu0 %v140
    %1783 = vmatpush.msra.mxu0 %v136
    %1784 = vmatpush.msra.mxu0 %v132
    %1785 = vmatpush.msra.mxu0 %v128
    %1786 = vmatpush.msra.mxu0 %v124
    %1787 = vmatmul.f32.gmra.mxu0 %v1502
    %v1788 = vpop.f32.mrf.mxu0
    %v1789 = vadd.f32 0.0, %v1788
    %1790 = vdwg.mxu0
    %1791 = vmatpush.msra.mxu0 %v185
    %1792 = vmatpush.msra.mxu0 %v181
    %1793 = vmatpush.msra.mxu0 %v177
    %1794 = vmatpush.msra.mxu0 %v173
    %1795 = vmatpush.msra.mxu0 %v169
    %1796 = vmatpush.msra.mxu0 %v165
    %1797 = vmatpush.msra.mxu0 %v161
    %1798 = vmatpush.msra.mxu0 %v157
    %1799 = vmatpush.msra.mxu0 %v153
    %1800 = vmatpush.msra.mxu0 %v149
    %1801 = vmatpush.msra.mxu0 %v145
    %1802 = vmatpush.msra.mxu0 %v141
    %1803 = vmatpush.msra.mxu0 %v137
    %1804 = vmatpush.msra.mxu0 %v133
    %1805 = vmatpush.msra.mxu0 %v129
    %1806 = vmatpush.msra.mxu0 %v125
    %1807 = vmatmul.f32.gmra.mxu0 %v1502
    %v1808 = vpop.f32.mrf.mxu0
    %v1809 = vadd.f32 0.0, %v1808
    %1810 = vdwg.mxu0
    %v1811 = vadd.f32 %v1727, %v1749
    %v1812 = vadd.f32 %v1728, %v1769
    %v1813 = vadd.f32 %v1729, %v1789
    %v1814 = vadd.f32 %v1730, %v1809
    %v1815 = vxor.u32 %v1811, 2147483648
    %v1816 = vmul.f32 %v1815, 1.442695
    %v1817 = vpow.pop %v1816
    %v1818 = vadd.f32 %v1817, 1.0
    %v1819 = vrcp.pop %v1818
    %v1820 = vmul.f32 %v1818, %v1819
    %v1821 = vsub.f32 1.0, %v1820
    %v1822 = vmul.f32 %v1819, %v1821
    %v1823 = vadd.f32 %v1819, %v1822
    %vm1824 = vweird.f32 %v1818
    %vm1825 = vweird.f32 %v1819
    %vm1826 = vmor %vm1824, %vm1825
    %v1827 = vsel %vm1826, %v1819, %v1823
    %v1828 = vand.u32 2147483647, %v1818
    %vm1829 = vcmp.eq.f32.partialorder %v1828, 8.507059e+37
    %v1830 = vand.u32 %v1818, 2147483648
    %v1831 = vor.u32 1.1754944e-38, %v1830
    %v1832 = vsel %vm1829, %v1831, %v1827
    %v1833 = vmul.f32 1.0, %v1832
    %v1834 = vxor.u32 %v1812, 2147483648
    %v1835 = vmul.f32 %v1834, 1.442695
    %v1836 = vpow.pop %v1835
    %v1837 = vadd.f32 %v1836, 1.0
    %v1838 = vrcp.pop %v1837
    %v1839 = vmul.f32 %v1837, %v1838
    %v1840 = vsub.f32 1.0, %v1839
    %v1841 = vmul.f32 %v1838, %v1840
    %v1842 = vadd.f32 %v1838, %v1841
    %vm1843 = vweird.f32 %v1837
    %vm1844 = vweird.f32 %v1838
    %vm1845 = vmor %vm1843, %vm1844
    %v1846 = vsel %vm1845, %v1838, %v1842
    %v1847 = vand.u32 2147483647, %v1837
    %vm1848 = vcmp.eq.f32.partialorder %v1847, 8.507059e+37
    %v1849 = vand.u32 %v1837, 2147483648
    %v1850 = vor.u32 1.1754944e-38, %v1849
    %v1851 = vsel %vm1848, %v1850, %v1846
    %v1852 = vmul.f32 1.0, %v1851
    %v1853 = vtanh.pop %v1813
    %v1854 = vxor.u32 %v1814, 2147483648
    %v1855 = vmul.f32 %v1854, 1.442695
    %v1856 = vpow.pop %v1855
    %v1857 = vadd.f32 %v1856, 1.0
    %v1858 = vrcp.pop %v1857
    %v1859 = vmul.f32 %v1857, %v1858
    %v1860 = vsub.f32 1.0, %v1859
    %v1861 = vmul.f32 %v1858, %v1860
    %v1862 = vadd.f32 %v1858, %v1861
    %vm1863 = vweird.f32 %v1857
    %vm1864 = vweird.f32 %v1858
    %vm1865 = vmor %vm1863, %vm1864
    %v1866 = vsel %vm1865, %v1858, %v1862
    %v1867 = vand.u32 2147483647, %v1857
    %vm1868 = vcmp.eq.f32.partialorder %v1867, 8.507059e+37
    %v1869 = vand.u32 %v1857, 2147483648
    %v1870 = vor.u32 1.1754944e-38, %v1869
    %v1871 = vsel %vm1868, %v1870, %v1866
    %v1872 = vmul.f32 1.0, %v1871
    %v1873 = vmul.f32 %v1852, %v1500
    %v1874 = vmul.f32 %v1833, %v1853
    %v1875 = vadd.f32 %v1873, %v1874
    %v1876 = vtanh.pop %v1875
    %v1877 = vmul.f32 %v1872, %v1876
    %1878 = vmatpush.msra.mxu0 %v246
    %1879 = vmatpush.msra.mxu0 %v242
    %1880 = vmatpush.msra.mxu0 %v238
    %1881 = vmatpush.msra.mxu0 %v234
    %1882 = vmatpush.msra.mxu0 %v230
    %1883 = vmatpush.msra.mxu0 %v226
    %1884 = vmatpush.msra.mxu0 %v222
    %1885 = vmatpush.msra.mxu0 %v218
    %1886 = vmatpush.msra.mxu0 %v214
    %1887 = vmatpush.msra.mxu0 %v210
    %1888 = vmatpush.msra.mxu0 %v206
    %1889 = vmatpush.msra.mxu0 %v202
    %1890 = vmatpush.msra.mxu0 %v198
    %1891 = vmatpush.msra.mxu0 %v194
    %1892 = vmatpush.msra.mxu0 %v190
    %1893 = vmatpush.msra.mxu0 %v186
    %1894 = vmatmul.f32.gmra.mxu0 %v1877
    %v1895 = vpop.f32.mrf.mxu0
    %v1896 = vadd.f32 %v316, %v1895
    %1897 = vdwg.mxu0
    %1898 = vmatpush.msra.mxu0 %v310
    %1899 = vmatpush.msra.mxu0 %v306
    %1900 = vmatpush.msra.mxu0 %v302
    %1901 = vmatpush.msra.mxu0 %v298
    %1902 = vmatpush.msra.mxu0 %v294
    %1903 = vmatpush.msra.mxu0 %v290
    %1904 = vmatpush.msra.mxu0 %v286
    %1905 = vmatpush.msra.mxu0 %v282
    %1906 = vmatpush.msra.mxu0 %v278
    %1907 = vmatpush.msra.mxu0 %v274
    %1908 = vmatpush.msra.mxu0 %v270
    %1909 = vmatpush.msra.mxu0 %v266
    %1910 = vmatpush.msra.mxu0 %v262
    %1911 = vmatpush.msra.mxu0 %v258
    %1912 = vmatpush.msra.mxu0 %v254
    %1913 = vmatpush.msra.mxu0 %v250
    %1914 = vmatmul.f32.gmra.mxu0 %v1725
    %v1915 = vpop.f32.mrf.mxu0
    %v1916 = vadd.f32 %v1896, %v1915
    %1917 = vdwg.mxu0
    %1918 = vmatpush.msra.mxu0 %v247
    %1919 = vmatpush.msra.mxu0 %v243
    %1920 = vmatpush.msra.mxu0 %v239
    %1921 = vmatpush.msra.mxu0 %v235
    %1922 = vmatpush.msra.mxu0 %v231
    %1923 = vmatpush.msra.mxu0 %v227
    %1924 = vmatpush.msra.mxu0 %v223
    %1925 = vmatpush.msra.mxu0 %v219
    %1926 = vmatpush.msra.mxu0 %v215
    %1927 = vmatpush.msra.mxu0 %v211
    %1928 = vmatpush.msra.mxu0 %v207
    %1929 = vmatpush.msra.mxu0 %v203
    %1930 = vmatpush.msra.mxu0 %v199
    %1931 = vmatpush.msra.mxu0 %v195
    %1932 = vmatpush.msra.mxu0 %v191
    %1933 = vmatpush.msra.mxu0 %v187
    %1934 = vmatmul.f32.gmra.mxu0 %v1877
    %v1935 = vpop.f32.mrf.mxu0
    %v1936 = vadd.f32 %v317, %v1935
    %1937 = vdwg.mxu0
    %1938 = vmatpush.msra.mxu0 %v311
    %1939 = vmatpush.msra.mxu0 %v307
    %1940 = vmatpush.msra.mxu0 %v303
    %1941 = vmatpush.msra.mxu0 %v299
    %1942 = vmatpush.msra.mxu0 %v295
    %1943 = vmatpush.msra.mxu0 %v291
    %1944 = vmatpush.msra.mxu0 %v287
    %1945 = vmatpush.msra.mxu0 %v283
    %1946 = vmatpush.msra.mxu0 %v279
    %1947 = vmatpush.msra.mxu0 %v275
    %1948 = vmatpush.msra.mxu0 %v271
    %1949 = vmatpush.msra.mxu0 %v267
    %1950 = vmatpush.msra.mxu0 %v263
    %1951 = vmatpush.msra.mxu0 %v259
    %1952 = vmatpush.msra.mxu0 %v255
    %1953 = vmatpush.msra.mxu0 %v251
    %1954 = vmatmul.f32.gmra.mxu0 %v1725
    %v1955 = vpop.f32.mrf.mxu0
    %v1956 = vadd.f32 %v1936, %v1955
    %1957 = vdwg.mxu0
    %1958 = vmatpush.msra.mxu0 %v248
    %1959 = vmatpush.msra.mxu0 %v244
    %1960 = vmatpush.msra.mxu0 %v240
    %1961 = vmatpush.msra.mxu0 %v236
    %1962 = vmatpush.msra.mxu0 %v232
    %1963 = vmatpush.msra.mxu0 %v228
    %1964 = vmatpush.msra.mxu0 %v224
    %1965 = vmatpush.msra.mxu0 %v220
    %1966 = vmatpush.msra.mxu0 %v216
    %1967 = vmatpush.msra.mxu0 %v212
    %1968 = vmatpush.msra.mxu0 %v208
    %1969 = vmatpush.msra.mxu0 %v204
    %1970 = vmatpush.msra.mxu0 %v200
    %1971 = vmatpush.msra.mxu0 %v196
    %1972 = vmatpush.msra.mxu0 %v192
    %1973 = vmatpush.msra.mxu0 %v188
    %1974 = vmatmul.f32.gmra.mxu0 %v1877
    %v1975 = vpop.f32.mrf.mxu0
    %v1976 = vadd.f32 %v318, %v1975
    %1977 = vdwg.mxu0
    %1978 = vmatpush.msra.mxu0 %v312
    %1979 = vmatpush.msra.mxu0 %v308
    %1980 = vmatpush.msra.mxu0 %v304
    %1981 = vmatpush.msra.mxu0 %v300
    %1982 = vmatpush.msra.mxu0 %v296
    %1983 = vmatpush.msra.mxu0 %v292
    %1984 = vmatpush.msra.mxu0 %v288
    %1985 = vmatpush.msra.mxu0 %v284
    %1986 = vmatpush.msra.mxu0 %v280
    %1987 = vmatpush.msra.mxu0 %v276
    %1988 = vmatpush.msra.mxu0 %v272
    %1989 = vmatpush.msra.mxu0 %v268
    %1990 = vmatpush.msra.mxu0 %v264
    %1991 = vmatpush.msra.mxu0 %v260
    %1992 = vmatpush.msra.mxu0 %v256
    %1993 = vmatpush.msra.mxu0 %v252
    %1994 = vmatmul.f32.gmra.mxu0 %v1725
    %v1995 = vpop.f32.mrf.mxu0
    %v1996 = vadd.f32 %v1976, %v1995
    %1997 = vdwg.mxu0
    %1998 = vmatpush.msra.mxu0 %v249
    %1999 = vmatpush.msra.mxu0 %v245
    %2000 = vmatpush.msra.mxu0 %v241
    %2001 = vmatpush.msra.mxu0 %v237
    %2002 = vmatpush.msra.mxu0 %v233
    %2003 = vmatpush.msra.mxu0 %v229
    %2004 = vmatpush.msra.mxu0 %v225
    %2005 = vmatpush.msra.mxu0 %v221
    %2006 = vmatpush.msra.mxu0 %v217
    %2007 = vmatpush.msra.mxu0 %v213
    %2008 = vmatpush.msra.mxu0 %v209
    %2009 = vmatpush.msra.mxu0 %v205
    %2010 = vmatpush.msra.mxu0 %v201
    %2011 = vmatpush.msra.mxu0 %v197
    %2012 = vmatpush.msra.mxu0 %v193
    %2013 = vmatpush.msra.mxu0 %v189
    %2014 = vmatmul.f32.gmra.mxu0 %v1877
    %v2015 = vpop.f32.mrf.mxu0
    %v2016 = vadd.f32 %v319, %v2015
    %2017 = vdwg.mxu0
    %2018 = vmatpush.msra.mxu0 %v313
    %2019 = vmatpush.msra.mxu0 %v309
    %2020 = vmatpush.msra.mxu0 %v305
    %2021 = vmatpush.msra.mxu0 %v301
    %2022 = vmatpush.msra.mxu0 %v297
    %2023 = vmatpush.msra.mxu0 %v293
    %2024 = vmatpush.msra.mxu0 %v289
    %2025 = vmatpush.msra.mxu0 %v285
    %2026 = vmatpush.msra.mxu0 %v281
    %2027 = vmatpush.msra.mxu0 %v277
    %2028 = vmatpush.msra.mxu0 %v273
    %2029 = vmatpush.msra.mxu0 %v269
    %2030 = vmatpush.msra.mxu0 %v265
    %2031 = vmatpush.msra.mxu0 %v261
    %2032 = vmatpush.msra.mxu0 %v257
    %2033 = vmatpush.msra.mxu0 %v253
    %2034 = vmatmul.f32.gmra.mxu0 %v1725
    %v2035 = vpop.f32.mrf.mxu0
    %v2036 = vadd.f32 %v2016, %v2035
    %2037 = vdwg.mxu0
    %v2038 = vxor.u32 %v1916, 2147483648
    %v2039 = vmul.f32 %v2038, 1.442695
    %v2040 = vpow.pop %v2039
    %v2041 = vadd.f32 %v2040, 1.0
    %v2042 = vrcp.pop %v2041
    %v2043 = vmul.f32 %v2041, %v2042
    %v2044 = vsub.f32 1.0, %v2043
    %v2045 = vmul.f32 %v2042, %v2044
    %v2046 = vadd.f32 %v2042, %v2045
    %vm2047 = vweird.f32 %v2041
    %vm2048 = vweird.f32 %v2042
    %vm2049 = vmor %vm2047, %vm2048
    %v2050 = vsel %vm2049, %v2042, %v2046
    %v2051 = vand.u32 2147483647, %v2041
    %vm2052 = vcmp.eq.f32.partialorder %v2051, 8.507059e+37
    %v2053 = vand.u32 %v2041, 2147483648
    %v2054 = vor.u32 1.1754944e-38, %v2053
    %v2055 = vsel %vm2052, %v2054, %v2050
    %v2056 = vmul.f32 1.0, %v2055
    %v2057 = vxor.u32 %v1956, 2147483648
    %v2058 = vmul.f32 %v2057, 1.442695
    %v2059 = vpow.pop %v2058
    %v2060 = vadd.f32 %v2059, 1.0
    %v2061 = vrcp.pop %v2060
    %v2062 = vmul.f32 %v2060, %v2061
    %v2063 = vsub.f32 1.0, %v2062
    %v2064 = vmul.f32 %v2061, %v2063
    %v2065 = vadd.f32 %v2061, %v2064
    %vm2066 = vweird.f32 %v2060
    %vm2067 = vweird.f32 %v2061
    %vm2068 = vmor %vm2066, %vm2067
    %v2069 = vsel %vm2068, %v2061, %v2065
    %v2070 = vand.u32 2147483647, %v2060
    %vm2071 = vcmp.eq.f32.partialorder %v2070, 8.507059e+37
    %v2072 = vand.u32 %v2060, 2147483648
    %v2073 = vor.u32 1.1754944e-38, %v2072
    %v2074 = vsel %vm2071, %v2073, %v2069
    %v2075 = vmul.f32 1.0, %v2074
    %v2076 = vtanh.pop %v1996
    %v2077 = vxor.u32 %v2036, 2147483648
    %v2078 = vmul.f32 %v2077, 1.442695
    %v2079 = vpow.pop %v2078
    %v2080 = vadd.f32 %v2079, 1.0
    %v2081 = vrcp.pop %v2080
    %v2082 = vmul.f32 %v2080, %v2081
    %v2083 = vsub.f32 1.0, %v2082
    %v2084 = vmul.f32 %v2081, %v2083
    %v2085 = vadd.f32 %v2081, %v2084
    %vm2086 = vweird.f32 %v2080
    %vm2087 = vweird.f32 %v2081
    %vm2088 = vmor %vm2086, %vm2087
    %v2089 = vsel %vm2088, %v2081, %v2085
    %v2090 = vand.u32 2147483647, %v2080
    %vm2091 = vcmp.eq.f32.partialorder %v2090, 8.507059e+37
    %v2092 = vand.u32 %v2080, 2147483648
    %v2093 = vor.u32 1.1754944e-38, %v2092
    %v2094 = vsel %vm2091, %v2093, %v2089
    %v2095 = vmul.f32 1.0, %v2094
    %v2096 = vmul.f32 %v2075, %v1723
    %v2097 = vmul.f32 %v2056, %v2076
    %v2098 = vadd.f32 %v2096, %v2097
    %v2099 = vtanh.pop %v2098
    %v2100 = vmul.f32 %v2095, %v2099
    %s2101 = scalar_lea.vmem [#allocation2], 128
    %v2102 = vld [vmem:[%s2101] sm:$0xff]
    %v2103 = vld [vmem:[%s2101 + $0x8] sm:$0xff]
    %v2104 = vld [vmem:[%s2101 + $0x10] sm:$0xff]
    %v2105 = vld [vmem:[%s2101 + $0x18] sm:$0xff]
    %2106 = vmatpush.msra.mxu0 %v182
    %2107 = vmatpush.msra.mxu0 %v178
    %2108 = vmatpush.msra.mxu0 %v174
    %2109 = vmatpush.msra.mxu0 %v170
    %2110 = vmatpush.msra.mxu0 %v166
    %2111 = vmatpush.msra.mxu0 %v162
    %2112 = vmatpush.msra.mxu0 %v158
    %2113 = vmatpush.msra.mxu0 %v154
    %2114 = vmatpush.msra.mxu0 %v150
    %2115 = vmatpush.msra.mxu0 %v146
    %2116 = vmatpush.msra.mxu0 %v142
    %2117 = vmatpush.msra.mxu0 %v138
    %2118 = vmatpush.msra.mxu0 %v134
    %2119 = vmatpush.msra.mxu0 %v130
    %2120 = vmatpush.msra.mxu0 %v126
    %2121 = vmatpush.msra.mxu0 %v122
    %2122 = vmatmul.f32.gmra.mxu0 %v1877
    %v2123 = vpop.f32.mrf.mxu0
    %v2124 = vadd.f32 0.0, %v2123
    %2125 = vdwg.mxu0
    %2126 = vmatpush.msra.mxu0 %v183
    %2127 = vmatpush.msra.mxu0 %v179
    %2128 = vmatpush.msra.mxu0 %v175
    %2129 = vmatpush.msra.mxu0 %v171
    %2130 = vmatpush.msra.mxu0 %v167
    %2131 = vmatpush.msra.mxu0 %v163
    %2132 = vmatpush.msra.mxu0 %v159
    %2133 = vmatpush.msra.mxu0 %v155
    %2134 = vmatpush.msra.mxu0 %v151
    %2135 = vmatpush.msra.mxu0 %v147
    %2136 = vmatpush.msra.mxu0 %v143
    %2137 = vmatpush.msra.mxu0 %v139
    %2138 = vmatpush.msra.mxu0 %v135
    %2139 = vmatpush.msra.mxu0 %v131
    %2140 = vmatpush.msra.mxu0 %v127
    %2141 = vmatpush.msra.mxu0 %v123
    %2142 = vmatmul.f32.gmra.mxu0 %v1877
    %v2143 = vpop.f32.mrf.mxu0
    %v2144 = vadd.f32 0.0, %v2143
    %2145 = vdwg.mxu0
    %2146 = vmatpush.msra.mxu0 %v184
    %2147 = vmatpush.msra.mxu0 %v180
    %2148 = vmatpush.msra.mxu0 %v176
    %2149 = vmatpush.msra.mxu0 %v172
    %2150 = vmatpush.msra.mxu0 %v168
    %2151 = vmatpush.msra.mxu0 %v164
    %2152 = vmatpush.msra.mxu0 %v160
    %2153 = vmatpush.msra.mxu0 %v156
    %2154 = vmatpush.msra.mxu0 %v152
    %2155 = vmatpush.msra.mxu0 %v148
    %2156 = vmatpush.msra.mxu0 %v144
    %2157 = vmatpush.msra.mxu0 %v140
    %2158 = vmatpush.msra.mxu0 %v136
    %2159 = vmatpush.msra.mxu0 %v132
    %2160 = vmatpush.msra.mxu0 %v128
    %2161 = vmatpush.msra.mxu0 %v124
    %2162 = vmatmul.f32.gmra.mxu0 %v1877
    %v2163 = vpop.f32.mrf.mxu0
    %v2164 = vadd.f32 0.0, %v2163
    %2165 = vdwg.mxu0
    %2166 = vmatpush.msra.mxu0 %v185
    %2167 = vmatpush.msra.mxu0 %v181
    %2168 = vmatpush.msra.mxu0 %v177
    %2169 = vmatpush.msra.mxu0 %v173
    %2170 = vmatpush.msra.mxu0 %v169
    %2171 = vmatpush.msra.mxu0 %v165
    %2172 = vmatpush.msra.mxu0 %v161
    %2173 = vmatpush.msra.mxu0 %v157
    %2174 = vmatpush.msra.mxu0 %v153
    %2175 = vmatpush.msra.mxu0 %v149
    %2176 = vmatpush.msra.mxu0 %v145
    %2177 = vmatpush.msra.mxu0 %v141
    %2178 = vmatpush.msra.mxu0 %v137
    %2179 = vmatpush.msra.mxu0 %v133
    %2180 = vmatpush.msra.mxu0 %v129
    %2181 = vmatpush.msra.mxu0 %v125
    %2182 = vmatmul.f32.gmra.mxu0 %v1877
    %v2183 = vpop.f32.mrf.mxu0
    %v2184 = vadd.f32 0.0, %v2183
    %2185 = vdwg.mxu0
    %v2186 = vadd.f32 %v2102, %v2124
    %v2187 = vadd.f32 %v2103, %v2144
    %v2188 = vadd.f32 %v2104, %v2164
    %v2189 = vadd.f32 %v2105, %v2184
    %v2190 = vxor.u32 %v2186, 2147483648
    %v2191 = vmul.f32 %v2190, 1.442695
    %v2192 = vpow.pop %v2191
    %v2193 = vadd.f32 %v2192, 1.0
    %v2194 = vrcp.pop %v2193
    %v2195 = vmul.f32 %v2193, %v2194
    %v2196 = vsub.f32 1.0, %v2195
    %v2197 = vmul.f32 %v2194, %v2196
    %v2198 = vadd.f32 %v2194, %v2197
    %vm2199 = vweird.f32 %v2193
    %vm2200 = vweird.f32 %v2194
    %vm2201 = vmor %vm2199, %vm2200
    %v2202 = vsel %vm2201, %v2194, %v2198
    %v2203 = vand.u32 2147483647, %v2193
    %vm2204 = vcmp.eq.f32.partialorder %v2203, 8.507059e+37
    %v2205 = vand.u32 %v2193, 2147483648
    %v2206 = vor.u32 1.1754944e-38, %v2205
    %v2207 = vsel %vm2204, %v2206, %v2202
    %v2208 = vmul.f32 1.0, %v2207
    %v2209 = vxor.u32 %v2187, 2147483648
    %v2210 = vmul.f32 %v2209, 1.442695
    %v2211 = vpow.pop %v2210
    %v2212 = vadd.f32 %v2211, 1.0
    %v2213 = vrcp.pop %v2212
    %v2214 = vmul.f32 %v2212, %v2213
    %v2215 = vsub.f32 1.0, %v2214
    %v2216 = vmul.f32 %v2213, %v2215
    %v2217 = vadd.f32 %v2213, %v2216
    %vm2218 = vweird.f32 %v2212
    %vm2219 = vweird.f32 %v2213
    %vm2220 = vmor %vm2218, %vm2219
    %v2221 = vsel %vm2220, %v2213, %v2217
    %v2222 = vand.u32 2147483647, %v2212
    %vm2223 = vcmp.eq.f32.partialorder %v2222, 8.507059e+37
    %v2224 = vand.u32 %v2212, 2147483648
    %v2225 = vor.u32 1.1754944e-38, %v2224
    %v2226 = vsel %vm2223, %v2225, %v2221
    %v2227 = vmul.f32 1.0, %v2226
    %v2228 = vtanh.pop %v2188
    %v2229 = vxor.u32 %v2189, 2147483648
    %v2230 = vmul.f32 %v2229, 1.442695
    %v2231 = vpow.pop %v2230
    %v2232 = vadd.f32 %v2231, 1.0
    %v2233 = vrcp.pop %v2232
    %v2234 = vmul.f32 %v2232, %v2233
    %v2235 = vsub.f32 1.0, %v2234
    %v2236 = vmul.f32 %v2233, %v2235
    %v2237 = vadd.f32 %v2233, %v2236
    %vm2238 = vweird.f32 %v2232
    %vm2239 = vweird.f32 %v2233
    %vm2240 = vmor %vm2238, %vm2239
    %v2241 = vsel %vm2240, %v2233, %v2237
    %v2242 = vand.u32 2147483647, %v2232
    %vm2243 = vcmp.eq.f32.partialorder %v2242, 8.507059e+37
    %v2244 = vand.u32 %v2232, 2147483648
    %v2245 = vor.u32 1.1754944e-38, %v2244
    %v2246 = vsel %vm2243, %v2245, %v2241
    %v2247 = vmul.f32 1.0, %v2246
    %v2248 = vmul.f32 %v2227, %v1875
    %v2249 = vmul.f32 %v2208, %v2228
    %v2250 = vadd.f32 %v2248, %v2249
    %v2251 = vtanh.pop %v2250
    %v2252 = vmul.f32 %v2247, %v2251
    %2253 = vmatpush.msra.mxu0 %v246
    %2254 = vmatpush.msra.mxu0 %v242
    %2255 = vmatpush.msra.mxu0 %v238
    %2256 = vmatpush.msra.mxu0 %v234
    %2257 = vmatpush.msra.mxu0 %v230
    %2258 = vmatpush.msra.mxu0 %v226
    %2259 = vmatpush.msra.mxu0 %v222
    %2260 = vmatpush.msra.mxu0 %v218
    %2261 = vmatpush.msra.mxu0 %v214
    %2262 = vmatpush.msra.mxu0 %v210
    %2263 = vmatpush.msra.mxu0 %v206
    %2264 = vmatpush.msra.mxu0 %v202
    %2265 = vmatpush.msra.mxu0 %v198
    %2266 = vmatpush.msra.mxu0 %v194
    %2267 = vmatpush.msra.mxu0 %v190
    %2268 = vmatpush.msra.mxu0 %v186
    %2269 = vmatmul.f32.gmra.mxu0 %v2252
    %v2270 = vpop.f32.mrf.mxu0
    %v2271 = vadd.f32 %v316, %v2270
    %2272 = vdwg.mxu0
    %2273 = vmatpush.msra.mxu0 %v310
    %2274 = vmatpush.msra.mxu0 %v306
    %2275 = vmatpush.msra.mxu0 %v302
    %2276 = vmatpush.msra.mxu0 %v298
    %2277 = vmatpush.msra.mxu0 %v294
    %2278 = vmatpush.msra.mxu0 %v290
    %2279 = vmatpush.msra.mxu0 %v286
    %2280 = vmatpush.msra.mxu0 %v282
    %2281 = vmatpush.msra.mxu0 %v278
    %2282 = vmatpush.msra.mxu0 %v274
    %2283 = vmatpush.msra.mxu0 %v270
    %2284 = vmatpush.msra.mxu0 %v266
    %2285 = vmatpush.msra.mxu0 %v262
    %2286 = vmatpush.msra.mxu0 %v258
    %2287 = vmatpush.msra.mxu0 %v254
    %2288 = vmatpush.msra.mxu0 %v250
    %2289 = vmatmul.f32.gmra.mxu0 %v2100
    %v2290 = vpop.f32.mrf.mxu0
    %v2291 = vadd.f32 %v2271, %v2290
    %2292 = vdwg.mxu0
    %2293 = vmatpush.msra.mxu0 %v247
    %2294 = vmatpush.msra.mxu0 %v243
    %2295 = vmatpush.msra.mxu0 %v239
    %2296 = vmatpush.msra.mxu0 %v235
    %2297 = vmatpush.msra.mxu0 %v231
    %2298 = vmatpush.msra.mxu0 %v227
    %2299 = vmatpush.msra.mxu0 %v223
    %2300 = vmatpush.msra.mxu0 %v219
    %2301 = vmatpush.msra.mxu0 %v215
    %2302 = vmatpush.msra.mxu0 %v211
    %2303 = vmatpush.msra.mxu0 %v207
    %2304 = vmatpush.msra.mxu0 %v203
    %2305 = vmatpush.msra.mxu0 %v199
    %2306 = vmatpush.msra.mxu0 %v195
    %2307 = vmatpush.msra.mxu0 %v191
    %2308 = vmatpush.msra.mxu0 %v187
    %2309 = vmatmul.f32.gmra.mxu0 %v2252
    %v2310 = vpop.f32.mrf.mxu0
    %v2311 = vadd.f32 %v317, %v2310
    %2312 = vdwg.mxu0
    %2313 = vmatpush.msra.mxu0 %v311
    %2314 = vmatpush.msra.mxu0 %v307
    %2315 = vmatpush.msra.mxu0 %v303
    %2316 = vmatpush.msra.mxu0 %v299
    %2317 = vmatpush.msra.mxu0 %v295
    %2318 = vmatpush.msra.mxu0 %v291
    %2319 = vmatpush.msra.mxu0 %v287
    %2320 = vmatpush.msra.mxu0 %v283
    %2321 = vmatpush.msra.mxu0 %v279
    %2322 = vmatpush.msra.mxu0 %v275
    %2323 = vmatpush.msra.mxu0 %v271
    %2324 = vmatpush.msra.mxu0 %v267
    %2325 = vmatpush.msra.mxu0 %v263
    %2326 = vmatpush.msra.mxu0 %v259
    %2327 = vmatpush.msra.mxu0 %v255
    %2328 = vmatpush.msra.mxu0 %v251
    %2329 = vmatmul.f32.gmra.mxu0 %v2100
    %v2330 = vpop.f32.mrf.mxu0
    %v2331 = vadd.f32 %v2311, %v2330
    %2332 = vdwg.mxu0
    %2333 = vmatpush.msra.mxu0 %v248
    %2334 = vmatpush.msra.mxu0 %v244
    %2335 = vmatpush.msra.mxu0 %v240
    %2336 = vmatpush.msra.mxu0 %v236
    %2337 = vmatpush.msra.mxu0 %v232
    %2338 = vmatpush.msra.mxu0 %v228
    %2339 = vmatpush.msra.mxu0 %v224
    %2340 = vmatpush.msra.mxu0 %v220
    %2341 = vmatpush.msra.mxu0 %v216
    %2342 = vmatpush.msra.mxu0 %v212
    %2343 = vmatpush.msra.mxu0 %v208
    %2344 = vmatpush.msra.mxu0 %v204
    %2345 = vmatpush.msra.mxu0 %v200
    %2346 = vmatpush.msra.mxu0 %v196
    %2347 = vmatpush.msra.mxu0 %v192
    %2348 = vmatpush.msra.mxu0 %v188
    %2349 = vmatmul.f32.gmra.mxu0 %v2252
    %v2350 = vpop.f32.mrf.mxu0
    %v2351 = vadd.f32 %v318, %v2350
    %2352 = vdwg.mxu0
    %2353 = vmatpush.msra.mxu0 %v312
    %2354 = vmatpush.msra.mxu0 %v308
    %2355 = vmatpush.msra.mxu0 %v304
    %2356 = vmatpush.msra.mxu0 %v300
    %2357 = vmatpush.msra.mxu0 %v296
    %2358 = vmatpush.msra.mxu0 %v292
    %2359 = vmatpush.msra.mxu0 %v288
    %2360 = vmatpush.msra.mxu0 %v284
    %2361 = vmatpush.msra.mxu0 %v280
    %2362 = vmatpush.msra.mxu0 %v276
    %2363 = vmatpush.msra.mxu0 %v272
    %2364 = vmatpush.msra.mxu0 %v268
    %2365 = vmatpush.msra.mxu0 %v264
    %2366 = vmatpush.msra.mxu0 %v260
    %2367 = vmatpush.msra.mxu0 %v256
    %2368 = vmatpush.msra.mxu0 %v252
    %2369 = vmatmul.f32.gmra.mxu0 %v2100
    %v2370 = vpop.f32.mrf.mxu0
    %v2371 = vadd.f32 %v2351, %v2370
    %2372 = vdwg.mxu0
    %2373 = vmatpush.msra.mxu0 %v249
    %2374 = vmatpush.msra.mxu0 %v245
    %2375 = vmatpush.msra.mxu0 %v241
    %2376 = vmatpush.msra.mxu0 %v237
    %2377 = vmatpush.msra.mxu0 %v233
    %2378 = vmatpush.msra.mxu0 %v229
    %2379 = vmatpush.msra.mxu0 %v225
    %2380 = vmatpush.msra.mxu0 %v221
    %2381 = vmatpush.msra.mxu0 %v217
    %2382 = vmatpush.msra.mxu0 %v213
    %2383 = vmatpush.msra.mxu0 %v209
    %2384 = vmatpush.msra.mxu0 %v205
    %2385 = vmatpush.msra.mxu0 %v201
    %2386 = vmatpush.msra.mxu0 %v197
    %2387 = vmatpush.msra.mxu0 %v193
    %2388 = vmatpush.msra.mxu0 %v189
    %2389 = vmatmul.f32.gmra.mxu0 %v2252
    %v2390 = vpop.f32.mrf.mxu0
    %v2391 = vadd.f32 %v319, %v2390
    %2392 = vdwg.mxu0
    %2393 = vmatpush.msra.mxu0 %v313
    %2394 = vmatpush.msra.mxu0 %v309
    %2395 = vmatpush.msra.mxu0 %v305
    %2396 = vmatpush.msra.mxu0 %v301
    %2397 = vmatpush.msra.mxu0 %v297
    %2398 = vmatpush.msra.mxu0 %v293
    %2399 = vmatpush.msra.mxu0 %v289
    %2400 = vmatpush.msra.mxu0 %v285
    %2401 = vmatpush.msra.mxu0 %v281
    %2402 = vmatpush.msra.mxu0 %v277
    %2403 = vmatpush.msra.mxu0 %v273
    %2404 = vmatpush.msra.mxu0 %v269
    %2405 = vmatpush.msra.mxu0 %v265
    %2406 = vmatpush.msra.mxu0 %v261
    %2407 = vmatpush.msra.mxu0 %v257
    %2408 = vmatpush.msra.mxu0 %v253
    %2409 = vmatmul.f32.gmra.mxu0 %v2100
    %v2410 = vpop.f32.mrf.mxu0
    %v2411 = vadd.f32 %v2391, %v2410
    %2412 = vdwg.mxu0
    %v2413 = vxor.u32 %v2291, 2147483648
    %v2414 = vmul.f32 %v2413, 1.442695
    %v2415 = vpow.pop %v2414
    %v2416 = vadd.f32 %v2415, 1.0
    %v2417 = vrcp.pop %v2416
    %v2418 = vmul.f32 %v2416, %v2417
    %v2419 = vsub.f32 1.0, %v2418
    %v2420 = vmul.f32 %v2417, %v2419
    %v2421 = vadd.f32 %v2417, %v2420
    %vm2422 = vweird.f32 %v2416
    %vm2423 = vweird.f32 %v2417
    %vm2424 = vmor %vm2422, %vm2423
    %v2425 = vsel %vm2424, %v2417, %v2421
    %v2426 = vand.u32 2147483647, %v2416
    %vm2427 = vcmp.eq.f32.partialorder %v2426, 8.507059e+37
    %v2428 = vand.u32 %v2416, 2147483648
    %v2429 = vor.u32 1.1754944e-38, %v2428
    %v2430 = vsel %vm2427, %v2429, %v2425
    %v2431 = vmul.f32 1.0, %v2430
    %v2432 = vxor.u32 %v2331, 2147483648
    %v2433 = vmul.f32 %v2432, 1.442695
    %v2434 = vpow.pop %v2433
    %v2435 = vadd.f32 %v2434, 1.0
    %v2436 = vrcp.pop %v2435
    %v2437 = vmul.f32 %v2435, %v2436
    %v2438 = vsub.f32 1.0, %v2437
    %v2439 = vmul.f32 %v2436, %v2438
    %v2440 = vadd.f32 %v2436, %v2439
    %vm2441 = vweird.f32 %v2435
    %vm2442 = vweird.f32 %v2436
    %vm2443 = vmor %vm2441, %vm2442
    %v2444 = vsel %vm2443, %v2436, %v2440
    %v2445 = vand.u32 2147483647, %v2435
    %vm2446 = vcmp.eq.f32.partialorder %v2445, 8.507059e+37
    %v2447 = vand.u32 %v2435, 2147483648
    %v2448 = vor.u32 1.1754944e-38, %v2447
    %v2449 = vsel %vm2446, %v2448, %v2444
    %v2450 = vmul.f32 1.0, %v2449
    %v2451 = vtanh.pop %v2371
    %v2452 = vxor.u32 %v2411, 2147483648
    %v2453 = vmul.f32 %v2452, 1.442695
    %v2454 = vpow.pop %v2453
    %v2455 = vadd.f32 %v2454, 1.0
    %v2456 = vrcp.pop %v2455
    %v2457 = vmul.f32 %v2455, %v2456
    %v2458 = vsub.f32 1.0, %v2457
    %v2459 = vmul.f32 %v2456, %v2458
    %v2460 = vadd.f32 %v2456, %v2459
    %vm2461 = vweird.f32 %v2455
    %vm2462 = vweird.f32 %v2456
    %vm2463 = vmor %vm2461, %vm2462
    %v2464 = vsel %vm2463, %v2456, %v2460
    %v2465 = vand.u32 2147483647, %v2455
    %vm2466 = vcmp.eq.f32.partialorder %v2465, 8.507059e+37
    %v2467 = vand.u32 %v2455, 2147483648
    %v2468 = vor.u32 1.1754944e-38, %v2467
    %v2469 = vsel %vm2466, %v2468, %v2464
    %v2470 = vmul.f32 1.0, %v2469
    %v2471 = vmul.f32 %v2450, %v2098
    %v2472 = vmul.f32 %v2431, %v2451
    %v2473 = vadd.f32 %v2471, %v2472
    %v2474 = vtanh.pop %v2473
    %v2475 = vmul.f32 %v2470, %v2474
    %s2476 = scalar_lea.vmem [#allocation2], 160
    %v2477 = vld [vmem:[%s2476] sm:$0xff]
    %v2478 = vld [vmem:[%s2476 + $0x8] sm:$0xff]
    %v2479 = vld [vmem:[%s2476 + $0x10] sm:$0xff]
    %v2480 = vld [vmem:[%s2476 + $0x18] sm:$0xff]
    %2481 = vmatpush.msra.mxu0 %v182
    %2482 = vmatpush.msra.mxu0 %v178
    %2483 = vmatpush.msra.mxu0 %v174
    %2484 = vmatpush.msra.mxu0 %v170
    %2485 = vmatpush.msra.mxu0 %v166
    %2486 = vmatpush.msra.mxu0 %v162
    %2487 = vmatpush.msra.mxu0 %v158
    %2488 = vmatpush.msra.mxu0 %v154
    %2489 = vmatpush.msra.mxu0 %v150
    %2490 = vmatpush.msra.mxu0 %v146
    %2491 = vmatpush.msra.mxu0 %v142
    %2492 = vmatpush.msra.mxu0 %v138
    %2493 = vmatpush.msra.mxu0 %v134
    %2494 = vmatpush.msra.mxu0 %v130
    %2495 = vmatpush.msra.mxu0 %v126
    %2496 = vmatpush.msra.mxu0 %v122
    %2497 = vmatmul.f32.gmra.mxu0 %v2252
    %v2498 = vpop.f32.mrf.mxu0
    %v2499 = vadd.f32 0.0, %v2498
    %2500 = vdwg.mxu0
    %2501 = vmatpush.msra.mxu0 %v183
    %2502 = vmatpush.msra.mxu0 %v179
    %2503 = vmatpush.msra.mxu0 %v175
    %2504 = vmatpush.msra.mxu0 %v171
    %2505 = vmatpush.msra.mxu0 %v167
    %2506 = vmatpush.msra.mxu0 %v163
    %2507 = vmatpush.msra.mxu0 %v159
    %2508 = vmatpush.msra.mxu0 %v155
    %2509 = vmatpush.msra.mxu0 %v151
    %2510 = vmatpush.msra.mxu0 %v147
    %2511 = vmatpush.msra.mxu0 %v143
    %2512 = vmatpush.msra.mxu0 %v139
    %2513 = vmatpush.msra.mxu0 %v135
    %2514 = vmatpush.msra.mxu0 %v131
    %2515 = vmatpush.msra.mxu0 %v127
    %2516 = vmatpush.msra.mxu0 %v123
    %2517 = vmatmul.f32.gmra.mxu0 %v2252
    %v2518 = vpop.f32.mrf.mxu0
    %v2519 = vadd.f32 0.0, %v2518
    %2520 = vdwg.mxu0
    %2521 = vmatpush.msra.mxu0 %v184
    %2522 = vmatpush.msra.mxu0 %v180
    %2523 = vmatpush.msra.mxu0 %v176
    %2524 = vmatpush.msra.mxu0 %v172
    %2525 = vmatpush.msra.mxu0 %v168
    %2526 = vmatpush.msra.mxu0 %v164
    %2527 = vmatpush.msra.mxu0 %v160
    %2528 = vmatpush.msra.mxu0 %v156
    %2529 = vmatpush.msra.mxu0 %v152
    %2530 = vmatpush.msra.mxu0 %v148
    %2531 = vmatpush.msra.mxu0 %v144
    %2532 = vmatpush.msra.mxu0 %v140
    %2533 = vmatpush.msra.mxu0 %v136
    %2534 = vmatpush.msra.mxu0 %v132
    %2535 = vmatpush.msra.mxu0 %v128
    %2536 = vmatpush.msra.mxu0 %v124
    %2537 = vmatmul.f32.gmra.mxu0 %v2252
    %v2538 = vpop.f32.mrf.mxu0
    %v2539 = vadd.f32 0.0, %v2538
    %2540 = vdwg.mxu0
    %2541 = vmatpush.msra.mxu0 %v185
    %2542 = vmatpush.msra.mxu0 %v181
    %2543 = vmatpush.msra.mxu0 %v177
    %2544 = vmatpush.msra.mxu0 %v173
    %2545 = vmatpush.msra.mxu0 %v169
    %2546 = vmatpush.msra.mxu0 %v165
    %2547 = vmatpush.msra.mxu0 %v161
    %2548 = vmatpush.msra.mxu0 %v157
    %2549 = vmatpush.msra.mxu0 %v153
    %2550 = vmatpush.msra.mxu0 %v149
    %2551 = vmatpush.msra.mxu0 %v145
    %2552 = vmatpush.msra.mxu0 %v141
    %2553 = vmatpush.msra.mxu0 %v137
    %2554 = vmatpush.msra.mxu0 %v133
    %2555 = vmatpush.msra.mxu0 %v129
    %2556 = vmatpush.msra.mxu0 %v125
    %2557 = vmatmul.f32.gmra.mxu0 %v2252
    %v2558 = vpop.f32.mrf.mxu0
    %v2559 = vadd.f32 0.0, %v2558
    %2560 = vdwg.mxu0
    %v2561 = vadd.f32 %v2477, %v2499
    %v2562 = vadd.f32 %v2478, %v2519
    %v2563 = vadd.f32 %v2479, %v2539
    %v2564 = vadd.f32 %v2480, %v2559
    %v2565 = vxor.u32 %v2561, 2147483648
    %v2566 = vmul.f32 %v2565, 1.442695
    %v2567 = vpow.pop %v2566
    %v2568 = vadd.f32 %v2567, 1.0
    %v2569 = vrcp.pop %v2568
    %v2570 = vmul.f32 %v2568, %v2569
    %v2571 = vsub.f32 1.0, %v2570
    %v2572 = vmul.f32 %v2569, %v2571
    %v2573 = vadd.f32 %v2569, %v2572
    %vm2574 = vweird.f32 %v2568
    %vm2575 = vweird.f32 %v2569
    %vm2576 = vmor %vm2574, %vm2575
    %v2577 = vsel %vm2576, %v2569, %v2573
    %v2578 = vand.u32 2147483647, %v2568
    %vm2579 = vcmp.eq.f32.partialorder %v2578, 8.507059e+37
    %v2580 = vand.u32 %v2568, 2147483648
    %v2581 = vor.u32 1.1754944e-38, %v2580
    %v2582 = vsel %vm2579, %v2581, %v2577
    %v2583 = vmul.f32 1.0, %v2582
    %v2584 = vxor.u32 %v2562, 2147483648
    %v2585 = vmul.f32 %v2584, 1.442695
    %v2586 = vpow.pop %v2585
    %v2587 = vadd.f32 %v2586, 1.0
    %v2588 = vrcp.pop %v2587
    %v2589 = vmul.f32 %v2587, %v2588
    %v2590 = vsub.f32 1.0, %v2589
    %v2591 = vmul.f32 %v2588, %v2590
    %v2592 = vadd.f32 %v2588, %v2591
    %vm2593 = vweird.f32 %v2587
    %vm2594 = vweird.f32 %v2588
    %vm2595 = vmor %vm2593, %vm2594
    %v2596 = vsel %vm2595, %v2588, %v2592
    %v2597 = vand.u32 2147483647, %v2587
    %vm2598 = vcmp.eq.f32.partialorder %v2597, 8.507059e+37
    %v2599 = vand.u32 %v2587, 2147483648
    %v2600 = vor.u32 1.1754944e-38, %v2599
    %v2601 = vsel %vm2598, %v2600, %v2596
    %v2602 = vmul.f32 1.0, %v2601
    %v2603 = vtanh.pop %v2563
    %v2604 = vxor.u32 %v2564, 2147483648
    %v2605 = vmul.f32 %v2604, 1.442695
    %v2606 = vpow.pop %v2605
    %v2607 = vadd.f32 %v2606, 1.0
    %v2608 = vrcp.pop %v2607
    %v2609 = vmul.f32 %v2607, %v2608
    %v2610 = vsub.f32 1.0, %v2609
    %v2611 = vmul.f32 %v2608, %v2610
    %v2612 = vadd.f32 %v2608, %v2611
    %vm2613 = vweird.f32 %v2607
    %vm2614 = vweird.f32 %v2608
    %vm2615 = vmor %vm2613, %vm2614
    %v2616 = vsel %vm2615, %v2608, %v2612
    %v2617 = vand.u32 2147483647, %v2607
    %vm2618 = vcmp.eq.f32.partialorder %v2617, 8.507059e+37
    %v2619 = vand.u32 %v2607, 2147483648
    %v2620 = vor.u32 1.1754944e-38, %v2619
    %v2621 = vsel %vm2618, %v2620, %v2616
    %v2622 = vmul.f32 1.0, %v2621
    %v2623 = vmul.f32 %v2602, %v2250
    %v2624 = vmul.f32 %v2583, %v2603
    %v2625 = vadd.f32 %v2623, %v2624
    %v2626 = vtanh.pop %v2625
    %v2627 = vmul.f32 %v2622, %v2626
    %2628 = vmatpush.msra.mxu0 %v246
    %2629 = vmatpush.msra.mxu0 %v242
    %2630 = vmatpush.msra.mxu0 %v238
    %2631 = vmatpush.msra.mxu0 %v234
    %2632 = vmatpush.msra.mxu0 %v230
    %2633 = vmatpush.msra.mxu0 %v226
    %2634 = vmatpush.msra.mxu0 %v222
    %2635 = vmatpush.msra.mxu0 %v218
    %2636 = vmatpush.msra.mxu0 %v214
    %2637 = vmatpush.msra.mxu0 %v210
    %2638 = vmatpush.msra.mxu0 %v206
    %2639 = vmatpush.msra.mxu0 %v202
    %2640 = vmatpush.msra.mxu0 %v198
    %2641 = vmatpush.msra.mxu0 %v194
    %2642 = vmatpush.msra.mxu0 %v190
    %2643 = vmatpush.msra.mxu0 %v186
    %2644 = vmatmul.f32.gmra.mxu0 %v2627
    %v2645 = vpop.f32.mrf.mxu0
    %v2646 = vadd.f32 %v316, %v2645
    %2647 = vdwg.mxu0
    %2648 = vmatpush.msra.mxu0 %v310
    %2649 = vmatpush.msra.mxu0 %v306
    %2650 = vmatpush.msra.mxu0 %v302
    %2651 = vmatpush.msra.mxu0 %v298
    %2652 = vmatpush.msra.mxu0 %v294
    %2653 = vmatpush.msra.mxu0 %v290
    %2654 = vmatpush.msra.mxu0 %v286
    %2655 = vmatpush.msra.mxu0 %v282
    %2656 = vmatpush.msra.mxu0 %v278
    %2657 = vmatpush.msra.mxu0 %v274
    %2658 = vmatpush.msra.mxu0 %v270
    %2659 = vmatpush.msra.mxu0 %v266
    %2660 = vmatpush.msra.mxu0 %v262
    %2661 = vmatpush.msra.mxu0 %v258
    %2662 = vmatpush.msra.mxu0 %v254
    %2663 = vmatpush.msra.mxu0 %v250
    %2664 = vmatmul.f32.gmra.mxu0 %v2475
    %v2665 = vpop.f32.mrf.mxu0
    %v2666 = vadd.f32 %v2646, %v2665
    %2667 = vdwg.mxu0
    %2668 = vmatpush.msra.mxu0 %v247
    %2669 = vmatpush.msra.mxu0 %v243
    %2670 = vmatpush.msra.mxu0 %v239
    %2671 = vmatpush.msra.mxu0 %v235
    %2672 = vmatpush.msra.mxu0 %v231
    %2673 = vmatpush.msra.mxu0 %v227
    %2674 = vmatpush.msra.mxu0 %v223
    %2675 = vmatpush.msra.mxu0 %v219
    %2676 = vmatpush.msra.mxu0 %v215
    %2677 = vmatpush.msra.mxu0 %v211
    %2678 = vmatpush.msra.mxu0 %v207
    %2679 = vmatpush.msra.mxu0 %v203
    %2680 = vmatpush.msra.mxu0 %v199
    %2681 = vmatpush.msra.mxu0 %v195
    %2682 = vmatpush.msra.mxu0 %v191
    %2683 = vmatpush.msra.mxu0 %v187
    %2684 = vmatmul.f32.gmra.mxu0 %v2627
    %v2685 = vpop.f32.mrf.mxu0
    %v2686 = vadd.f32 %v317, %v2685
    %2687 = vdwg.mxu0
    %2688 = vmatpush.msra.mxu0 %v311
    %2689 = vmatpush.msra.mxu0 %v307
    %2690 = vmatpush.msra.mxu0 %v303
    %2691 = vmatpush.msra.mxu0 %v299
    %2692 = vmatpush.msra.mxu0 %v295
    %2693 = vmatpush.msra.mxu0 %v291
    %2694 = vmatpush.msra.mxu0 %v287
    %2695 = vmatpush.msra.mxu0 %v283
    %2696 = vmatpush.msra.mxu0 %v279
    %2697 = vmatpush.msra.mxu0 %v275
    %2698 = vmatpush.msra.mxu0 %v271
    %2699 = vmatpush.msra.mxu0 %v267
    %2700 = vmatpush.msra.mxu0 %v263
    %2701 = vmatpush.msra.mxu0 %v259
    %2702 = vmatpush.msra.mxu0 %v255
    %2703 = vmatpush.msra.mxu0 %v251
    %2704 = vmatmul.f32.gmra.mxu0 %v2475
    %v2705 = vpop.f32.mrf.mxu0
    %v2706 = vadd.f32 %v2686, %v2705
    %2707 = vdwg.mxu0
    %2708 = vmatpush.msra.mxu0 %v248
    %2709 = vmatpush.msra.mxu0 %v244
    %2710 = vmatpush.msra.mxu0 %v240
    %2711 = vmatpush.msra.mxu0 %v236
    %2712 = vmatpush.msra.mxu0 %v232
    %2713 = vmatpush.msra.mxu0 %v228
    %2714 = vmatpush.msra.mxu0 %v224
    %2715 = vmatpush.msra.mxu0 %v220
    %2716 = vmatpush.msra.mxu0 %v216
    %2717 = vmatpush.msra.mxu0 %v212
    %2718 = vmatpush.msra.mxu0 %v208
    %2719 = vmatpush.msra.mxu0 %v204
    %2720 = vmatpush.msra.mxu0 %v200
    %2721 = vmatpush.msra.mxu0 %v196
    %2722 = vmatpush.msra.mxu0 %v192
    %2723 = vmatpush.msra.mxu0 %v188
    %2724 = vmatmul.f32.gmra.mxu0 %v2627
    %v2725 = vpop.f32.mrf.mxu0
    %v2726 = vadd.f32 %v318, %v2725
    %2727 = vdwg.mxu0
    %2728 = vmatpush.msra.mxu0 %v312
    %2729 = vmatpush.msra.mxu0 %v308
    %2730 = vmatpush.msra.mxu0 %v304
    %2731 = vmatpush.msra.mxu0 %v300
    %2732 = vmatpush.msra.mxu0 %v296
    %2733 = vmatpush.msra.mxu0 %v292
    %2734 = vmatpush.msra.mxu0 %v288
    %2735 = vmatpush.msra.mxu0 %v284
    %2736 = vmatpush.msra.mxu0 %v280
    %2737 = vmatpush.msra.mxu0 %v276
    %2738 = vmatpush.msra.mxu0 %v272
    %2739 = vmatpush.msra.mxu0 %v268
    %2740 = vmatpush.msra.mxu0 %v264
    %2741 = vmatpush.msra.mxu0 %v260
    %2742 = vmatpush.msra.mxu0 %v256
    %2743 = vmatpush.msra.mxu0 %v252
    %2744 = vmatmul.f32.gmra.mxu0 %v2475
    %v2745 = vpop.f32.mrf.mxu0
    %v2746 = vadd.f32 %v2726, %v2745
    %2747 = vdwg.mxu0
    %2748 = vmatpush.msra.mxu0 %v249
    %2749 = vmatpush.msra.mxu0 %v245
    %2750 = vmatpush.msra.mxu0 %v241
    %2751 = vmatpush.msra.mxu0 %v237
    %2752 = vmatpush.msra.mxu0 %v233
    %2753 = vmatpush.msra.mxu0 %v229
    %2754 = vmatpush.msra.mxu0 %v225
    %2755 = vmatpush.msra.mxu0 %v221
    %2756 = vmatpush.msra.mxu0 %v217
    %2757 = vmatpush.msra.mxu0 %v213
    %2758 = vmatpush.msra.mxu0 %v209
    %2759 = vmatpush.msra.mxu0 %v205
    %2760 = vmatpush.msra.mxu0 %v201
    %2761 = vmatpush.msra.mxu0 %v197
    %2762 = vmatpush.msra.mxu0 %v193
    %2763 = vmatpush.msra.mxu0 %v189
    %2764 = vmatmul.f32.gmra.mxu0 %v2627
    %v2765 = vpop.f32.mrf.mxu0
    %v2766 = vadd.f32 %v319, %v2765
    %2767 = vdwg.mxu0
    %2768 = vmatpush.msra.mxu0 %v313
    %2769 = vmatpush.msra.mxu0 %v309
    %2770 = vmatpush.msra.mxu0 %v305
    %2771 = vmatpush.msra.mxu0 %v301
    %2772 = vmatpush.msra.mxu0 %v297
    %2773 = vmatpush.msra.mxu0 %v293
    %2774 = vmatpush.msra.mxu0 %v289
    %2775 = vmatpush.msra.mxu0 %v285
    %2776 = vmatpush.msra.mxu0 %v281
    %2777 = vmatpush.msra.mxu0 %v277
    %2778 = vmatpush.msra.mxu0 %v273
    %2779 = vmatpush.msra.mxu0 %v269
    %2780 = vmatpush.msra.mxu0 %v265
    %2781 = vmatpush.msra.mxu0 %v261
    %2782 = vmatpush.msra.mxu0 %v257
    %2783 = vmatpush.msra.mxu0 %v253
    %2784 = vmatmul.f32.gmra.mxu0 %v2475
    %v2785 = vpop.f32.mrf.mxu0
    %v2786 = vadd.f32 %v2766, %v2785
    %2787 = vdwg.mxu0
    %v2788 = vxor.u32 %v2666, 2147483648
    %v2789 = vmul.f32 %v2788, 1.442695
    %v2790 = vpow.pop %v2789
    %v2791 = vadd.f32 %v2790, 1.0
    %v2792 = vrcp.pop %v2791
    %v2793 = vmul.f32 %v2791, %v2792
    %v2794 = vsub.f32 1.0, %v2793
    %v2795 = vmul.f32 %v2792, %v2794
    %v2796 = vadd.f32 %v2792, %v2795
    %vm2797 = vweird.f32 %v2791
    %vm2798 = vweird.f32 %v2792
    %vm2799 = vmor %vm2797, %vm2798
    %v2800 = vsel %vm2799, %v2792, %v2796
    %v2801 = vand.u32 2147483647, %v2791
    %vm2802 = vcmp.eq.f32.partialorder %v2801, 8.507059e+37
    %v2803 = vand.u32 %v2791, 2147483648
    %v2804 = vor.u32 1.1754944e-38, %v2803
    %v2805 = vsel %vm2802, %v2804, %v2800
    %v2806 = vmul.f32 1.0, %v2805
    %v2807 = vxor.u32 %v2706, 2147483648
    %v2808 = vmul.f32 %v2807, 1.442695
    %v2809 = vpow.pop %v2808
    %v2810 = vadd.f32 %v2809, 1.0
    %v2811 = vrcp.pop %v2810
    %v2812 = vmul.f32 %v2810, %v2811
    %v2813 = vsub.f32 1.0, %v2812
    %v2814 = vmul.f32 %v2811, %v2813
    %v2815 = vadd.f32 %v2811, %v2814
    %vm2816 = vweird.f32 %v2810
    %vm2817 = vweird.f32 %v2811
    %vm2818 = vmor %vm2816, %vm2817
    %v2819 = vsel %vm2818, %v2811, %v2815
    %v2820 = vand.u32 2147483647, %v2810
    %vm2821 = vcmp.eq.f32.partialorder %v2820, 8.507059e+37
    %v2822 = vand.u32 %v2810, 2147483648
    %v2823 = vor.u32 1.1754944e-38, %v2822
    %v2824 = vsel %vm2821, %v2823, %v2819
    %v2825 = vmul.f32 1.0, %v2824
    %v2826 = vtanh.pop %v2746
    %v2827 = vxor.u32 %v2786, 2147483648
    %v2828 = vmul.f32 %v2827, 1.442695
    %v2829 = vpow.pop %v2828
    %v2830 = vadd.f32 %v2829, 1.0
    %v2831 = vrcp.pop %v2830
    %v2832 = vmul.f32 %v2830, %v2831
    %v2833 = vsub.f32 1.0, %v2832
    %v2834 = vmul.f32 %v2831, %v2833
    %v2835 = vadd.f32 %v2831, %v2834
    %vm2836 = vweird.f32 %v2830
    %vm2837 = vweird.f32 %v2831
    %vm2838 = vmor %vm2836, %vm2837
    %v2839 = vsel %vm2838, %v2831, %v2835
    %v2840 = vand.u32 2147483647, %v2830
    %vm2841 = vcmp.eq.f32.partialorder %v2840, 8.507059e+37
    %v2842 = vand.u32 %v2830, 2147483648
    %v2843 = vor.u32 1.1754944e-38, %v2842
    %v2844 = vsel %vm2841, %v2843, %v2839
    %v2845 = vmul.f32 1.0, %v2844
    %v2846 = vmul.f32 %v2825, %v2473
    %v2847 = vmul.f32 %v2806, %v2826
    %v2848 = vadd.f32 %v2846, %v2847
    %v2849 = vtanh.pop %v2848
    %v2850 = vmul.f32 %v2845, %v2849
    %s2851 = scalar_lea.vmem [#allocation2], 192
    %v2852 = vld [vmem:[%s2851] sm:$0xff]
    %v2853 = vld [vmem:[%s2851 + $0x8] sm:$0xff]
    %v2854 = vld [vmem:[%s2851 + $0x10] sm:$0xff]
    %v2855 = vld [vmem:[%s2851 + $0x18] sm:$0xff]
    %2856 = vmatpush.msra.mxu0 %v182
    %2857 = vmatpush.msra.mxu0 %v178
    %2858 = vmatpush.msra.mxu0 %v174
    %2859 = vmatpush.msra.mxu0 %v170
    %2860 = vmatpush.msra.mxu0 %v166
    %2861 = vmatpush.msra.mxu0 %v162
    %2862 = vmatpush.msra.mxu0 %v158
    %2863 = vmatpush.msra.mxu0 %v154
    %2864 = vmatpush.msra.mxu0 %v150
    %2865 = vmatpush.msra.mxu0 %v146
    %2866 = vmatpush.msra.mxu0 %v142
    %2867 = vmatpush.msra.mxu0 %v138
    %2868 = vmatpush.msra.mxu0 %v134
    %2869 = vmatpush.msra.mxu0 %v130
    %2870 = vmatpush.msra.mxu0 %v126
    %2871 = vmatpush.msra.mxu0 %v122
    %2872 = vmatmul.f32.gmra.mxu0 %v2627
    %v2873 = vpop.f32.mrf.mxu0
    %v2874 = vadd.f32 0.0, %v2873
    %2875 = vdwg.mxu0
    %2876 = vmatpush.msra.mxu0 %v183
    %2877 = vmatpush.msra.mxu0 %v179
    %2878 = vmatpush.msra.mxu0 %v175
    %2879 = vmatpush.msra.mxu0 %v171
    %2880 = vmatpush.msra.mxu0 %v167
    %2881 = vmatpush.msra.mxu0 %v163
    %2882 = vmatpush.msra.mxu0 %v159
    %2883 = vmatpush.msra.mxu0 %v155
    %2884 = vmatpush.msra.mxu0 %v151
    %2885 = vmatpush.msra.mxu0 %v147
    %2886 = vmatpush.msra.mxu0 %v143
    %2887 = vmatpush.msra.mxu0 %v139
    %2888 = vmatpush.msra.mxu0 %v135
    %2889 = vmatpush.msra.mxu0 %v131
    %2890 = vmatpush.msra.mxu0 %v127
    %2891 = vmatpush.msra.mxu0 %v123
    %2892 = vmatmul.f32.gmra.mxu0 %v2627
    %v2893 = vpop.f32.mrf.mxu0
    %v2894 = vadd.f32 0.0, %v2893
    %2895 = vdwg.mxu0
    %2896 = vmatpush.msra.mxu0 %v184
    %2897 = vmatpush.msra.mxu0 %v180
    %2898 = vmatpush.msra.mxu0 %v176
    %2899 = vmatpush.msra.mxu0 %v172
    %2900 = vmatpush.msra.mxu0 %v168
    %2901 = vmatpush.msra.mxu0 %v164
    %2902 = vmatpush.msra.mxu0 %v160
    %2903 = vmatpush.msra.mxu0 %v156
    %2904 = vmatpush.msra.mxu0 %v152
    %2905 = vmatpush.msra.mxu0 %v148
    %2906 = vmatpush.msra.mxu0 %v144
    %2907 = vmatpush.msra.mxu0 %v140
    %2908 = vmatpush.msra.mxu0 %v136
    %2909 = vmatpush.msra.mxu0 %v132
    %2910 = vmatpush.msra.mxu0 %v128
    %2911 = vmatpush.msra.mxu0 %v124
    %2912 = vmatmul.f32.gmra.mxu0 %v2627
    %v2913 = vpop.f32.mrf.mxu0
    %v2914 = vadd.f32 0.0, %v2913
    %2915 = vdwg.mxu0
    %2916 = vmatpush.msra.mxu0 %v185
    %2917 = vmatpush.msra.mxu0 %v181
    %2918 = vmatpush.msra.mxu0 %v177
    %2919 = vmatpush.msra.mxu0 %v173
    %2920 = vmatpush.msra.mxu0 %v169
    %2921 = vmatpush.msra.mxu0 %v165
    %2922 = vmatpush.msra.mxu0 %v161
    %2923 = vmatpush.msra.mxu0 %v157
    %2924 = vmatpush.msra.mxu0 %v153
    %2925 = vmatpush.msra.mxu0 %v149
    %2926 = vmatpush.msra.mxu0 %v145
    %2927 = vmatpush.msra.mxu0 %v141
    %2928 = vmatpush.msra.mxu0 %v137
    %2929 = vmatpush.msra.mxu0 %v133
    %2930 = vmatpush.msra.mxu0 %v129
    %2931 = vmatpush.msra.mxu0 %v125
    %2932 = vmatmul.f32.gmra.mxu0 %v2627
    %v2933 = vpop.f32.mrf.mxu0
    %v2934 = vadd.f32 0.0, %v2933
    %2935 = vdwg.mxu0
    %v2936 = vadd.f32 %v2852, %v2874
    %v2937 = vadd.f32 %v2853, %v2894
    %v2938 = vadd.f32 %v2854, %v2914
    %v2939 = vadd.f32 %v2855, %v2934
    %v2940 = vxor.u32 %v2936, 2147483648
    %v2941 = vmul.f32 %v2940, 1.442695
    %v2942 = vpow.pop %v2941
    %v2943 = vadd.f32 %v2942, 1.0
    %v2944 = vrcp.pop %v2943
    %v2945 = vmul.f32 %v2943, %v2944
    %v2946 = vsub.f32 1.0, %v2945
    %v2947 = vmul.f32 %v2944, %v2946
    %v2948 = vadd.f32 %v2944, %v2947
    %vm2949 = vweird.f32 %v2943
    %vm2950 = vweird.f32 %v2944
    %vm2951 = vmor %vm2949, %vm2950
    %v2952 = vsel %vm2951, %v2944, %v2948
    %v2953 = vand.u32 2147483647, %v2943
    %vm2954 = vcmp.eq.f32.partialorder %v2953, 8.507059e+37
    %v2955 = vand.u32 %v2943, 2147483648
    %v2956 = vor.u32 1.1754944e-38, %v2955
    %v2957 = vsel %vm2954, %v2956, %v2952
    %v2958 = vmul.f32 1.0, %v2957
    %v2959 = vxor.u32 %v2937, 2147483648
    %v2960 = vmul.f32 %v2959, 1.442695
    %v2961 = vpow.pop %v2960
    %v2962 = vadd.f32 %v2961, 1.0
    %v2963 = vrcp.pop %v2962
    %v2964 = vmul.f32 %v2962, %v2963
    %v2965 = vsub.f32 1.0, %v2964
    %v2966 = vmul.f32 %v2963, %v2965
    %v2967 = vadd.f32 %v2963, %v2966
    %vm2968 = vweird.f32 %v2962
    %vm2969 = vweird.f32 %v2963
    %vm2970 = vmor %vm2968, %vm2969
    %v2971 = vsel %vm2970, %v2963, %v2967
    %v2972 = vand.u32 2147483647, %v2962
    %vm2973 = vcmp.eq.f32.partialorder %v2972, 8.507059e+37
    %v2974 = vand.u32 %v2962, 2147483648
    %v2975 = vor.u32 1.1754944e-38, %v2974
    %v2976 = vsel %vm2973, %v2975, %v2971
    %v2977 = vmul.f32 1.0, %v2976
    %v2978 = vtanh.pop %v2938
    %v2979 = vxor.u32 %v2939, 2147483648
    %v2980 = vmul.f32 %v2979, 1.442695
    %v2981 = vpow.pop %v2980
    %v2982 = vadd.f32 %v2981, 1.0
    %v2983 = vrcp.pop %v2982
    %v2984 = vmul.f32 %v2982, %v2983
    %v2985 = vsub.f32 1.0, %v2984
    %v2986 = vmul.f32 %v2983, %v2985
    %v2987 = vadd.f32 %v2983, %v2986
    %vm2988 = vweird.f32 %v2982
    %vm2989 = vweird.f32 %v2983
    %vm2990 = vmor %vm2988, %vm2989
    %v2991 = vsel %vm2990, %v2983, %v2987
    %v2992 = vand.u32 2147483647, %v2982
    %vm2993 = vcmp.eq.f32.partialorder %v2992, 8.507059e+37
    %v2994 = vand.u32 %v2982, 2147483648
    %v2995 = vor.u32 1.1754944e-38, %v2994
    %v2996 = vsel %vm2993, %v2995, %v2991
    %v2997 = vmul.f32 1.0, %v2996
    %v2998 = vmul.f32 %v2977, %v2625
    %v2999 = vmul.f32 %v2958, %v2978
    %v3000 = vadd.f32 %v2998, %v2999
    %v3001 = vtanh.pop %v3000
    %v3002 = vmul.f32 %v2997, %v3001
    %3003 = vmatpush.msra.mxu0 %v246
    %3004 = vmatpush.msra.mxu0 %v242
    %3005 = vmatpush.msra.mxu0 %v238
    %3006 = vmatpush.msra.mxu0 %v234
    %3007 = vmatpush.msra.mxu0 %v230
    %3008 = vmatpush.msra.mxu0 %v226
    %3009 = vmatpush.msra.mxu0 %v222
    %3010 = vmatpush.msra.mxu0 %v218
    %3011 = vmatpush.msra.mxu0 %v214
    %3012 = vmatpush.msra.mxu0 %v210
    %3013 = vmatpush.msra.mxu0 %v206
    %3014 = vmatpush.msra.mxu0 %v202
    %3015 = vmatpush.msra.mxu0 %v198
    %3016 = vmatpush.msra.mxu0 %v194
    %3017 = vmatpush.msra.mxu0 %v190
    %3018 = vmatpush.msra.mxu0 %v186
    %3019 = vmatmul.f32.gmra.mxu0 %v3002
    %v3020 = vpop.f32.mrf.mxu0
    %v3021 = vadd.f32 %v316, %v3020
    %3022 = vdwg.mxu0
    %3023 = vmatpush.msra.mxu0 %v310
    %3024 = vmatpush.msra.mxu0 %v306
    %3025 = vmatpush.msra.mxu0 %v302
    %3026 = vmatpush.msra.mxu0 %v298
    %3027 = vmatpush.msra.mxu0 %v294
    %3028 = vmatpush.msra.mxu0 %v290
    %3029 = vmatpush.msra.mxu0 %v286
    %3030 = vmatpush.msra.mxu0 %v282
    %3031 = vmatpush.msra.mxu0 %v278
    %3032 = vmatpush.msra.mxu0 %v274
    %3033 = vmatpush.msra.mxu0 %v270
    %3034 = vmatpush.msra.mxu0 %v266
    %3035 = vmatpush.msra.mxu0 %v262
    %3036 = vmatpush.msra.mxu0 %v258
    %3037 = vmatpush.msra.mxu0 %v254
    %3038 = vmatpush.msra.mxu0 %v250
    %3039 = vmatmul.f32.gmra.mxu0 %v2850
    %v3040 = vpop.f32.mrf.mxu0
    %v3041 = vadd.f32 %v3021, %v3040
    %3042 = vdwg.mxu0
    %3043 = vmatpush.msra.mxu0 %v247
    %3044 = vmatpush.msra.mxu0 %v243
    %3045 = vmatpush.msra.mxu0 %v239
    %3046 = vmatpush.msra.mxu0 %v235
    %3047 = vmatpush.msra.mxu0 %v231
    %3048 = vmatpush.msra.mxu0 %v227
    %3049 = vmatpush.msra.mxu0 %v223
    %3050 = vmatpush.msra.mxu0 %v219
    %3051 = vmatpush.msra.mxu0 %v215
    %3052 = vmatpush.msra.mxu0 %v211
    %3053 = vmatpush.msra.mxu0 %v207
    %3054 = vmatpush.msra.mxu0 %v203
    %3055 = vmatpush.msra.mxu0 %v199
    %3056 = vmatpush.msra.mxu0 %v195
    %3057 = vmatpush.msra.mxu0 %v191
    %3058 = vmatpush.msra.mxu0 %v187
    %3059 = vmatmul.f32.gmra.mxu0 %v3002
    %v3060 = vpop.f32.mrf.mxu0
    %v3061 = vadd.f32 %v317, %v3060
    %3062 = vdwg.mxu0
    %3063 = vmatpush.msra.mxu0 %v311
    %3064 = vmatpush.msra.mxu0 %v307
    %3065 = vmatpush.msra.mxu0 %v303
    %3066 = vmatpush.msra.mxu0 %v299
    %3067 = vmatpush.msra.mxu0 %v295
    %3068 = vmatpush.msra.mxu0 %v291
    %3069 = vmatpush.msra.mxu0 %v287
    %3070 = vmatpush.msra.mxu0 %v283
    %3071 = vmatpush.msra.mxu0 %v279
    %3072 = vmatpush.msra.mxu0 %v275
    %3073 = vmatpush.msra.mxu0 %v271
    %3074 = vmatpush.msra.mxu0 %v267
    %3075 = vmatpush.msra.mxu0 %v263
    %3076 = vmatpush.msra.mxu0 %v259
    %3077 = vmatpush.msra.mxu0 %v255
    %3078 = vmatpush.msra.mxu0 %v251
    %3079 = vmatmul.f32.gmra.mxu0 %v2850
    %v3080 = vpop.f32.mrf.mxu0
    %v3081 = vadd.f32 %v3061, %v3080
    %3082 = vdwg.mxu0
    %3083 = vmatpush.msra.mxu0 %v248
    %3084 = vmatpush.msra.mxu0 %v244
    %3085 = vmatpush.msra.mxu0 %v240
    %3086 = vmatpush.msra.mxu0 %v236
    %3087 = vmatpush.msra.mxu0 %v232
    %3088 = vmatpush.msra.mxu0 %v228
    %3089 = vmatpush.msra.mxu0 %v224
    %3090 = vmatpush.msra.mxu0 %v220
    %3091 = vmatpush.msra.mxu0 %v216
    %3092 = vmatpush.msra.mxu0 %v212
    %3093 = vmatpush.msra.mxu0 %v208
    %3094 = vmatpush.msra.mxu0 %v204
    %3095 = vmatpush.msra.mxu0 %v200
    %3096 = vmatpush.msra.mxu0 %v196
    %3097 = vmatpush.msra.mxu0 %v192
    %3098 = vmatpush.msra.mxu0 %v188
    %3099 = vmatmul.f32.gmra.mxu0 %v3002
    %v3100 = vpop.f32.mrf.mxu0
    %v3101 = vadd.f32 %v318, %v3100
    %3102 = vdwg.mxu0
    %3103 = vmatpush.msra.mxu0 %v312
    %3104 = vmatpush.msra.mxu0 %v308
    %3105 = vmatpush.msra.mxu0 %v304
    %3106 = vmatpush.msra.mxu0 %v300
    %3107 = vmatpush.msra.mxu0 %v296
    %3108 = vmatpush.msra.mxu0 %v292
    %3109 = vmatpush.msra.mxu0 %v288
    %3110 = vmatpush.msra.mxu0 %v284
    %3111 = vmatpush.msra.mxu0 %v280
    %3112 = vmatpush.msra.mxu0 %v276
    %3113 = vmatpush.msra.mxu0 %v272
    %3114 = vmatpush.msra.mxu0 %v268
    %3115 = vmatpush.msra.mxu0 %v264
    %3116 = vmatpush.msra.mxu0 %v260
    %3117 = vmatpush.msra.mxu0 %v256
    %3118 = vmatpush.msra.mxu0 %v252
    %3119 = vmatmul.f32.gmra.mxu0 %v2850
    %v3120 = vpop.f32.mrf.mxu0
    %v3121 = vadd.f32 %v3101, %v3120
    %3122 = vdwg.mxu0
    %3123 = vmatpush.msra.mxu0 %v249
    %3124 = vmatpush.msra.mxu0 %v245
    %3125 = vmatpush.msra.mxu0 %v241
    %3126 = vmatpush.msra.mxu0 %v237
    %3127 = vmatpush.msra.mxu0 %v233
    %3128 = vmatpush.msra.mxu0 %v229
    %3129 = vmatpush.msra.mxu0 %v225
    %3130 = vmatpush.msra.mxu0 %v221
    %3131 = vmatpush.msra.mxu0 %v217
    %3132 = vmatpush.msra.mxu0 %v213
    %3133 = vmatpush.msra.mxu0 %v209
    %3134 = vmatpush.msra.mxu0 %v205
    %3135 = vmatpush.msra.mxu0 %v201
    %3136 = vmatpush.msra.mxu0 %v197
    %3137 = vmatpush.msra.mxu0 %v193
    %3138 = vmatpush.msra.mxu0 %v189
    %3139 = vmatmul.f32.gmra.mxu0 %v3002
    %v3140 = vpop.f32.mrf.mxu0
    %v3141 = vadd.f32 %v319, %v3140
    %3142 = vdwg.mxu0
    %3143 = vmatpush.msra.mxu0 %v313
    %3144 = vmatpush.msra.mxu0 %v309
    %3145 = vmatpush.msra.mxu0 %v305
    %3146 = vmatpush.msra.mxu0 %v301
    %3147 = vmatpush.msra.mxu0 %v297
    %3148 = vmatpush.msra.mxu0 %v293
    %3149 = vmatpush.msra.mxu0 %v289
    %3150 = vmatpush.msra.mxu0 %v285
    %3151 = vmatpush.msra.mxu0 %v281
    %3152 = vmatpush.msra.mxu0 %v277
    %3153 = vmatpush.msra.mxu0 %v273
    %3154 = vmatpush.msra.mxu0 %v269
    %3155 = vmatpush.msra.mxu0 %v265
    %3156 = vmatpush.msra.mxu0 %v261
    %3157 = vmatpush.msra.mxu0 %v257
    %3158 = vmatpush.msra.mxu0 %v253
    %3159 = vmatmul.f32.gmra.mxu0 %v2850
    %v3160 = vpop.f32.mrf.mxu0
    %v3161 = vadd.f32 %v3141, %v3160
    %3162 = vdwg.mxu0
    %v3163 = vxor.u32 %v3041, 2147483648
    %v3164 = vmul.f32 %v3163, 1.442695
    %v3165 = vpow.pop %v3164
    %v3166 = vadd.f32 %v3165, 1.0
    %v3167 = vrcp.pop %v3166
    %v3168 = vmul.f32 %v3166, %v3167
    %v3169 = vsub.f32 1.0, %v3168
    %v3170 = vmul.f32 %v3167, %v3169
    %v3171 = vadd.f32 %v3167, %v3170
    %vm3172 = vweird.f32 %v3166
    %vm3173 = vweird.f32 %v3167
    %vm3174 = vmor %vm3172, %vm3173
    %v3175 = vsel %vm3174, %v3167, %v3171
    %v3176 = vand.u32 2147483647, %v3166
    %vm3177 = vcmp.eq.f32.partialorder %v3176, 8.507059e+37
    %v3178 = vand.u32 %v3166, 2147483648
    %v3179 = vor.u32 1.1754944e-38, %v3178
    %v3180 = vsel %vm3177, %v3179, %v3175
    %v3181 = vmul.f32 1.0, %v3180
    %v3182 = vxor.u32 %v3081, 2147483648
    %v3183 = vmul.f32 %v3182, 1.442695
    %v3184 = vpow.pop %v3183
    %v3185 = vadd.f32 %v3184, 1.0
    %v3186 = vrcp.pop %v3185
    %v3187 = vmul.f32 %v3185, %v3186
    %v3188 = vsub.f32 1.0, %v3187
    %v3189 = vmul.f32 %v3186, %v3188
    %v3190 = vadd.f32 %v3186, %v3189
    %vm3191 = vweird.f32 %v3185
    %vm3192 = vweird.f32 %v3186
    %vm3193 = vmor %vm3191, %vm3192
    %v3194 = vsel %vm3193, %v3186, %v3190
    %v3195 = vand.u32 2147483647, %v3185
    %vm3196 = vcmp.eq.f32.partialorder %v3195, 8.507059e+37
    %v3197 = vand.u32 %v3185, 2147483648
    %v3198 = vor.u32 1.1754944e-38, %v3197
    %v3199 = vsel %vm3196, %v3198, %v3194
    %v3200 = vmul.f32 1.0, %v3199
    %v3201 = vtanh.pop %v3121
    %v3202 = vxor.u32 %v3161, 2147483648
    %v3203 = vmul.f32 %v3202, 1.442695
    %v3204 = vpow.pop %v3203
    %v3205 = vadd.f32 %v3204, 1.0
    %v3206 = vrcp.pop %v3205
    %v3207 = vmul.f32 %v3205, %v3206
    %v3208 = vsub.f32 1.0, %v3207
    %v3209 = vmul.f32 %v3206, %v3208
    %v3210 = vadd.f32 %v3206, %v3209
    %vm3211 = vweird.f32 %v3205
    %vm3212 = vweird.f32 %v3206
    %vm3213 = vmor %vm3211, %vm3212
    %v3214 = vsel %vm3213, %v3206, %v3210
    %v3215 = vand.u32 2147483647, %v3205
    %vm3216 = vcmp.eq.f32.partialorder %v3215, 8.507059e+37
    %v3217 = vand.u32 %v3205, 2147483648
    %v3218 = vor.u32 1.1754944e-38, %v3217
    %v3219 = vsel %vm3216, %v3218, %v3214
    %v3220 = vmul.f32 1.0, %v3219
    %v3221 = vmul.f32 %v3200, %v2848
    %v3222 = vmul.f32 %v3181, %v3201
    %v3223 = vadd.f32 %v3221, %v3222
    %v3224 = vtanh.pop %v3223
    %v3225 = vmul.f32 %v3220, %v3224
    %s3226 = scalar_lea.vmem [#allocation2], 224
    %v3227 = vld [vmem:[%s3226] sm:$0xff]
    %v3228 = vld [vmem:[%s3226 + $0x8] sm:$0xff]
    %v3229 = vld [vmem:[%s3226 + $0x10] sm:$0xff]
    %v3230 = vld [vmem:[%s3226 + $0x18] sm:$0xff]
    %3231 = vmatpush.msra.mxu0 %v182
    %3232 = vmatpush.msra.mxu0 %v178
    %3233 = vmatpush.msra.mxu0 %v174
    %3234 = vmatpush.msra.mxu0 %v170
    %3235 = vmatpush.msra.mxu0 %v166
    %3236 = vmatpush.msra.mxu0 %v162
    %3237 = vmatpush.msra.mxu0 %v158
    %3238 = vmatpush.msra.mxu0 %v154
    %3239 = vmatpush.msra.mxu0 %v150
    %3240 = vmatpush.msra.mxu0 %v146
    %3241 = vmatpush.msra.mxu0 %v142
    %3242 = vmatpush.msra.mxu0 %v138
    %3243 = vmatpush.msra.mxu0 %v134
    %3244 = vmatpush.msra.mxu0 %v130
    %3245 = vmatpush.msra.mxu0 %v126
    %3246 = vmatpush.msra.mxu0 %v122
    %3247 = vmatmul.f32.gmra.mxu0 %v3002
    %v3248 = vpop.f32.mrf.mxu0
    %v3249 = vadd.f32 0.0, %v3248
    %3250 = vdwg.mxu0
    %3251 = vmatpush.msra.mxu0 %v183
    %3252 = vmatpush.msra.mxu0 %v179
    %3253 = vmatpush.msra.mxu0 %v175
    %3254 = vmatpush.msra.mxu0 %v171
    %3255 = vmatpush.msra.mxu0 %v167
    %3256 = vmatpush.msra.mxu0 %v163
    %3257 = vmatpush.msra.mxu0 %v159
    %3258 = vmatpush.msra.mxu0 %v155
    %3259 = vmatpush.msra.mxu0 %v151
    %3260 = vmatpush.msra.mxu0 %v147
    %3261 = vmatpush.msra.mxu0 %v143
    %3262 = vmatpush.msra.mxu0 %v139
    %3263 = vmatpush.msra.mxu0 %v135
    %3264 = vmatpush.msra.mxu0 %v131
    %3265 = vmatpush.msra.mxu0 %v127
    %3266 = vmatpush.msra.mxu0 %v123
    %3267 = vmatmul.f32.gmra.mxu0 %v3002
    %v3268 = vpop.f32.mrf.mxu0
    %v3269 = vadd.f32 0.0, %v3268
    %3270 = vdwg.mxu0
    %3271 = vmatpush.msra.mxu0 %v184
    %3272 = vmatpush.msra.mxu0 %v180
    %3273 = vmatpush.msra.mxu0 %v176
    %3274 = vmatpush.msra.mxu0 %v172
    %3275 = vmatpush.msra.mxu0 %v168
    %3276 = vmatpush.msra.mxu0 %v164
    %3277 = vmatpush.msra.mxu0 %v160
    %3278 = vmatpush.msra.mxu0 %v156
    %3279 = vmatpush.msra.mxu0 %v152
    %3280 = vmatpush.msra.mxu0 %v148
    %3281 = vmatpush.msra.mxu0 %v144
    %3282 = vmatpush.msra.mxu0 %v140
    %3283 = vmatpush.msra.mxu0 %v136
    %3284 = vmatpush.msra.mxu0 %v132
    %3285 = vmatpush.msra.mxu0 %v128
    %3286 = vmatpush.msra.mxu0 %v124
    %3287 = vmatmul.f32.gmra.mxu0 %v3002
    %v3288 = vpop.f32.mrf.mxu0
    %v3289 = vadd.f32 0.0, %v3288
    %3290 = vdwg.mxu0
    %3291 = vmatpush.msra.mxu0 %v185
    %3292 = vmatpush.msra.mxu0 %v181
    %3293 = vmatpush.msra.mxu0 %v177
    %3294 = vmatpush.msra.mxu0 %v173
    %3295 = vmatpush.msra.mxu0 %v169
    %3296 = vmatpush.msra.mxu0 %v165
    %3297 = vmatpush.msra.mxu0 %v161
    %3298 = vmatpush.msra.mxu0 %v157
    %3299 = vmatpush.msra.mxu0 %v153
    %3300 = vmatpush.msra.mxu0 %v149
    %3301 = vmatpush.msra.mxu0 %v145
    %3302 = vmatpush.msra.mxu0 %v141
    %3303 = vmatpush.msra.mxu0 %v137
    %3304 = vmatpush.msra.mxu0 %v133
    %3305 = vmatpush.msra.mxu0 %v129
    %3306 = vmatpush.msra.mxu0 %v125
    %3307 = vmatmul.f32.gmra.mxu0 %v3002
    %v3308 = vpop.f32.mrf.mxu0
    %v3309 = vadd.f32 0.0, %v3308
    %3310 = vdwg.mxu0
    %v3311 = vadd.f32 %v3227, %v3249
    %v3312 = vadd.f32 %v3228, %v3269
    %v3313 = vadd.f32 %v3229, %v3289
    %v3314 = vadd.f32 %v3230, %v3309
    %v3315 = vxor.u32 %v3311, 2147483648
    %v3316 = vmul.f32 %v3315, 1.442695
    %v3317 = vpow.pop %v3316
    %v3318 = vadd.f32 %v3317, 1.0
    %v3319 = vrcp.pop %v3318
    %v3320 = vmul.f32 %v3318, %v3319
    %v3321 = vsub.f32 1.0, %v3320
    %v3322 = vmul.f32 %v3319, %v3321
    %v3323 = vadd.f32 %v3319, %v3322
    %vm3324 = vweird.f32 %v3318
    %vm3325 = vweird.f32 %v3319
    %vm3326 = vmor %vm3324, %vm3325
    %v3327 = vsel %vm3326, %v3319, %v3323
    %v3328 = vand.u32 2147483647, %v3318
    %vm3329 = vcmp.eq.f32.partialorder %v3328, 8.507059e+37
    %v3330 = vand.u32 %v3318, 2147483648
    %v3331 = vor.u32 1.1754944e-38, %v3330
    %v3332 = vsel %vm3329, %v3331, %v3327
    %v3333 = vmul.f32 1.0, %v3332
    %v3334 = vxor.u32 %v3312, 2147483648
    %v3335 = vmul.f32 %v3334, 1.442695
    %v3336 = vpow.pop %v3335
    %v3337 = vadd.f32 %v3336, 1.0
    %v3338 = vrcp.pop %v3337
    %v3339 = vmul.f32 %v3337, %v3338
    %v3340 = vsub.f32 1.0, %v3339
    %v3341 = vmul.f32 %v3338, %v3340
    %v3342 = vadd.f32 %v3338, %v3341
    %vm3343 = vweird.f32 %v3337
    %vm3344 = vweird.f32 %v3338
    %vm3345 = vmor %vm3343, %vm3344
    %v3346 = vsel %vm3345, %v3338, %v3342
    %v3347 = vand.u32 2147483647, %v3337
    %vm3348 = vcmp.eq.f32.partialorder %v3347, 8.507059e+37
    %v3349 = vand.u32 %v3337, 2147483648
    %v3350 = vor.u32 1.1754944e-38, %v3349
    %v3351 = vsel %vm3348, %v3350, %v3346
    %v3352 = vmul.f32 1.0, %v3351
    %v3353 = vtanh.pop %v3313
    %v3354 = vxor.u32 %v3314, 2147483648
    %v3355 = vmul.f32 %v3354, 1.442695
    %v3356 = vpow.pop %v3355
    %v3357 = vadd.f32 %v3356, 1.0
    %v3358 = vrcp.pop %v3357
    %v3359 = vmul.f32 %v3357, %v3358
    %v3360 = vsub.f32 1.0, %v3359
    %v3361 = vmul.f32 %v3358, %v3360
    %v3362 = vadd.f32 %v3358, %v3361
    %vm3363 = vweird.f32 %v3357
    %vm3364 = vweird.f32 %v3358
    %vm3365 = vmor %vm3363, %vm3364
    %v3366 = vsel %vm3365, %v3358, %v3362
    %v3367 = vand.u32 2147483647, %v3357
    %vm3368 = vcmp.eq.f32.partialorder %v3367, 8.507059e+37
    %v3369 = vand.u32 %v3357, 2147483648
    %v3370 = vor.u32 1.1754944e-38, %v3369
    %v3371 = vsel %vm3368, %v3370, %v3366
    %v3372 = vmul.f32 1.0, %v3371
    %v3373 = vmul.f32 %v3352, %v3000
    %v3374 = vmul.f32 %v3333, %v3353
    %v3375 = vadd.f32 %v3373, %v3374
    %v3376 = vtanh.pop %v3375
    %v3377 = vmul.f32 %v3372, %v3376
    %3378 = vmatpush.msra.mxu0 %v246
    %3379 = vmatpush.msra.mxu0 %v242
    %3380 = vmatpush.msra.mxu0 %v238
    %3381 = vmatpush.msra.mxu0 %v234
    %3382 = vmatpush.msra.mxu0 %v230
    %3383 = vmatpush.msra.mxu0 %v226
    %3384 = vmatpush.msra.mxu0 %v222
    %3385 = vmatpush.msra.mxu0 %v218
    %3386 = vmatpush.msra.mxu0 %v214
    %3387 = vmatpush.msra.mxu0 %v210
    %3388 = vmatpush.msra.mxu0 %v206
    %3389 = vmatpush.msra.mxu0 %v202
    %3390 = vmatpush.msra.mxu0 %v198
    %3391 = vmatpush.msra.mxu0 %v194
    %3392 = vmatpush.msra.mxu0 %v190
    %3393 = vmatpush.msra.mxu0 %v186
    %3394 = vmatmul.f32.gmra.mxu0 %v3377
    %v3395 = vpop.f32.mrf.mxu0
    %v3396 = vadd.f32 %v316, %v3395
    %3397 = vdwg.mxu0
    %3398 = vmatpush.msra.mxu0 %v310
    %3399 = vmatpush.msra.mxu0 %v306
    %3400 = vmatpush.msra.mxu0 %v302
    %3401 = vmatpush.msra.mxu0 %v298
    %3402 = vmatpush.msra.mxu0 %v294
    %3403 = vmatpush.msra.mxu0 %v290
    %3404 = vmatpush.msra.mxu0 %v286
    %3405 = vmatpush.msra.mxu0 %v282
    %3406 = vmatpush.msra.mxu0 %v278
    %3407 = vmatpush.msra.mxu0 %v274
    %3408 = vmatpush.msra.mxu0 %v270
    %3409 = vmatpush.msra.mxu0 %v266
    %3410 = vmatpush.msra.mxu0 %v262
    %3411 = vmatpush.msra.mxu0 %v258
    %3412 = vmatpush.msra.mxu0 %v254
    %3413 = vmatpush.msra.mxu0 %v250
    %3414 = vmatmul.f32.gmra.mxu0 %v3225
    %v3415 = vpop.f32.mrf.mxu0
    %v3416 = vadd.f32 %v3396, %v3415
    %3417 = vdwg.mxu0
    %3418 = vmatpush.msra.mxu0 %v247
    %3419 = vmatpush.msra.mxu0 %v243
    %3420 = vmatpush.msra.mxu0 %v239
    %3421 = vmatpush.msra.mxu0 %v235
    %3422 = vmatpush.msra.mxu0 %v231
    %3423 = vmatpush.msra.mxu0 %v227
    %3424 = vmatpush.msra.mxu0 %v223
    %3425 = vmatpush.msra.mxu0 %v219
    %3426 = vmatpush.msra.mxu0 %v215
    %3427 = vmatpush.msra.mxu0 %v211
    %3428 = vmatpush.msra.mxu0 %v207
    %3429 = vmatpush.msra.mxu0 %v203
    %3430 = vmatpush.msra.mxu0 %v199
    %3431 = vmatpush.msra.mxu0 %v195
    %3432 = vmatpush.msra.mxu0 %v191
    %3433 = vmatpush.msra.mxu0 %v187
    %3434 = vmatmul.f32.gmra.mxu0 %v3377
    %v3435 = vpop.f32.mrf.mxu0
    %v3436 = vadd.f32 %v317, %v3435
    %3437 = vdwg.mxu0
    %3438 = vmatpush.msra.mxu0 %v311
    %3439 = vmatpush.msra.mxu0 %v307
    %3440 = vmatpush.msra.mxu0 %v303
    %3441 = vmatpush.msra.mxu0 %v299
    %3442 = vmatpush.msra.mxu0 %v295
    %3443 = vmatpush.msra.mxu0 %v291
    %3444 = vmatpush.msra.mxu0 %v287
    %3445 = vmatpush.msra.mxu0 %v283
    %3446 = vmatpush.msra.mxu0 %v279
    %3447 = vmatpush.msra.mxu0 %v275
    %3448 = vmatpush.msra.mxu0 %v271
    %3449 = vmatpush.msra.mxu0 %v267
    %3450 = vmatpush.msra.mxu0 %v263
    %3451 = vmatpush.msra.mxu0 %v259
    %3452 = vmatpush.msra.mxu0 %v255
    %3453 = vmatpush.msra.mxu0 %v251
    %3454 = vmatmul.f32.gmra.mxu0 %v3225
    %v3455 = vpop.f32.mrf.mxu0
    %v3456 = vadd.f32 %v3436, %v3455
    %3457 = vdwg.mxu0
    %3458 = vmatpush.msra.mxu0 %v248
    %3459 = vmatpush.msra.mxu0 %v244
    %3460 = vmatpush.msra.mxu0 %v240
    %3461 = vmatpush.msra.mxu0 %v236
    %3462 = vmatpush.msra.mxu0 %v232
    %3463 = vmatpush.msra.mxu0 %v228
    %3464 = vmatpush.msra.mxu0 %v224
    %3465 = vmatpush.msra.mxu0 %v220
    %3466 = vmatpush.msra.mxu0 %v216
    %3467 = vmatpush.msra.mxu0 %v212
    %3468 = vmatpush.msra.mxu0 %v208
    %3469 = vmatpush.msra.mxu0 %v204
    %3470 = vmatpush.msra.mxu0 %v200
    %3471 = vmatpush.msra.mxu0 %v196
    %3472 = vmatpush.msra.mxu0 %v192
    %3473 = vmatpush.msra.mxu0 %v188
    %3474 = vmatmul.f32.gmra.mxu0 %v3377
    %v3475 = vpop.f32.mrf.mxu0
    %v3476 = vadd.f32 %v318, %v3475
    %3477 = vdwg.mxu0
    %3478 = vmatpush.msra.mxu0 %v312
    %3479 = vmatpush.msra.mxu0 %v308
    %3480 = vmatpush.msra.mxu0 %v304
    %3481 = vmatpush.msra.mxu0 %v300
    %3482 = vmatpush.msra.mxu0 %v296
    %3483 = vmatpush.msra.mxu0 %v292
    %3484 = vmatpush.msra.mxu0 %v288
    %3485 = vmatpush.msra.mxu0 %v284
    %3486 = vmatpush.msra.mxu0 %v280
    %3487 = vmatpush.msra.mxu0 %v276
    %3488 = vmatpush.msra.mxu0 %v272
    %3489 = vmatpush.msra.mxu0 %v268
    %3490 = vmatpush.msra.mxu0 %v264
    %3491 = vmatpush.msra.mxu0 %v260
    %3492 = vmatpush.msra.mxu0 %v256
    %3493 = vmatpush.msra.mxu0 %v252
    %3494 = vmatmul.f32.gmra.mxu0 %v3225
    %v3495 = vpop.f32.mrf.mxu0
    %v3496 = vadd.f32 %v3476, %v3495
    %3497 = vdwg.mxu0
    %3498 = vmatpush.msra.mxu0 %v249
    %3499 = vmatpush.msra.mxu0 %v245
    %3500 = vmatpush.msra.mxu0 %v241
    %3501 = vmatpush.msra.mxu0 %v237
    %3502 = vmatpush.msra.mxu0 %v233
    %3503 = vmatpush.msra.mxu0 %v229
    %3504 = vmatpush.msra.mxu0 %v225
    %3505 = vmatpush.msra.mxu0 %v221
    %3506 = vmatpush.msra.mxu0 %v217
    %3507 = vmatpush.msra.mxu0 %v213
    %3508 = vmatpush.msra.mxu0 %v209
    %3509 = vmatpush.msra.mxu0 %v205
    %3510 = vmatpush.msra.mxu0 %v201
    %3511 = vmatpush.msra.mxu0 %v197
    %3512 = vmatpush.msra.mxu0 %v193
    %3513 = vmatpush.msra.mxu0 %v189
    %3514 = vmatmul.f32.gmra.mxu0 %v3377
    %v3515 = vpop.f32.mrf.mxu0
    %v3516 = vadd.f32 %v319, %v3515
    %3517 = vdwg.mxu0
    %3518 = vmatpush.msra.mxu0 %v313
    %3519 = vmatpush.msra.mxu0 %v309
    %3520 = vmatpush.msra.mxu0 %v305
    %3521 = vmatpush.msra.mxu0 %v301
    %3522 = vmatpush.msra.mxu0 %v297
    %3523 = vmatpush.msra.mxu0 %v293
    %3524 = vmatpush.msra.mxu0 %v289
    %3525 = vmatpush.msra.mxu0 %v285
    %3526 = vmatpush.msra.mxu0 %v281
    %3527 = vmatpush.msra.mxu0 %v277
    %3528 = vmatpush.msra.mxu0 %v273
    %3529 = vmatpush.msra.mxu0 %v269
    %3530 = vmatpush.msra.mxu0 %v265
    %3531 = vmatpush.msra.mxu0 %v261
    %3532 = vmatpush.msra.mxu0 %v257
    %3533 = vmatpush.msra.mxu0 %v253
    %3534 = vmatmul.f32.gmra.mxu0 %v3225
    %v3535 = vpop.f32.mrf.mxu0
    %v3536 = vadd.f32 %v3516, %v3535
    %3537 = vdwg.mxu0
    %v3538 = vxor.u32 %v3416, 2147483648
    %v3539 = vmul.f32 %v3538, 1.442695
    %v3540 = vpow.pop %v3539
    %v3541 = vadd.f32 %v3540, 1.0
    %v3542 = vrcp.pop %v3541
    %v3543 = vmul.f32 %v3541, %v3542
    %v3544 = vsub.f32 1.0, %v3543
    %v3545 = vmul.f32 %v3542, %v3544
    %v3546 = vadd.f32 %v3542, %v3545
    %vm3547 = vweird.f32 %v3541
    %vm3548 = vweird.f32 %v3542
    %vm3549 = vmor %vm3547, %vm3548
    %v3550 = vsel %vm3549, %v3542, %v3546
    %v3551 = vand.u32 2147483647, %v3541
    %vm3552 = vcmp.eq.f32.partialorder %v3551, 8.507059e+37
    %v3553 = vand.u32 %v3541, 2147483648
    %v3554 = vor.u32 1.1754944e-38, %v3553
    %v3555 = vsel %vm3552, %v3554, %v3550
    %v3556 = vmul.f32 1.0, %v3555
    %v3557 = vxor.u32 %v3456, 2147483648
    %v3558 = vmul.f32 %v3557, 1.442695
    %v3559 = vpow.pop %v3558
    %v3560 = vadd.f32 %v3559, 1.0
    %v3561 = vrcp.pop %v3560
    %v3562 = vmul.f32 %v3560, %v3561
    %v3563 = vsub.f32 1.0, %v3562
    %v3564 = vmul.f32 %v3561, %v3563
    %v3565 = vadd.f32 %v3561, %v3564
    %vm3566 = vweird.f32 %v3560
    %vm3567 = vweird.f32 %v3561
    %vm3568 = vmor %vm3566, %vm3567
    %v3569 = vsel %vm3568, %v3561, %v3565
    %v3570 = vand.u32 2147483647, %v3560
    %vm3571 = vcmp.eq.f32.partialorder %v3570, 8.507059e+37
    %v3572 = vand.u32 %v3560, 2147483648
    %v3573 = vor.u32 1.1754944e-38, %v3572
    %v3574 = vsel %vm3571, %v3573, %v3569
    %v3575 = vmul.f32 1.0, %v3574
    %v3576 = vtanh.pop %v3496
    %v3577 = vxor.u32 %v3536, 2147483648
    %v3578 = vmul.f32 %v3577, 1.442695
    %v3579 = vpow.pop %v3578
    %v3580 = vadd.f32 %v3579, 1.0
    %v3581 = vrcp.pop %v3580
    %v3582 = vmul.f32 %v3580, %v3581
    %v3583 = vsub.f32 1.0, %v3582
    %v3584 = vmul.f32 %v3581, %v3583
    %v3585 = vadd.f32 %v3581, %v3584
    %vm3586 = vweird.f32 %v3580
    %vm3587 = vweird.f32 %v3581
    %vm3588 = vmor %vm3586, %vm3587
    %v3589 = vsel %vm3588, %v3581, %v3585
    %v3590 = vand.u32 2147483647, %v3580
    %vm3591 = vcmp.eq.f32.partialorder %v3590, 8.507059e+37
    %v3592 = vand.u32 %v3580, 2147483648
    %v3593 = vor.u32 1.1754944e-38, %v3592
    %v3594 = vsel %vm3591, %v3593, %v3589
    %v3595 = vmul.f32 1.0, %v3594
    %v3596 = vmul.f32 %v3575, %v3223
    %v3597 = vmul.f32 %v3556, %v3576
    %v3598 = vadd.f32 %v3596, %v3597
    %v3599 = vtanh.pop %v3598
    %v3600 = vmul.f32 %v3595, %v3599
    %v3601 = vld [vmem:[#allocation12] sm:$0xff]
    %v3602 = vld [vmem:[#allocation12 + $0x8] sm:$0xff]
    %v3603 = vld [vmem:[#allocation12 + $0x10] sm:$0xff]
    %v3604 = vld [vmem:[#allocation12 + $0x18] sm:$0xff]
    %v3605 = vld [vmem:[#allocation12 + $0x20] sm:$0xff]
    %v3606 = vld [vmem:[#allocation12 + $0x28] sm:$0xff]
    %v3607 = vld [vmem:[#allocation12 + $0x30] sm:$0xff]
    %v3608 = vld [vmem:[#allocation12 + $0x38] sm:$0xff]
    %v3609 = vld [vmem:[#allocation12 + $0x40] sm:$0xff]
    %v3610 = vld [vmem:[#allocation12 + $0x48] sm:$0xff]
    %v3611 = vld [vmem:[#allocation12 + $0x50] sm:$0xff]
    %v3612 = vld [vmem:[#allocation12 + $0x58] sm:$0xff]
    %v3613 = vld [vmem:[#allocation12 + $0x60] sm:$0xff]
    %v3614 = vld [vmem:[#allocation12 + $0x68] sm:$0xff]
    %v3615 = vld [vmem:[#allocation12 + $0x70] sm:$0xff]
    %v3616 = vld [vmem:[#allocation12 + $0x78] sm:$0xff]
    %v3617 = vld [vmem:[%s7] sm:$0x1]
    %v3619 = vperm.slane %v3617, 0
    %3621 = vmatpush.msra.mxu0 %v3616
    %3622 = vmatpush.msra.mxu0 %v3615
    %3623 = vmatpush.msra.mxu0 %v3614
    %3624 = vmatpush.msra.mxu0 %v3613
    %3625 = vmatpush.msra.mxu0 %v3612
    %3626 = vmatpush.msra.mxu0 %v3611
    %3627 = vmatpush.msra.mxu0 %v3610
    %3628 = vmatpush.msra.mxu0 %v3609
    %3629 = vmatpush.msra.mxu0 %v3608
    %3630 = vmatpush.msra.mxu0 %v3607
    %3631 = vmatpush.msra.mxu0 %v3606
    %3632 = vmatpush.msra.mxu0 %v3605
    %3633 = vmatpush.msra.mxu0 %v3604
    %3634 = vmatpush.msra.mxu0 %v3603
    %3635 = vmatpush.msra.mxu0 %v3602
    %3636 = vmatpush.msra.mxu0 %v3601
    %3637 = vmatmul.f32.gmra.mxu0 %v3600
    %v3638 = vpop.f32.mrf.mxu0
    %v3639 = vadd.f32 %v3619, %v3638
    %3640 = vdwg.mxu0
    %3641 = vst [vmem:[#allocation14] sm:$0xff] %v3639
    // Predicated region
    $region58: #{tpu_custom_call.1} parent=1 // pred_check
      _
    $region59: #{tpu_custom_call.1} parent=1 // pred_check_branch
      %3643 = sbr.rel (0) target = $region61
    $region60: #{tpu_custom_call.1} parent=1 // pred_region
      %3645 = vsyncadd [#allocation5], 0
      %s3647 = sshll.u32 [#allocation14], 4
      %s3648 = int_to_ptr.vmem [resolvable:$true] %s3647
      %s3649 = sshll.u32 %s8, 4
      %s3650 = int_to_ptr.hbm [resolvable:$true] %s3649
      %3652 = dma.vmem_to_hbm [thread:$0]  %s3648, 128, %s3650, [#allocation5]
    $region61: #{tpu_custom_call.1} parent=1 // pred_fallthru
      _
    // Predicated region
    $region62: #{tpu_custom_call.1} parent=1 // pred_check
      _
    $region63: #{tpu_custom_call.1} parent=1 // pred_check_branch
      %3654 = sbr.rel (0) target = $region65
    $region64: #{tpu_custom_call.1} parent=1 // pred_region
      %3656 = dma.done [#allocation5], 128
    $region65: #{tpu_custom_call.1} parent=1 // pred_fallthru
      _
    %3657 = vsyncpa [#allocation4], 1
    %3658 = vsyncpa [#allocation7], 1
    %3659 = vsyncpa [#allocation10], 1
    %3660 = vsyncpa [#allocation13], 1
    %3661 = vsyncpa [#allocation5], 1

</llo_original>
